<compile_context>
chip_gen: v7x
topology: tpu7x:2x2x1
jax: 0.10.0
libtpu: 0.0.40
codegen_flags: <defaults>
</compile_context>

<pallas_src>
import numpy as np
import jax
import jax.numpy as jnp
from jax import lax
from jax.experimental import pallas as pl
from jax.experimental.pallas import tpu as pltpu


# ------------------------------ Pallas kernel ------------------------------ #

def _decoder_block_kernel(x_ref, w1_ref, ep1_ref, w2_ref, b2_ref, o_ref,
                          xpad_ref, hpad_ref):
    # x_ref   : (1, H, W, Cin)        bf16  NHWC input (unpadded)
    # w1_ref  : (9*Cin, Cmid)         bf16  im2col-packed 3x3 conv weights
    # ep1_ref : (3, Cmid)             f32   rows = [conv bias, bn scale, bn shift]
    # w2_ref  : (4*Cmid, 4*Cout)      bf16  polyphase-packed ConvTranspose weights
    # b2_ref  : (1, 4*Cout)           f32   ConvTranspose bias tiled over 4 phases
    # o_ref   : (1, H, W, 4*Cout)     f32   phase-packed output
    # xpad_ref: (H+2, W+2, Cin)       bf16  VMEM scratch: halo-padded input
    # hpad_ref: (H+1, W+1, Cmid)      bf16  VMEM scratch: h with zero bottom/right border
    H = o_ref.shape[1]
    W = o_ref.shape[2]

    # ---- stage 1: Conv3x3(pad=1) + ReLU + BatchNorm(eval) (+ Dropout = id) ----
    xpad_ref[...] = jnp.zeros_like(xpad_ref)          # zero halo (tiny)
    xpad_ref[1:H + 1, 1:W + 1, :] = x_ref[0]          # in-kernel padding
    patch1 = jnp.concatenate(                         # im2col: (H, W, 9*Cin)
        [xpad_ref[ky:ky + H, kx:kx + W, :] for ky in range(3) for kx in range(3)],
        axis=-1)
    acc1 = jnp.einsum('hwk,ko->hwo', patch1, w1_ref[...],
                      preferred_element_type=jnp.float32)      # (H, W, Cmid) f32
    acc1 = jnp.maximum(acc1 + ep1_ref[0][None, None, :], 0.0)  # conv bias + ReLU
    h = acc1 * ep1_ref[1][None, None, :] + ep1_ref[2][None, None, :]  # BN fold (f32)

    # ---- stage 2: ConvTranspose2d(k=3, s=2, p=1, op=1) + ReLU, polyphase ----
    hpad_ref[...] = jnp.zeros_like(hpad_ref)
    hpad_ref[0:H, 0:W, :] = h.astype(hpad_ref.dtype)
    patch2 = jnp.concatenate(                         # (H, W, 4*Cmid)
        [hpad_ref[0:H, 0:W, :],                       # h[m  , n  ]
         hpad_ref[0:H, 1:W + 1, :],                   # h[m  , n+1]
         hpad_ref[1:H + 1, 0:W, :],                   # h[m+1, n  ]
         hpad_ref[1:H + 1, 1:W + 1, :]],              # h[m+1, n+1]
        axis=-1)
    acc2 = jnp.einsum('hwk,ko->hwo', patch2, w2_ref[...],
                      preferred_element_type=jnp.float32)      # (H, W, 4*Cout) f32
    y = jnp.maximum(acc2 + b2_ref[0][None, None, :], 0.0)      # bias + final ReLU
    o_ref[...] = y[None].astype(o_ref.dtype)


# --------------------------- parameters (synthetic) ------------------------ #

def init_decoder_block_params(key, in_ch, mid_ch, out_ch):
    k = jax.random.split(key, 4)
    # Conv2d(in_ch, mid_ch, 3, padding=1): weight (mid, in, 3, 3), bias (mid,)
    bound1 = 1.0 / np.sqrt(in_ch * 9)
    w1 = jax.random.uniform(k[0], (mid_ch, in_ch, 3, 3), jnp.float32, -bound1, bound1)
    b1 = jax.random.uniform(k[1], (mid_ch,), jnp.float32, -bound1, bound1)
    # BatchNorm2d(mid_ch) -- PyTorch default params / buffers (eval mode)
    gamma = jnp.ones((mid_ch,), jnp.float32)
    beta = jnp.zeros((mid_ch,), jnp.float32)
    running_mean = jnp.zeros((mid_ch,), jnp.float32)
    running_var = jnp.ones((mid_ch,), jnp.float32)
    # ConvTranspose2d(mid_ch, out_ch, 3, s=2, p=1, op=1): weight (mid, out, 3, 3)
    bound2 = 1.0 / np.sqrt(out_ch * 9)
    w2 = jax.random.uniform(k[2], (mid_ch, out_ch, 3, 3), jnp.float32, -bound2, bound2)
    b2 = jax.random.uniform(k[3], (out_ch,), jnp.float32, -bound2, bound2)
    return dict(w1=w1, b1=b1, gamma=gamma, beta=beta,
                running_mean=running_mean, running_var=running_var,
                w2=w2, b2=b2)


# ------------------------------- forward ----------------------------------- #

def decoder_block_forward(params, x_nchw):
    p = params
    N, Cin, H, W = x_nchw.shape
    Cmid = p['w1'].shape[0]
    Cout = p['w2'].shape[1]

    # NCHW -> NHWC, bf16 at the pallas_call boundary (accumulation stays f32).
    x = jnp.transpose(x_nchw, (0, 2, 3, 1)).astype(jnp.bfloat16)

    # stage-1 weights: (Cmid, Cin, 3, 3) -> (9*Cin, Cmid), tap-major (ky*3 + kx).
    w1p = jnp.transpose(p['w1'], (2, 3, 1, 0)).reshape(9 * Cin, Cmid).astype(jnp.bfloat16)
    eps = 1e-5
    bn_scale = p['gamma'] / jnp.sqrt(p['running_var'] + eps)
    bn_shift = p['beta'] - p['running_mean'] * bn_scale
    ep1 = jnp.stack([p['b1'], bn_scale, bn_shift]).astype(jnp.float32)     # (3, Cmid)

    # stage-2 polyphase packing of ConvTranspose2d(k=3, s=2, p=1, op=1):
    #   y[2m+a, 2n+b, co] = b2[co] + sum_s sum_ci h_s[m,n,ci] * W2P[s*Cmid+ci, (2a+b)*Cout+co]
    # with h_0=h[m,n], h_1=h[m,n+1], h_2=h[m+1,n], h_3=h[m+1,n+1] (out of range -> 0)
    # and entries taken from w2[ci, co, ky, kx].
    w2 = p['w2']
    w2p = jnp.zeros((4 * Cmid, 4 * Cout), jnp.float32)

    def put(m, s, a, b, ky, kx):
        ph = 2 * a + b
        return m.at[s * Cmid:(s + 1) * Cmid, ph * Cout:(ph + 1) * Cout].set(w2[:, :, ky, kx])

    w2p = put(w2p, 0, 0, 0, 1, 1)                                    # even/even
    w2p = put(w2p, 0, 0, 1, 1, 2); w2p = put(w2p, 1, 0, 1, 1, 0)     # even/odd
    w2p = put(w2p, 0, 1, 0, 2, 1); w2p = put(w2p, 2, 1, 0, 0, 1)     # odd/even
    w2p = put(w2p, 0, 1, 1, 2, 2); w2p = put(w2p, 1, 1, 1, 2, 0)     # odd/odd
    w2p = put(w2p, 2, 1, 1, 0, 2); w2p = put(w2p, 3, 1, 1, 0, 0)
    w2p = w2p.astype(jnp.bfloat16)
    b2t = jnp.tile(p['b2'], 4).reshape(1, 4 * Cout).astype(jnp.float32)

    y_packed = pl.pallas_call(
        _decoder_block_kernel,
        out_shape=jax.ShapeDtypeStruct((N, H, W, 4 * Cout), jnp.float32),
        grid=(N,),
        in_specs=[
            pl.BlockSpec((1, H, W, Cin), lambda n: (n, 0, 0, 0)),
            pl.BlockSpec((9 * Cin, Cmid), lambda n: (0, 0)),
            pl.BlockSpec((3, Cmid), lambda n: (0, 0)),
            pl.BlockSpec((4 * Cmid, 4 * Cout), lambda n: (0, 0)),
            pl.BlockSpec((1, 4 * Cout), lambda n: (0, 0)),
        ],
        out_specs=pl.BlockSpec((1, H, W, 4 * Cout), lambda n: (n, 0, 0, 0)),
        scratch_shapes=[
            pltpu.VMEM((H + 2, W + 2, Cin), jnp.bfloat16),
            pltpu.VMEM((H + 1, W + 1, Cmid), jnp.bfloat16),
        ],
        compiler_params=pltpu.CompilerParams(
            dimension_semantics=("parallel",),
            vmem_limit_bytes=32 * 1024 * 1024),
    )(x, w1p, ep1, w2p, b2t)

    # Untangle the 4 phases and go back to NCHW in a single transpose pass.
    y = y_packed.reshape(N, H, W, 2, 2, Cout)                 # (n, m, n', a, b, co)
    y = jnp.transpose(y, (0, 5, 1, 3, 2, 4)).reshape(N, Cout, 2 * H, 2 * W)
    return y


# ------------------------- pure-JAX reference (check) ---------------------- #

def decoder_block_reference(params, x_nchw):
    # Mirrors the kernel's numeric policy: bf16 matmul inputs, f32 accumulation,
    # f32 epilogues (eval-mode BatchNorm, Dropout = identity).
    p = params
    x = x_nchw.astype(jnp.bfloat16)
    h = lax.conv_general_dilated(x, p['w1'].astype(jnp.bfloat16), (1, 1),
                                 ((1, 1), (1, 1)),
                                 dimension_numbers=('NCHW', 'OIHW', 'NCHW'),
                                 preferred_element_type=jnp.float32)
    h = jnp.maximum(h + p['b1'][None, :, None, None], 0.0)
    eps = 1e-5
    h = ((h - p['running_mean'][None, :, None, None])
         / jnp.sqrt(p['running_var'][None, :, None, None] + eps)
         * p['gamma'][None, :, None, None] + p['beta'][None, :, None, None])
    w2r = jnp.transpose(p['w2'], (1, 0, 2, 3))[:, :, ::-1, ::-1].astype(jnp.bfloat16)
    y = lax.conv_general_dilated(h.astype(jnp.bfloat16), w2r, (1, 1),
                                 ((1, 2), (1, 2)), lhs_dilation=(2, 2),
                                 dimension_numbers=('NCHW', 'OIHW', 'NCHW'),
                                 preferred_element_type=jnp.float32)
    return jnp.maximum(y + p['b2'][None, :, None, None], 0.0)


# ----------------------------------- main ---------------------------------- #

if __name__ == "__main__":
    key = jax.random.PRNGKey(0)
    k_x, k_p = jax.random.split(key)

    in_channels, middle_channels, out_channels = 4, 8, 4
    N, H, W = 2, 16, 16
    x = jax.random.normal(k_x, (N, in_channels, H, W), jnp.float32)   # NCHW input

    params = init_decoder_block_params(k_p, in_channels, middle_channels, out_channels)

    out = jax.block_until_ready(jax.jit(decoder_block_forward)(params, x))
    assert out.shape == (N, out_channels, 2 * H, 2 * W), out.shape

    ref = jax.block_until_ready(decoder_block_reference(params, x))
    np.testing.assert_allclose(np.asarray(out), np.asarray(ref), rtol=2e-3, atol=2e-3)

    print("KERNEL_OK")
</pallas_src>

<mosaic_0001>
module attributes {stable_mosaic.version = 11 : i64} {
  func.func @_decoder_block_kernel(%arg0: i32, %arg1: memref<1x16x16x4xbf16, #tpu.memory_space<vmem>>, %arg2: memref<36x8xbf16, #tpu.memory_space<vmem>>, %arg3: memref<3x8xf32, #tpu.memory_space<vmem>>, %arg4: memref<32x16xbf16, #tpu.memory_space<vmem>>, %arg5: memref<1x16xf32, #tpu.memory_space<vmem>>, %arg6: memref<1x16x16x16xf32, #tpu.memory_space<vmem>>, %arg7: memref<18x18x4xbf16, #tpu.memory_space<vmem>>, %arg8: memref<17x17x8xbf16, #tpu.memory_space<vmem>>) attributes {dimension_semantics = [#tpu.dimension_semantics<parallel>], iteration_bounds = array<i64: 2>, scalar_prefetch = 0 : i64, scratch_operands = 2 : i64, tpu.core_type = #tpu.core_type<tc>, window_params = [{transform_indices = @transform_0, window_bounds = array<i64: 1, 16, 16, 4>}, {pipeline_mode = #tpu.pipeline_mode<synchronous>, transform_indices = @transform_1, window_bounds = array<i64: 36, 8>}, {pipeline_mode = #tpu.pipeline_mode<synchronous>, transform_indices = @transform_2, window_bounds = array<i64: 3, 8>}, {pipeline_mode = #tpu.pipeline_mode<synchronous>, transform_indices = @transform_3, window_bounds = array<i64: 32, 16>}, {pipeline_mode = #tpu.pipeline_mode<synchronous>, transform_indices = @transform_4, window_bounds = array<i64: 1, 16>}, {transform_indices = @transform_5, window_bounds = array<i64: 1, 16, 16, 16>}]} {
    %cst = arith.constant 0.000000e+00 : bf16
    %0 = vector.broadcast %cst : bf16 to vector<18x18x4xbf16>
    %c0 = arith.constant 0 : index
    %c0_0 = arith.constant 0 : index
    %c0_1 = arith.constant 0 : index
    %1 = vector.load %arg7[%c0, %c0_0, %c0_1] : memref<18x18x4xbf16, #tpu.memory_space<vmem>>, vector<18x18x4xbf16>
    tpu.vector_store %arg7[%c0, %c0_0, %c0_1], %0 {strides = array<i32>} : memref<18x18x4xbf16, #tpu.memory_space<vmem>>, vector<18x18x4xbf16>,
    %c0_2 = arith.constant 0 : index
    %c0_3 = arith.constant 0 : index
    %c0_4 = arith.constant 0 : index
    %c0_5 = arith.constant 0 : index
    %2 = vector.load %arg1[%c0_2, %c0_3, %c0_4, %c0_5] : memref<1x16x16x4xbf16, #tpu.memory_space<vmem>>, vector<1x16x16x4xbf16>
    %3 = vector.shape_cast %2 : vector<1x16x16x4xbf16> to vector<16x16x4xbf16>
    %c1 = arith.constant 1 : index
    %c1_6 = arith.constant 1 : index
    %c0_7 = arith.constant 0 : index
    %4 = vector.load %arg7[%c1, %c1_6, %c0_7] : memref<18x18x4xbf16, #tpu.memory_space<vmem>>, vector<16x16x4xbf16>
    tpu.vector_store %arg7[%c1, %c1_6, %c0_7], %3 {strides = array<i32>} : memref<18x18x4xbf16, #tpu.memory_space<vmem>>, vector<16x16x4xbf16>,
    %c0_8 = arith.constant 0 : index
    %c0_9 = arith.constant 0 : index
    %c0_10 = arith.constant 0 : index
    %5 = vector.load %arg7[%c0_8, %c0_9, %c0_10] : memref<18x18x4xbf16, #tpu.memory_space<vmem>>, vector<16x16x4xbf16>
    %c0_11 = arith.constant 0 : index
    %c1_12 = arith.constant 1 : index
    %c0_13 = arith.constant 0 : index
    %6 = vector.load %arg7[%c0_11, %c1_12, %c0_13] : memref<18x18x4xbf16, #tpu.memory_space<vmem>>, vector<16x16x4xbf16>
    %c0_14 = arith.constant 0 : index
    %c2 = arith.constant 2 : index
    %c0_15 = arith.constant 0 : index
    %7 = vector.load %arg7[%c0_14, %c2, %c0_15] : memref<18x18x4xbf16, #tpu.memory_space<vmem>>, vector<16x16x4xbf16>
    %c1_16 = arith.constant 1 : index
    %c0_17 = arith.constant 0 : index
    %c0_18 = arith.constant 0 : index
    %8 = vector.load %arg7[%c1_16, %c0_17, %c0_18] : memref<18x18x4xbf16, #tpu.memory_space<vmem>>, vector<16x16x4xbf16>
    %c1_19 = arith.constant 1 : index
    %c1_20 = arith.constant 1 : index
    %c0_21 = arith.constant 0 : index
    %9 = vector.load %arg7[%c1_19, %c1_20, %c0_21] : memref<18x18x4xbf16, #tpu.memory_space<vmem>>, vector<16x16x4xbf16>
    %c1_22 = arith.constant 1 : index
    %c2_23 = arith.constant 2 : index
    %c0_24 = arith.constant 0 : index
    %10 = vector.load %arg7[%c1_22, %c2_23, %c0_24] : memref<18x18x4xbf16, #tpu.memory_space<vmem>>, vector<16x16x4xbf16>
    %c2_25 = arith.constant 2 : index
    %c0_26 = arith.constant 0 : index
    %c0_27 = arith.constant 0 : index
    %11 = vector.load %arg7[%c2_25, %c0_26, %c0_27] : memref<18x18x4xbf16, #tpu.memory_space<vmem>>, vector<16x16x4xbf16>
    %c2_28 = arith.constant 2 : index
    %c1_29 = arith.constant 1 : index
    %c0_30 = arith.constant 0 : index
    %12 = vector.load %arg7[%c2_28, %c1_29, %c0_30] : memref<18x18x4xbf16, #tpu.memory_space<vmem>>, vector<16x16x4xbf16>
    %c2_31 = arith.constant 2 : index
    %c2_32 = arith.constant 2 : index
    %c0_33 = arith.constant 0 : index
    %13 = vector.load %arg7[%c2_31, %c2_32, %c0_33] : memref<18x18x4xbf16, #tpu.memory_space<vmem>>, vector<16x16x4xbf16>
    %14 = tpu.concatenate %5, %6, %7, %8, %9, %10, %11, %12, %13 in 2 : vector<16x16x4xbf16>, vector<16x16x4xbf16>, vector<16x16x4xbf16>, vector<16x16x4xbf16>, vector<16x16x4xbf16>, vector<16x16x4xbf16>, vector<16x16x4xbf16>, vector<16x16x4xbf16>, vector<16x16x4xbf16> -> vector<16x16x36xbf16>
    %c0_34 = arith.constant 0 : index
    %c0_35 = arith.constant 0 : index
    %15 = vector.load %arg2[%c0_34, %c0_35] : memref<36x8xbf16, #tpu.memory_space<vmem>>, vector<36x8xbf16>
    "tpu.trace_start"() <{level = 10 : i32, message = "hwk,ko->hwo"}> : () -> ()
    %cst_36 = arith.constant dense<0.000000e+00> : vector<16x16x8xf32>
    %16 = tpu.matmul %14, %15, %cst_36 {dimension_numbers = #tpu.dot_dimension_numbers<[2], [0], [0, 1], [1], [0, 0, 0, 1, 1, 1], [], []>} : vector<16x16x36xbf16>, vector<36x8xbf16>, vector<16x16x8xf32> -> vector<16x16x8xf32>
    "tpu.trace_stop"() : () -> ()
    %c0_37 = arith.constant 0 : index
    %c0_38 = arith.constant 0 : index
    %17 = vector.load %arg3[%c0_37, %c0_38] : memref<3x8xf32, #tpu.memory_space<vmem>>, vector<1x8xf32>
    %18 = vector.shape_cast %17 : vector<1x8xf32> to vector<8xf32>
    %19 = vector.shape_cast %18 : vector<8xf32> to vector<1x1x8xf32>
    %20 = vector.broadcast %19 : vector<1x1x8xf32> to vector<16x16x8xf32>
    %21 = arith.addf %16, %20 : vector<16x16x8xf32>
    %cst_39 = arith.constant 0.000000e+00 : f32
    %22 = vector.broadcast %cst_39 : f32 to vector<16x16x8xf32>
    %23 = arith.maximumf %21, %22 : vector<16x16x8xf32>
    %c1_40 = arith.constant 1 : index
    %c0_41 = arith.constant 0 : index
    %24 = vector.load %arg3[%c1_40, %c0_41] : memref<3x8xf32, #tpu.memory_space<vmem>>, vector<1x8xf32>
    %25 = vector.shape_cast %24 : vector<1x8xf32> to vector<8xf32>
    %26 = vector.shape_cast %25 : vector<8xf32> to vector<1x1x8xf32>
    %27 = vector.broadcast %26 : vector<1x1x8xf32> to vector<16x16x8xf32>
    %28 = arith.mulf %23, %27 : vector<16x16x8xf32>
    %c2_42 = arith.constant 2 : index
    %c0_43 = arith.constant 0 : index
    %29 = vector.load %arg3[%c2_42, %c0_43] : memref<3x8xf32, #tpu.memory_space<vmem>>, vector<1x8xf32>
    %30 = vector.shape_cast %29 : vector<1x8xf32> to vector<8xf32>
    %31 = vector.shape_cast %30 : vector<8xf32> to vector<1x1x8xf32>
    %32 = vector.broadcast %31 : vector<1x1x8xf32> to vector<16x16x8xf32>
    %33 = arith.addf %28, %32 : vector<16x16x8xf32>
    %cst_44 = arith.constant 0.000000e+00 : bf16
    %34 = vector.broadcast %cst_44 : bf16 to vector<17x17x8xbf16>
    %c0_45 = arith.constant 0 : index
    %c0_46 = arith.constant 0 : index
    %c0_47 = arith.constant 0 : index
    %35 = vector.load %arg8[%c0_45, %c0_46, %c0_47] : memref<17x17x8xbf16, #tpu.memory_space<vmem>>, vector<17x17x8xbf16>
    tpu.vector_store %arg8[%c0_45, %c0_46, %c0_47], %34 {strides = array<i32>} : memref<17x17x8xbf16, #tpu.memory_space<vmem>>, vector<17x17x8xbf16>,
    %36 = arith.truncf %33 : vector<16x16x8xf32> to vector<16x16x8xbf16>
    %c0_48 = arith.constant 0 : index
    %c0_49 = arith.constant 0 : index
    %c0_50 = arith.constant 0 : index
    %37 = vector.load %arg8[%c0_48, %c0_49, %c0_50] : memref<17x17x8xbf16, #tpu.memory_space<vmem>>, vector<16x16x8xbf16>
    tpu.vector_store %arg8[%c0_48, %c0_49, %c0_50], %36 {strides = array<i32>} : memref<17x17x8xbf16, #tpu.memory_space<vmem>>, vector<16x16x8xbf16>,
    %c0_51 = arith.constant 0 : index
    %c0_52 = arith.constant 0 : index
    %c0_53 = arith.constant 0 : index
    %38 = vector.load %arg8[%c0_51, %c0_52, %c0_53] : memref<17x17x8xbf16, #tpu.memory_space<vmem>>, vector<16x16x8xbf16>
    %c0_54 = arith.constant 0 : index
    %c1_55 = arith.constant 1 : index
    %c0_56 = arith.constant 0 : index
    %39 = vector.load %arg8[%c0_54, %c1_55, %c0_56] : memref<17x17x8xbf16, #tpu.memory_space<vmem>>, vector<16x16x8xbf16>
    %c1_57 = arith.constant 1 : index
    %c0_58 = arith.constant 0 : index
    %c0_59 = arith.constant 0 : index
    %40 = vector.load %arg8[%c1_57, %c0_58, %c0_59] : memref<17x17x8xbf16, #tpu.memory_space<vmem>>, vector<16x16x8xbf16>
    %c1_60 = arith.constant 1 : index
    %c1_61 = arith.constant 1 : index
    %c0_62 = arith.constant 0 : index
    %41 = vector.load %arg8[%c1_60, %c1_61, %c0_62] : memref<17x17x8xbf16, #tpu.memory_space<vmem>>, vector<16x16x8xbf16>
    %42 = tpu.concatenate %38, %39, %40, %41 in 2 : vector<16x16x8xbf16>, vector<16x16x8xbf16>, vector<16x16x8xbf16>, vector<16x16x8xbf16> -> vector<16x16x32xbf16>
    %c0_63 = arith.constant 0 : index
    %c0_64 = arith.constant 0 : index
    %43 = vector.load %arg4[%c0_63, %c0_64] : memref<32x16xbf16, #tpu.memory_space<vmem>>, vector<32x16xbf16>
    "tpu.trace_start"() <{level = 10 : i32, message = "hwk,ko->hwo"}> : () -> ()
    %cst_65 = arith.constant dense<0.000000e+00> : vector<16x16x16xf32>
    %44 = tpu.matmul %42, %43, %cst_65 {dimension_numbers = #tpu.dot_dimension_numbers<[2], [0], [0, 1], [1], [0, 0, 0, 1, 1, 1], [], []>} : vector<16x16x32xbf16>, vector<32x16xbf16>, vector<16x16x16xf32> -> vector<16x16x16xf32>
    "tpu.trace_stop"() : () -> ()
    %c0_66 = arith.constant 0 : index
    %c0_67 = arith.constant 0 : index
    %45 = vector.load %arg5[%c0_66, %c0_67] : memref<1x16xf32, #tpu.memory_space<vmem>>, vector<1x16xf32>
    %46 = vector.shape_cast %45 : vector<1x16xf32> to vector<16xf32>
    %47 = vector.shape_cast %46 : vector<16xf32> to vector<1x1x16xf32>
    %48 = vector.broadcast %47 : vector<1x1x16xf32> to vector<16x16x16xf32>
    %49 = arith.addf %44, %48 : vector<16x16x16xf32>
    %cst_68 = arith.constant 0.000000e+00 : f32
    %50 = vector.broadcast %cst_68 : f32 to vector<16x16x16xf32>
    %51 = arith.maximumf %49, %50 : vector<16x16x16xf32>
    %52 = vector.shape_cast %51 : vector<16x16x16xf32> to vector<1x16x16x16xf32>
    %c0_69 = arith.constant 0 : index
    %c0_70 = arith.constant 0 : index
    %c0_71 = arith.constant 0 : index
    %c0_72 = arith.constant 0 : index
    %53 = vector.load %arg6[%c0_69, %c0_70, %c0_71, %c0_72] : memref<1x16x16x16xf32, #tpu.memory_space<vmem>>, vector<1x16x16x16xf32>
    tpu.vector_store %arg6[%c0_69, %c0_70, %c0_71, %c0_72], %52 {strides = array<i32>} : memref<1x16x16x16xf32, #tpu.memory_space<vmem>>, vector<1x16x16x16xf32>,
    return
  }
  func.func @transform_0(%arg0: i32) -> (i32, i32, i32, i32) {
    %c0_i32 = arith.constant 0 : i32
    %c0_i32_0 = arith.constant 0 : i32
    %c0_i32_1 = arith.constant 0 : i32
    %c0_i32_2 = arith.constant 0 : i32
    return %arg0, %c0_i32, %c0_i32_0, %c0_i32_1 : i32, i32, i32, i32
  }
  func.func @transform_1(%arg0: i32) -> (i32, i32) {
    %c0_i32 = arith.constant 0 : i32
    %c0_i32_0 = arith.constant 0 : i32
    %c0_i32_1 = arith.constant 0 : i32
    return %c0_i32, %c0_i32_0 : i32, i32
  }
  func.func @transform_2(%arg0: i32) -> (i32, i32) {
    %c0_i32 = arith.constant 0 : i32
    %c0_i32_0 = arith.constant 0 : i32
    %c0_i32_1 = arith.constant 0 : i32
    return %c0_i32, %c0_i32_0 : i32, i32
  }
  func.func @transform_3(%arg0: i32) -> (i32, i32) {
    %c0_i32 = arith.constant 0 : i32
    %c0_i32_0 = arith.constant 0 : i32
    %c0_i32_1 = arith.constant 0 : i32
    return %c0_i32, %c0_i32_0 : i32, i32
  }
  func.func @transform_4(%arg0: i32) -> (i32, i32) {
    %c0_i32 = arith.constant 0 : i32
    %c0_i32_0 = arith.constant 0 : i32
    %c0_i32_1 = arith.constant 0 : i32
    return %c0_i32, %c0_i32_0 : i32, i32
  }
  func.func @transform_5(%arg0: i32) -> (i32, i32, i32, i32) {
    %c0_i32 = arith.constant 0 : i32
    %c0_i32_0 = arith.constant 0 : i32
    %c0_i32_1 = arith.constant 0 : i32
    %c0_i32_2 = arith.constant 0 : i32
    return %arg0, %c0_i32, %c0_i32_0, %c0_i32_1 : i32, i32, i32, i32
  }
}

</mosaic_0001>

<llo_original>
// kernel: tile.8
$region0: #{tile.8}
  #allocation0 [shape = 's32[1]{0}', space=sflag, size = 0x4, scoped, tag = 'scoped memory for tile.8']
  %s0 = inlined_call_operand.vmem [shape: f32[4], index: 0, kind: input, shape index: {}]
  %s1 = inlined_call_operand.vmem [shape: f32[4,4], index: 1, kind: output, shape index: {}]
  // Predicated region
  $region2: #{tile.8} parent=0 // pred_check
    _
  $region3: #{tile.8} parent=0 // pred_check_branch
    %3 = sbr.rel (0) target = $region5
  $region4: #{tile.8} parent=0 // pred_region
    _
  $region5: #{tile.8} parent=0 // pred_fallthru
    _
  %v4 = vld [vmem:[%s0] ss:$0 sm:$0xff]
  %5 = vst [vmem:[%s1] sm:$0xf] %v4

// kernel: tile.9
$region0: #{tile.9}
  %s0 = inlined_call_operand.vmem [shape: f32[4,4], index: 0, kind: input, shape index: {}]
  %s1 = inlined_call_operand.vmem [shape: f32[1,16], index: 1, kind: output, shape index: {}]
  $region1: #{tile.9} parent=0
    #allocation0 [shape = 'u8[4096]{0}', space=vmem, size = 0x1000, scoped, tag = 'scoped mem for output reshape']
    #allocation1 [shape = 'u8[4096]{0}', space=vmem, size = 0x1000, scoped, tag = 'scoped mem for input reshape']
    %s3 = sshllo.u32 0, 4
    %v4 = vld [vmem:[%s0] sm:%s3]
    %5 = vst [vmem:[#allocation1] sm:%s3] %v4
    %v6 = vld [vmem:[#allocation1] sm:$0x1]
    %vm7 = vcmask 31744
    %8 = vst.msk [vmem:[#allocation0] sm:$0x1] %vm7, %v6
    %s9 = scalar_lea.vmem [#allocation1], 3
    %v10 = vld [vmem:[%s9] sm:$0x1]
    %11 = vrot.lane.b32.xlu0 %v10, 12
    %v12 = vpop.permute.xlu0 %11
    %vm13 = vcmask 130144
    %14 = vst.msk [vmem:[#allocation0] sm:$0x1] %vm13, %v12
    %s15 = scalar_lea.vmem [#allocation1], 2
    %v16 = vld [vmem:[%s15] sm:$0x1]
    %17 = vrot.lane.b32.xlu0 %v16, 8
    %v18 = vpop.permute.xlu0 %17
    %vm19 = vcmask 97344
    %20 = vst.msk [vmem:[#allocation0] sm:$0x1] %vm19, %v18
    %s21 = scalar_lea.vmem [#allocation1], 1
    %v22 = vld [vmem:[%s21] sm:$0x1]
    %23 = vrot.lane.b32.xlu0 %v22, 4
    %v24 = vpop.permute.xlu0 %23
    %vm25 = vcmask 64544
    %26 = vst.msk [vmem:[#allocation0] sm:$0x1] %vm25, %v24
    %s28 = sshllo.u32 0, 1
    %v30 = vld [vmem:[#allocation0] sm:%s28]
    %s31 = sshllo.u32 0, 1
    %32 = vst [vmem:[%s1] sm:%s31] %v30

// kernel: decoder_block_forward.1
$region0: #{decoder_block_forward.1}
  #allocation0 [shape = 'u32[]', space=smem, size = 0x4, offset = 0x4, fixed_abs, tag = 'smem constant byte address 0x4 - core index']
  #allocation1 [shape = 'u32[144,128]{1,0:T(1,128)}', space=vmem, size = 0x12000, scoped, tag = 'internal scratch']
  #allocation2 [shape = 'bf16[18,18,4]{2,1,0:T(8,128)(2,1)}', space=vmem, size = 0x1b000, scoped, tag = 'scratch operand']
  #allocation3 [shape = 'bf16[17,17,8]{2,1,0:T(8,128)(2,1)}', space=vmem, size = 0x19800, scoped, tag = 'scratch operand']
  %s0 = inlined_call_operand.vmem [shape: bf16[2,16,16,4], index: 0, kind: input, shape index: {}]
  %s1 = inlined_call_operand.vmem [shape: bf16[36,8], index: 1, kind: input, shape index: {}]
  %s2 = inlined_call_operand.vmem [shape: f32[3,8], index: 2, kind: input, shape index: {}]
  %s3 = inlined_call_operand.vmem [shape: bf16[32,16], index: 3, kind: input, shape index: {}]
  %s4 = inlined_call_operand.vmem [shape: f32[1,16], index: 4, kind: input, shape index: {}]
  %s5 = inlined_call_operand.vmem [shape: f32[2,16,16,16], index: 5, kind: output, shape index: {}]
  %s6 = sld [smem:[#allocation0]]
  $region53: #{decoder_block_forward.1} parent=0
    _
  %s8 = ssub.s32 1, %s6
  %s9 = scalar_select 0, %s8, %s6
  loop: start=0, step=1, limit=4
  $region2: #{decoder_block_forward.1} parent=0 // loop_pre_header
    _
  $region3: #{decoder_block_forward.1} parent=0 // loop_header
    %s11 = sphi 0, %s15
    %p12 = scmp.ge.s32.totalorder %s11, 4
    %s21 = sphi 0, %s23
    %s24 = sphi 0, %s21
    %s25 = sphi 0, %s24
    %s41 = sphi 0, %s25
    %s45 = sphi 0, %s45
    %s47 = sphi 0, %s45
    %s48 = sphi 0, %s47
    %s62 = sphi 0, %s48
    %s66 = sphi 0, %s66
    %s68 = sphi 0, %s66
    %s69 = sphi 0, %s68
    %s83 = sphi 0, %s69
    %s87 = sphi 0, %s87
    %s89 = sphi 0, %s87
    %s90 = sphi 0, %s89
    %s104 = sphi 0, %s90
    %s108 = sphi 0, %s108
    %s110 = sphi 0, %s108
    %s111 = sphi 0, %s110
    %s125 = sphi 0, %s111
    %s131 = sphi 0, %s133
    %s134 = sphi 0, %s131
    %s135 = sphi 0, %s134
    %s151 = sphi 0, %s135
  $region4: #{decoder_block_forward.1} parent=0 // loop_header_branch
    %14 = sbr.rel (%p12) target = $region8
  $region5: #{decoder_block_forward.1} parent=0 // loop_body
    %s16 = ssub.s32 %s11, 1
    %s17 = ssub.s32 %s11, 2
    %s18 = sadd.s32 %s11, 1
    %s19 = ssub.s32 %s11, %s18
    %p20 = scmp.eq.s32.totalorder %s19, 0
    %s22 = sadd.s32 %s21, 1
    %s23 = scalar_select %p20, %s21, %s22
    %p26 = pneg %p20
    %p27 = scmp.eq.s32.totalorder %s11, 1
    %p28 = por %p26, %p27
    %p29 = scmp.ne.s32.totalorder %s21, %s24
    %p30 = scmp.eq.s32.totalorder %s11, 0
    %p31 = por %p29, %p30
    %p32 = scmp.ne.s32.totalorder %s21, %s24
    %p33 = scmp.eq.s32.totalorder %s16, 1
    %p34 = por %p32, %p33
    %p35 = scmp.ne.s32.totalorder %s24, %s25
    %p36 = scmp.eq.s32.totalorder %s16, 0
    %p37 = por %p35, %p36
    %p38 = scmp.ne.s32.totalorder %s24, %s25
    %p39 = scmp.eq.s32.totalorder %s17, 1
    %p40 = por %p38, %p39
    %p42 = scmp.ne.s32.totalorder %s25, %s41
    %p43 = scmp.eq.s32.totalorder %s17, 0
    %p44 = por %p42, %p43
    %s46 = sadd.s32 %s45, 1
    %p49 = scmp.eq.s32.totalorder %s11, 1
    %p50 = scmp.ne.s32.totalorder %s45, %s47
    %p51 = scmp.eq.s32.totalorder %s11, 0
    %p52 = por %p50, %p51
    %p53 = scmp.ne.s32.totalorder %s45, %s47
    %p54 = scmp.eq.s32.totalorder %s16, 1
    %p55 = por %p53, %p54
    %p56 = scmp.ne.s32.totalorder %s47, %s48
    %p57 = scmp.eq.s32.totalorder %s16, 0
    %p58 = por %p56, %p57
    %p59 = scmp.ne.s32.totalorder %s47, %s48
    %p60 = scmp.eq.s32.totalorder %s17, 1
    %p61 = por %p59, %p60
    %p63 = scmp.ne.s32.totalorder %s48, %s62
    %p64 = scmp.eq.s32.totalorder %s17, 0
    %p65 = por %p63, %p64
    %s67 = sadd.s32 %s66, 1
    %p70 = scmp.eq.s32.totalorder %s11, 1
    %p71 = scmp.ne.s32.totalorder %s66, %s68
    %p72 = scmp.eq.s32.totalorder %s11, 0
    %p73 = por %p71, %p72
    %p74 = scmp.ne.s32.totalorder %s66, %s68
    %p75 = scmp.eq.s32.totalorder %s16, 1
    %p76 = por %p74, %p75
    %p77 = scmp.ne.s32.totalorder %s68, %s69
    %p78 = scmp.eq.s32.totalorder %s16, 0
    %p79 = por %p77, %p78
    %p80 = scmp.ne.s32.totalorder %s68, %s69
    %p81 = scmp.eq.s32.totalorder %s17, 1
    %p82 = por %p80, %p81
    %p84 = scmp.ne.s32.totalorder %s69, %s83
    %p85 = scmp.eq.s32.totalorder %s17, 0
    %p86 = por %p84, %p85
    %s88 = sadd.s32 %s87, 1
    %p91 = scmp.eq.s32.totalorder %s11, 1
    %p92 = scmp.ne.s32.totalorder %s87, %s89
    %p93 = scmp.eq.s32.totalorder %s11, 0
    %p94 = por %p92, %p93
    %p95 = scmp.ne.s32.totalorder %s87, %s89
    %p96 = scmp.eq.s32.totalorder %s16, 1
    %p97 = por %p95, %p96
    %p98 = scmp.ne.s32.totalorder %s89, %s90
    %p99 = scmp.eq.s32.totalorder %s16, 0
    %p100 = por %p98, %p99
    %p101 = scmp.ne.s32.totalorder %s89, %s90
    %p102 = scmp.eq.s32.totalorder %s17, 1
    %p103 = por %p101, %p102
    %p105 = scmp.ne.s32.totalorder %s90, %s104
    %p106 = scmp.eq.s32.totalorder %s17, 0
    %p107 = por %p105, %p106
    %s109 = sadd.s32 %s108, 1
    %p112 = scmp.eq.s32.totalorder %s11, 1
    %p113 = scmp.ne.s32.totalorder %s108, %s110
    %p114 = scmp.eq.s32.totalorder %s11, 0
    %p115 = por %p113, %p114
    %p116 = scmp.ne.s32.totalorder %s108, %s110
    %p117 = scmp.eq.s32.totalorder %s16, 1
    %p118 = por %p116, %p117
    %p119 = scmp.ne.s32.totalorder %s110, %s111
    %p120 = scmp.eq.s32.totalorder %s16, 0
    %p121 = por %p119, %p120
    %p122 = scmp.ne.s32.totalorder %s110, %s111
    %p123 = scmp.eq.s32.totalorder %s17, 1
    %p124 = por %p122, %p123
    %p126 = scmp.ne.s32.totalorder %s111, %s125
    %p127 = scmp.eq.s32.totalorder %s17, 0
    %p128 = por %p126, %p127
    %s129 = ssub.s32 %s11, %s18
    %p130 = scmp.eq.s32.totalorder %s129, 0
    %s132 = sadd.s32 %s131, 1
    %s133 = scalar_select %p130, %s131, %s132
    %p136 = pneg %p130
    %p137 = scmp.eq.s32.totalorder %s11, 1
    %p138 = por %p136, %p137
    %p139 = scmp.ne.s32.totalorder %s131, %s134
    %p140 = scmp.eq.s32.totalorder %s11, 0
    %p141 = por %p139, %p140
    %p142 = scmp.ne.s32.totalorder %s131, %s134
    %p143 = scmp.eq.s32.totalorder %s16, 1
    %p144 = por %p142, %p143
    %p145 = scmp.ne.s32.totalorder %s134, %s135
    %p146 = scmp.eq.s32.totalorder %s16, 0
    %p147 = por %p145, %p146
    %p148 = scmp.ne.s32.totalorder %s134, %s135
    %p149 = scmp.eq.s32.totalorder %s17, 1
    %p150 = por %p148, %p149
    %p152 = scmp.ne.s32.totalorder %s135, %s151
    %p153 = scmp.eq.s32.totalorder %s17, 0
    %p154 = por %p152, %p153
    %p155 = scmp.le.s32.totalorder 1, %s11
    %p156 = scmp.lt.s32.totalorder %s11, 3
    %p157 = pnand %p155, %p156
    %p158 = pneg %p157
    // Predicated region
    $region9: #{decoder_block_forward.1} parent=5 // pred_check
      _
    $region10: #{decoder_block_forward.1} parent=5 // pred_check_branch
      %160 = sbr.rel (%p157) target = $region12
    $region11: #{decoder_block_forward.1} parent=5 // pred_region
      %s161 = ssub.s32 %s11, 1
      // Predicated region
      $region13: #{decoder_block_forward.1} parent=11 // pred_check
        %p162 = pneg %p58
      $region14: #{decoder_block_forward.1} parent=11 // pred_check_branch
        %164 = sbr.rel (%p162) target = $region16
      $region15: #{decoder_block_forward.1} parent=11 // pred_region
        _
      $region16: #{decoder_block_forward.1} parent=11 // pred_fallthru
        _
      // Predicated region
      $region17: #{decoder_block_forward.1} parent=11 // pred_check
        %p165 = pneg %p79
      $region18: #{decoder_block_forward.1} parent=11 // pred_check_branch
        %167 = sbr.rel (%p165) target = $region20
      $region19: #{decoder_block_forward.1} parent=11 // pred_region
        _
      $region20: #{decoder_block_forward.1} parent=11 // pred_fallthru
        _
      // Predicated region
      $region21: #{decoder_block_forward.1} parent=11 // pred_check
        %p168 = pneg %p100
      $region22: #{decoder_block_forward.1} parent=11 // pred_check_branch
        %170 = sbr.rel (%p168) target = $region24
      $region23: #{decoder_block_forward.1} parent=11 // pred_region
        _
      $region24: #{decoder_block_forward.1} parent=11 // pred_fallthru
        _
      // Predicated region
      $region25: #{decoder_block_forward.1} parent=11 // pred_check
        %p171 = pneg %p121
      $region26: #{decoder_block_forward.1} parent=11 // pred_check_branch
        %173 = sbr.rel (%p171) target = $region28
      $region27: #{decoder_block_forward.1} parent=11 // pred_region
        _
      $region28: #{decoder_block_forward.1} parent=11 // pred_fallthru
        _
    $region12: #{decoder_block_forward.1} parent=5 // pred_fallthru
      _
    %p174 = scmp.lt.s32.totalorder %s11, 2
    // Predicated region
    $region29: #{decoder_block_forward.1} parent=5 // pred_check
      %p175 = pneg %p174
    $region30: #{decoder_block_forward.1} parent=5 // pred_check_branch
      %177 = sbr.rel (%p175) target = $region32
    $region31: #{decoder_block_forward.1} parent=5 // pred_region
      // Predicated region
      $region33: #{decoder_block_forward.1} parent=31 // pred_check
        %p178 = pneg %p31
      $region34: #{decoder_block_forward.1} parent=31 // pred_check_branch
        %180 = sbr.rel (%p178) target = $region36
      $region35: #{decoder_block_forward.1} parent=31 // pred_region
        %p181 = scmp.lt.s32.totalorder %s11, 1
        %s182 = scalar_select %p181, %s11, 1
        %s183 = smul.addr %s182, 32
        %s184 = smul.addr %s183, 4
        %s185 = scalar_lea.vmem %s0, %s184
      $region36: #{decoder_block_forward.1} parent=31 // pred_fallthru
        _
    $region32: #{decoder_block_forward.1} parent=5 // pred_fallthru
      _
    %p186 = scmp.le.s32.totalorder 1, %s11
    %p187 = scmp.lt.s32.totalorder %s11, 3
    %p188 = pnand %p186, %p187
    %p189 = pneg %p188
    // Predicated region
    $region37: #{decoder_block_forward.1} parent=5 // pred_check
      _
    $region38: #{decoder_block_forward.1} parent=5 // pred_check_branch
      %191 = sbr.rel (%p188) target = $region40
    $region39: #{decoder_block_forward.1} parent=5 // pred_region
      %s192 = ssub.s32 %s11, 1
      %p193 = scmp.lt.s32.totalorder %s16, 1
      %s194 = scalar_select %p193, %s16, 1
      %s195 = smul.addr %s194, 32
      %s196 = smul.addr %s195, 4
      %s197 = scalar_lea.vmem %s0, %s196
      %p198 = pneg %p37
      %p199 = pneg %p34
      %p200 = pneg %p58
      %p201 = pneg %p55
      %p202 = pneg %p79
      %p203 = pneg %p76
      %p204 = pneg %p100
      %p205 = pneg %p97
      %p206 = pneg %p121
      %p207 = pneg %p118
      %p208 = pneg %p147
      %p209 = pneg %p144
      %p210 = scmp.lt.s32.totalorder %s16, 1
      %s211 = scalar_select %p210, %s16, 1
      %s212 = smul.addr %s211, 32
      %s213 = smul.addr %s212, 8
      %s214 = scalar_lea.vmem %s5, %s213
      %p215 = scmp.lt.s32.totalorder %s16, 1
      %s216 = scalar_select %p215, %s16, 1
      %s217 = smul.addr %s216, 32
      %s218 = smul.addr %s217, 4
      %s219 = scalar_lea.vmem %s0, %s218
      %p220 = scmp.lt.s32.totalorder %s16, 1
      %s221 = scalar_select %p220, %s16, 1
      %s222 = smul.addr %s221, 32
      %s223 = smul.addr %s222, 8
      %s224 = scalar_lea.vmem %s5, %s223
      %vm226 = vcmask 27648
      %227 = vst.msk [vmem:[#allocation2] sm:$0xf] %vm226, 0
      %228 = vst.msk [vmem:[#allocation2 + $0x4] sm:$0xf] %vm226, 0
      %vm229 = vcmask 24576
      %230 = vst.msk [vmem:[#allocation2 + $0x8] sm:$0x1] %vm229, 0
      %231 = vst.msk [vmem:[#allocation2 + $0xc] sm:$0xf] %vm226, 0
      %232 = vst.msk [vmem:[#allocation2 + $0x10] sm:$0xf] %vm226, 0
      %233 = vst.msk [vmem:[#allocation2 + $0x14] sm:$0x1] %vm229, 0
      %234 = vst.msk [vmem:[#allocation2 + $0x18] sm:$0xf] %vm226, 0
      %235 = vst.msk [vmem:[#allocation2 + $0x1c] sm:$0xf] %vm226, 0
      %236 = vst.msk [vmem:[#allocation2 + $0x20] sm:$0x1] %vm229, 0
      %237 = vst.msk [vmem:[#allocation2 + $0x24] sm:$0xf] %vm226, 0
      %238 = vst.msk [vmem:[#allocation2 + $0x28] sm:$0xf] %vm226, 0
      %239 = vst.msk [vmem:[#allocation2 + $0x2c] sm:$0x1] %vm229, 0
      %240 = vst.msk [vmem:[#allocation2 + $0x30] sm:$0xf] %vm226, 0
      %241 = vst.msk [vmem:[#allocation2 + $0x34] sm:$0xf] %vm226, 0
      %242 = vst.msk [vmem:[#allocation2 + $0x38] sm:$0x1] %vm229, 0
      %243 = vst.msk [vmem:[#allocation2 + $0x3c] sm:$0xf] %vm226, 0
      %244 = vst.msk [vmem:[#allocation2 + $0x40] sm:$0xf] %vm226, 0
      %245 = vst.msk [vmem:[#allocation2 + $0x44] sm:$0x1] %vm229, 0
      %246 = vst.msk [vmem:[#allocation2 + $0x48] sm:$0xf] %vm226, 0
      %247 = vst.msk [vmem:[#allocation2 + $0x4c] sm:$0xf] %vm226, 0
      %248 = vst.msk [vmem:[#allocation2 + $0x50] sm:$0x1] %vm229, 0
      %249 = vst.msk [vmem:[#allocation2 + $0x54] sm:$0xf] %vm226, 0
      %250 = vst.msk [vmem:[#allocation2 + $0x58] sm:$0xf] %vm226, 0
      %251 = vst.msk [vmem:[#allocation2 + $0x5c] sm:$0x1] %vm229, 0
      %252 = vst.msk [vmem:[#allocation2 + $0x60] sm:$0xf] %vm226, 0
      %253 = vst.msk [vmem:[#allocation2 + $0x64] sm:$0xf] %vm226, 0
      %254 = vst.msk [vmem:[#allocation2 + $0x68] sm:$0x1] %vm229, 0
      %255 = vst.msk [vmem:[#allocation2 + $0x6c] sm:$0xf] %vm226, 0
      %256 = vst.msk [vmem:[#allocation2 + $0x70] sm:$0xf] %vm226, 0
      %257 = vst.msk [vmem:[#allocation2 + $0x74] sm:$0x1] %vm229, 0
      %258 = vst.msk [vmem:[#allocation2 + $0x78] sm:$0xf] %vm226, 0
      %259 = vst.msk [vmem:[#allocation2 + $0x7c] sm:$0xf] %vm226, 0
      %260 = vst.msk [vmem:[#allocation2 + $0x80] sm:$0x1] %vm229, 0
      %261 = vst.msk [vmem:[#allocation2 + $0x84] sm:$0xf] %vm226, 0
      %262 = vst.msk [vmem:[#allocation2 + $0x88] sm:$0xf] %vm226, 0
      %263 = vst.msk [vmem:[#allocation2 + $0x8c] sm:$0x1] %vm229, 0
      %264 = vst.msk [vmem:[#allocation2 + $0x90] sm:$0xf] %vm226, 0
      %265 = vst.msk [vmem:[#allocation2 + $0x94] sm:$0xf] %vm226, 0
      %266 = vst.msk [vmem:[#allocation2 + $0x98] sm:$0x1] %vm229, 0
      %267 = vst.msk [vmem:[#allocation2 + $0x9c] sm:$0xf] %vm226, 0
      %268 = vst.msk [vmem:[#allocation2 + $0xa0] sm:$0xf] %vm226, 0
      %269 = vst.msk [vmem:[#allocation2 + $0xa4] sm:$0x1] %vm229, 0
      %270 = vst.msk [vmem:[#allocation2 + $0xa8] sm:$0xf] %vm226, 0
      %271 = vst.msk [vmem:[#allocation2 + $0xac] sm:$0xf] %vm226, 0
      %272 = vst.msk [vmem:[#allocation2 + $0xb0] sm:$0x1] %vm229, 0
      %273 = vst.msk [vmem:[#allocation2 + $0xb4] sm:$0xf] %vm226, 0
      %274 = vst.msk [vmem:[#allocation2 + $0xb8] sm:$0xf] %vm226, 0
      %275 = vst.msk [vmem:[#allocation2 + $0xbc] sm:$0x1] %vm229, 0
      %276 = vst.msk [vmem:[#allocation2 + $0xc0] sm:$0xf] %vm226, 0
      %277 = vst.msk [vmem:[#allocation2 + $0xc4] sm:$0xf] %vm226, 0
      %278 = vst.msk [vmem:[#allocation2 + $0xc8] sm:$0x1] %vm229, 0
      %279 = vst.msk [vmem:[#allocation2 + $0xcc] sm:$0xf] %vm226, 0
      %280 = vst.msk [vmem:[#allocation2 + $0xd0] sm:$0xf] %vm226, 0
      %281 = vst.msk [vmem:[#allocation2 + $0xd4] sm:$0x1] %vm229, 0
      %v282 = vld [vmem:[%s219] sm:$0xf]
      %v283 = vld [vmem:[%s219 + $0x4] sm:$0xf]
      %v284 = vld [vmem:[%s219 + $0x8] sm:$0xf]
      %v285 = vld [vmem:[%s219 + $0xc] sm:$0xf]
      %v286 = vld [vmem:[%s219 + $0x10] sm:$0xf]
      %v287 = vld [vmem:[%s219 + $0x14] sm:$0xf]
      %v288 = vld [vmem:[%s219 + $0x18] sm:$0xf]
      %v289 = vld [vmem:[%s219 + $0x1c] sm:$0xf]
      %v290 = vld [vmem:[%s219 + $0x20] sm:$0xf]
      %v291 = vld [vmem:[%s219 + $0x24] sm:$0xf]
      %v292 = vld [vmem:[%s219 + $0x28] sm:$0xf]
      %v293 = vld [vmem:[%s219 + $0x2c] sm:$0xf]
      %v294 = vld [vmem:[%s219 + $0x30] sm:$0xf]
      %v295 = vld [vmem:[%s219 + $0x34] sm:$0xf]
      %v296 = vld [vmem:[%s219 + $0x38] sm:$0xf]
      %v297 = vld [vmem:[%s219 + $0x3c] sm:$0xf]
      %v298 = vld [vmem:[%s219 + $0x40] sm:$0xf]
      %v299 = vld [vmem:[%s219 + $0x44] sm:$0xf]
      %v300 = vld [vmem:[%s219 + $0x48] sm:$0xf]
      %v301 = vld [vmem:[%s219 + $0x4c] sm:$0xf]
      %v302 = vld [vmem:[%s219 + $0x50] sm:$0xf]
      %v303 = vld [vmem:[%s219 + $0x54] sm:$0xf]
      %v304 = vld [vmem:[%s219 + $0x58] sm:$0xf]
      %v305 = vld [vmem:[%s219 + $0x5c] sm:$0xf]
      %v306 = vld [vmem:[%s219 + $0x60] sm:$0xf]
      %v307 = vld [vmem:[%s219 + $0x64] sm:$0xf]
      %v308 = vld [vmem:[%s219 + $0x68] sm:$0xf]
      %v309 = vld [vmem:[%s219 + $0x6c] sm:$0xf]
      %v310 = vld [vmem:[%s219 + $0x70] sm:$0xf]
      %v311 = vld [vmem:[%s219 + $0x74] sm:$0xf]
      %v312 = vld [vmem:[%s219 + $0x78] sm:$0xf]
      %v313 = vld [vmem:[%s219 + $0x7c] sm:$0xf]
      %vm314 = vsmask.f32 256
      %vm315 = vsmask.f32 4368
      %vm316 = vmor %vm314, %vm315
      %v318 = vshrl.u32 %v282, 16
      %v320 = vrot.slane %v318, 7
      %v321 = vshll.u32 %v282, 16
      %v323 = vor.u32 %v320, %v321
      %v324 = vrot.slane %v320, 4
      %v326 = vshrl.u32 %v283, 16
      %v328 = vrot.slane %v326, 7
      %v329 = vshll.u32 %v283, 16
      %v331 = vor.u32 %v328, %v329
      %v332 = vsel %vm316, %v324, %v331
      %v333 = vrot.slane %v328, 4
      %v335 = vshrl.u32 %v284, 16
      %v337 = vrot.slane %v335, 7
      %v338 = vshll.u32 %v284, 16
      %v340 = vor.u32 %v337, %v338
      %v341 = vrot.slane %v337, 4
      %v343 = vshrl.u32 %v285, 16
      %v345 = vrot.slane %v343, 7
      %v346 = vshll.u32 %v285, 16
      %v348 = vor.u32 %v345, %v346
      %v349 = vsel %vm316, %v341, %v348
      %v350 = vrot.slane %v345, 4
      %v352 = vshrl.u32 %v286, 16
      %v354 = vrot.slane %v352, 7
      %v355 = vshll.u32 %v286, 16
      %v357 = vor.u32 %v354, %v355
      %v358 = vrot.slane %v354, 4
      %v360 = vshrl.u32 %v287, 16
      %v362 = vrot.slane %v360, 7
      %v363 = vshll.u32 %v287, 16
      %v365 = vor.u32 %v362, %v363
      %v366 = vsel %vm316, %v358, %v365
      %v367 = vrot.slane %v362, 4
      %v369 = vshrl.u32 %v288, 16
      %v371 = vrot.slane %v369, 7
      %v372 = vshll.u32 %v288, 16
      %v374 = vor.u32 %v371, %v372
      %v375 = vrot.slane %v371, 4
      %v377 = vshrl.u32 %v289, 16
      %v379 = vrot.slane %v377, 7
      %v380 = vshll.u32 %v289, 16
      %v382 = vor.u32 %v379, %v380
      %v383 = vsel %vm316, %v375, %v382
      %v384 = vrot.slane %v379, 4
      %v386 = vshrl.u32 %v290, 16
      %v388 = vrot.slane %v386, 7
      %v389 = vshll.u32 %v290, 16
      %v391 = vor.u32 %v388, %v389
      %v392 = vrot.slane %v388, 4
      %v394 = vshrl.u32 %v291, 16
      %v396 = vrot.slane %v394, 7
      %v397 = vshll.u32 %v291, 16
      %v399 = vor.u32 %v396, %v397
      %v400 = vsel %vm316, %v392, %v399
      %v401 = vrot.slane %v396, 4
      %v403 = vshrl.u32 %v292, 16
      %v405 = vrot.slane %v403, 7
      %v406 = vshll.u32 %v292, 16
      %v408 = vor.u32 %v405, %v406
      %v409 = vrot.slane %v405, 4
      %v411 = vshrl.u32 %v293, 16
      %v413 = vrot.slane %v411, 7
      %v414 = vshll.u32 %v293, 16
      %v416 = vor.u32 %v413, %v414
      %v417 = vsel %vm316, %v409, %v416
      %v418 = vrot.slane %v413, 4
      %v420 = vshrl.u32 %v294, 16
      %v422 = vrot.slane %v420, 7
      %v423 = vshll.u32 %v294, 16
      %v425 = vor.u32 %v422, %v423
      %v426 = vrot.slane %v422, 4
      %v428 = vshrl.u32 %v295, 16
      %v430 = vrot.slane %v428, 7
      %v431 = vshll.u32 %v295, 16
      %v433 = vor.u32 %v430, %v431
      %v434 = vsel %vm316, %v426, %v433
      %v435 = vrot.slane %v430, 4
      %v437 = vshrl.u32 %v296, 16
      %v439 = vrot.slane %v437, 7
      %v440 = vshll.u32 %v296, 16
      %v442 = vor.u32 %v439, %v440
      %v443 = vrot.slane %v439, 4
      %v445 = vshrl.u32 %v297, 16
      %v447 = vrot.slane %v445, 7
      %v448 = vshll.u32 %v297, 16
      %v450 = vor.u32 %v447, %v448
      %v451 = vsel %vm316, %v443, %v450
      %v452 = vrot.slane %v447, 4
      %v454 = vshrl.u32 %v298, 16
      %v456 = vrot.slane %v454, 7
      %v457 = vshll.u32 %v298, 16
      %v459 = vor.u32 %v456, %v457
      %v460 = vrot.slane %v456, 4
      %v462 = vshrl.u32 %v299, 16
      %v464 = vrot.slane %v462, 7
      %v465 = vshll.u32 %v299, 16
      %v467 = vor.u32 %v464, %v465
      %v468 = vsel %vm316, %v460, %v467
      %v469 = vrot.slane %v464, 4
      %v471 = vshrl.u32 %v300, 16
      %v473 = vrot.slane %v471, 7
      %v474 = vshll.u32 %v300, 16
      %v476 = vor.u32 %v473, %v474
      %v477 = vrot.slane %v473, 4
      %v479 = vshrl.u32 %v301, 16
      %v481 = vrot.slane %v479, 7
      %v482 = vshll.u32 %v301, 16
      %v484 = vor.u32 %v481, %v482
      %v485 = vsel %vm316, %v477, %v484
      %v486 = vrot.slane %v481, 4
      %v488 = vshrl.u32 %v302, 16
      %v490 = vrot.slane %v488, 7
      %v491 = vshll.u32 %v302, 16
      %v493 = vor.u32 %v490, %v491
      %v494 = vrot.slane %v490, 4
      %v496 = vshrl.u32 %v303, 16
      %v498 = vrot.slane %v496, 7
      %v499 = vshll.u32 %v303, 16
      %v501 = vor.u32 %v498, %v499
      %v502 = vsel %vm316, %v494, %v501
      %v503 = vrot.slane %v498, 4
      %v505 = vshrl.u32 %v304, 16
      %v507 = vrot.slane %v505, 7
      %v508 = vshll.u32 %v304, 16
      %v510 = vor.u32 %v507, %v508
      %v511 = vrot.slane %v507, 4
      %v513 = vshrl.u32 %v305, 16
      %v515 = vrot.slane %v513, 7
      %v516 = vshll.u32 %v305, 16
      %v518 = vor.u32 %v515, %v516
      %v519 = vsel %vm316, %v511, %v518
      %v520 = vrot.slane %v515, 4
      %v522 = vshrl.u32 %v306, 16
      %v524 = vrot.slane %v522, 7
      %v525 = vshll.u32 %v306, 16
      %v527 = vor.u32 %v524, %v525
      %v528 = vrot.slane %v524, 4
      %v530 = vshrl.u32 %v307, 16
      %v532 = vrot.slane %v530, 7
      %v533 = vshll.u32 %v307, 16
      %v535 = vor.u32 %v532, %v533
      %v536 = vsel %vm316, %v528, %v535
      %v537 = vrot.slane %v532, 4
      %v539 = vshrl.u32 %v308, 16
      %v541 = vrot.slane %v539, 7
      %v542 = vshll.u32 %v308, 16
      %v544 = vor.u32 %v541, %v542
      %v545 = vrot.slane %v541, 4
      %v547 = vshrl.u32 %v309, 16
      %v549 = vrot.slane %v547, 7
      %v550 = vshll.u32 %v309, 16
      %v552 = vor.u32 %v549, %v550
      %v553 = vsel %vm316, %v545, %v552
      %v554 = vrot.slane %v549, 4
      %v556 = vshrl.u32 %v310, 16
      %v558 = vrot.slane %v556, 7
      %v559 = vshll.u32 %v310, 16
      %v561 = vor.u32 %v558, %v559
      %v562 = vrot.slane %v558, 4
      %v564 = vshrl.u32 %v311, 16
      %v566 = vrot.slane %v564, 7
      %v567 = vshll.u32 %v311, 16
      %v569 = vor.u32 %v566, %v567
      %v570 = vsel %vm316, %v562, %v569
      %v571 = vrot.slane %v566, 4
      %v573 = vshrl.u32 %v312, 16
      %v575 = vrot.slane %v573, 7
      %v576 = vshll.u32 %v312, 16
      %v578 = vor.u32 %v575, %v576
      %v579 = vrot.slane %v575, 4
      %v581 = vshrl.u32 %v313, 16
      %v583 = vrot.slane %v581, 7
      %v584 = vshll.u32 %v313, 16
      %v586 = vor.u32 %v583, %v584
      %v587 = vsel %vm316, %v579, %v586
      %v588 = vrot.slane %v583, 4
      %s637 = scalar_lea.vmem [#allocation2], 12
      %vm638 = vcmask 27648
      %vm639 = vsmask.f32 7938
      %vm640 = vmand %vm638, %vm639
      %v641 = vld [vmem:[%s637] sm:$0xf]
      %v642 = vsel %vm640, %v323, %v641
      %643 = vst [vmem:[%s637] sm:$0xf] %v642
      %644 = vst.msk [vmem:[%s637 + $0x4] sm:$0xf] %vm226, %v332
      %vm645 = vcmask 24576
      %vm646 = vmand %vm645, %vm314
      %v647 = vld [vmem:[%s637 + $0x8] sm:$0x1]
      %v648 = vsel %vm646, %v333, %v647
      %649 = vst [vmem:[%s637 + $0x8] sm:$0x1] %v648
      %v650 = vld [vmem:[%s637 + $0xc] sm:$0xf]
      %v651 = vsel %vm640, %v340, %v650
      %652 = vst [vmem:[%s637 + $0xc] sm:$0xf] %v651
      %653 = vst.msk [vmem:[%s637 + $0x10] sm:$0xf] %vm226, %v349
      %v654 = vld [vmem:[%s637 + $0x14] sm:$0x1]
      %v655 = vsel %vm646, %v350, %v654
      %656 = vst [vmem:[%s637 + $0x14] sm:$0x1] %v655
      %v657 = vld [vmem:[%s637 + $0x18] sm:$0xf]
      %v658 = vsel %vm640, %v357, %v657
      %659 = vst [vmem:[%s637 + $0x18] sm:$0xf] %v658
      %660 = vst.msk [vmem:[%s637 + $0x1c] sm:$0xf] %vm226, %v366
      %v661 = vld [vmem:[%s637 + $0x20] sm:$0x1]
      %v662 = vsel %vm646, %v367, %v661
      %663 = vst [vmem:[%s637 + $0x20] sm:$0x1] %v662
      %v664 = vld [vmem:[%s637 + $0x24] sm:$0xf]
      %v665 = vsel %vm640, %v374, %v664
      %666 = vst [vmem:[%s637 + $0x24] sm:$0xf] %v665
      %667 = vst.msk [vmem:[%s637 + $0x28] sm:$0xf] %vm226, %v383
      %v668 = vld [vmem:[%s637 + $0x2c] sm:$0x1]
      %v669 = vsel %vm646, %v384, %v668
      %670 = vst [vmem:[%s637 + $0x2c] sm:$0x1] %v669
      %v671 = vld [vmem:[%s637 + $0x30] sm:$0xf]
      %v672 = vsel %vm640, %v391, %v671
      %673 = vst [vmem:[%s637 + $0x30] sm:$0xf] %v672
      %674 = vst.msk [vmem:[%s637 + $0x34] sm:$0xf] %vm226, %v400
      %v675 = vld [vmem:[%s637 + $0x38] sm:$0x1]
      %v676 = vsel %vm646, %v401, %v675
      %677 = vst [vmem:[%s637 + $0x38] sm:$0x1] %v676
      %v678 = vld [vmem:[%s637 + $0x3c] sm:$0xf]
      %v679 = vsel %vm640, %v408, %v678
      %680 = vst [vmem:[%s637 + $0x3c] sm:$0xf] %v679
      %681 = vst.msk [vmem:[%s637 + $0x40] sm:$0xf] %vm226, %v417
      %v682 = vld [vmem:[%s637 + $0x44] sm:$0x1]
      %v683 = vsel %vm646, %v418, %v682
      %684 = vst [vmem:[%s637 + $0x44] sm:$0x1] %v683
      %v685 = vld [vmem:[%s637 + $0x48] sm:$0xf]
      %v686 = vsel %vm640, %v425, %v685
      %687 = vst [vmem:[%s637 + $0x48] sm:$0xf] %v686
      %688 = vst.msk [vmem:[%s637 + $0x4c] sm:$0xf] %vm226, %v434
      %v689 = vld [vmem:[%s637 + $0x50] sm:$0x1]
      %v690 = vsel %vm646, %v435, %v689
      %691 = vst [vmem:[%s637 + $0x50] sm:$0x1] %v690
      %v692 = vld [vmem:[%s637 + $0x54] sm:$0xf]
      %v693 = vsel %vm640, %v442, %v692
      %694 = vst [vmem:[%s637 + $0x54] sm:$0xf] %v693
      %695 = vst.msk [vmem:[%s637 + $0x58] sm:$0xf] %vm226, %v451
      %v696 = vld [vmem:[%s637 + $0x5c] sm:$0x1]
      %v697 = vsel %vm646, %v452, %v696
      %698 = vst [vmem:[%s637 + $0x5c] sm:$0x1] %v697
      %v699 = vld [vmem:[%s637 + $0x60] sm:$0xf]
      %v700 = vsel %vm640, %v459, %v699
      %701 = vst [vmem:[%s637 + $0x60] sm:$0xf] %v700
      %702 = vst.msk [vmem:[%s637 + $0x64] sm:$0xf] %vm226, %v468
      %v703 = vld [vmem:[%s637 + $0x68] sm:$0x1]
      %v704 = vsel %vm646, %v469, %v703
      %705 = vst [vmem:[%s637 + $0x68] sm:$0x1] %v704
      %v706 = vld [vmem:[%s637 + $0x6c] sm:$0xf]
      %v707 = vsel %vm640, %v476, %v706
      %708 = vst [vmem:[%s637 + $0x6c] sm:$0xf] %v707
      %709 = vst.msk [vmem:[%s637 + $0x70] sm:$0xf] %vm226, %v485
      %v710 = vld [vmem:[%s637 + $0x74] sm:$0x1]
      %v711 = vsel %vm646, %v486, %v710
      %712 = vst [vmem:[%s637 + $0x74] sm:$0x1] %v711
      %v713 = vld [vmem:[%s637 + $0x78] sm:$0xf]
      %v714 = vsel %vm640, %v493, %v713
      %715 = vst [vmem:[%s637 + $0x78] sm:$0xf] %v714
      %716 = vst.msk [vmem:[%s637 + $0x7c] sm:$0xf] %vm226, %v502
      %v717 = vld [vmem:[%s637 + $0x80] sm:$0x1]
      %v718 = vsel %vm646, %v503, %v717
      %719 = vst [vmem:[%s637 + $0x80] sm:$0x1] %v718
      %v720 = vld [vmem:[%s637 + $0x84] sm:$0xf]
      %v721 = vsel %vm640, %v510, %v720
      %722 = vst [vmem:[%s637 + $0x84] sm:$0xf] %v721
      %723 = vst.msk [vmem:[%s637 + $0x88] sm:$0xf] %vm226, %v519
      %v724 = vld [vmem:[%s637 + $0x8c] sm:$0x1]
      %v725 = vsel %vm646, %v520, %v724
      %726 = vst [vmem:[%s637 + $0x8c] sm:$0x1] %v725
      %v727 = vld [vmem:[%s637 + $0x90] sm:$0xf]
      %v728 = vsel %vm640, %v527, %v727
      %729 = vst [vmem:[%s637 + $0x90] sm:$0xf] %v728
      %730 = vst.msk [vmem:[%s637 + $0x94] sm:$0xf] %vm226, %v536
      %v731 = vld [vmem:[%s637 + $0x98] sm:$0x1]
      %v732 = vsel %vm646, %v537, %v731
      %733 = vst [vmem:[%s637 + $0x98] sm:$0x1] %v732
      %v734 = vld [vmem:[%s637 + $0x9c] sm:$0xf]
      %v735 = vsel %vm640, %v544, %v734
      %736 = vst [vmem:[%s637 + $0x9c] sm:$0xf] %v735
      %737 = vst.msk [vmem:[%s637 + $0xa0] sm:$0xf] %vm226, %v553
      %v738 = vld [vmem:[%s637 + $0xa4] sm:$0x1]
      %v739 = vsel %vm646, %v554, %v738
      %740 = vst [vmem:[%s637 + $0xa4] sm:$0x1] %v739
      %v741 = vld [vmem:[%s637 + $0xa8] sm:$0xf]
      %v742 = vsel %vm640, %v561, %v741
      %743 = vst [vmem:[%s637 + $0xa8] sm:$0xf] %v742
      %744 = vst.msk [vmem:[%s637 + $0xac] sm:$0xf] %vm226, %v570
      %v745 = vld [vmem:[%s637 + $0xb0] sm:$0x1]
      %v746 = vsel %vm646, %v571, %v745
      %747 = vst [vmem:[%s637 + $0xb0] sm:$0x1] %v746
      %v748 = vld [vmem:[%s637 + $0xb4] sm:$0xf]
      %v749 = vsel %vm640, %v578, %v748
      %750 = vst [vmem:[%s637 + $0xb4] sm:$0xf] %v749
      %751 = vst.msk [vmem:[%s637 + $0xb8] sm:$0xf] %vm226, %v587
      %v752 = vld [vmem:[%s637 + $0xbc] sm:$0x1]
      %v753 = vsel %vm646, %v588, %v752
      %754 = vst [vmem:[%s637 + $0xbc] sm:$0x1] %v753
      %v755 = vld [vmem:[#allocation2] sm:$0xf]
      %v756 = vld [vmem:[#allocation2 + $0x4] sm:$0xf]
      %v757 = vld [vmem:[#allocation2 + $0xc] sm:$0xf]
      %v758 = vld [vmem:[#allocation2 + $0x10] sm:$0xf]
      %v759 = vld [vmem:[#allocation2 + $0x18] sm:$0xf]
      %v760 = vld [vmem:[#allocation2 + $0x1c] sm:$0xf]
      %v761 = vld [vmem:[#allocation2 + $0x24] sm:$0xf]
      %v762 = vld [vmem:[#allocation2 + $0x28] sm:$0xf]
      %v763 = vld [vmem:[#allocation2 + $0x30] sm:$0xf]
      %v764 = vld [vmem:[#allocation2 + $0x34] sm:$0xf]
      %v765 = vld [vmem:[#allocation2 + $0x3c] sm:$0xf]
      %v766 = vld [vmem:[#allocation2 + $0x40] sm:$0xf]
      %v767 = vld [vmem:[#allocation2 + $0x48] sm:$0xf]
      %v768 = vld [vmem:[#allocation2 + $0x4c] sm:$0xf]
      %v769 = vld [vmem:[#allocation2 + $0x54] sm:$0xf]
      %v770 = vld [vmem:[#allocation2 + $0x58] sm:$0xf]
      %v771 = vld [vmem:[#allocation2 + $0x60] sm:$0xf]
      %v772 = vld [vmem:[#allocation2 + $0x64] sm:$0xf]
      %v773 = vld [vmem:[#allocation2 + $0x6c] sm:$0xf]
      %v774 = vld [vmem:[#allocation2 + $0x70] sm:$0xf]
      %v775 = vld [vmem:[#allocation2 + $0x78] sm:$0xf]
      %v776 = vld [vmem:[#allocation2 + $0x7c] sm:$0xf]
      %v777 = vld [vmem:[#allocation2 + $0x84] sm:$0xf]
      %v778 = vld [vmem:[#allocation2 + $0x88] sm:$0xf]
      %v779 = vld [vmem:[#allocation2 + $0x90] sm:$0xf]
      %v780 = vld [vmem:[#allocation2 + $0x94] sm:$0xf]
      %v781 = vld [vmem:[#allocation2 + $0x9c] sm:$0xf]
      %v782 = vld [vmem:[#allocation2 + $0xa0] sm:$0xf]
      %v783 = vld [vmem:[#allocation2 + $0xa8] sm:$0xf]
      %v784 = vld [vmem:[#allocation2 + $0xac] sm:$0xf]
      %v785 = vld [vmem:[#allocation2 + $0xb4] sm:$0xf]
      %v786 = vld [vmem:[#allocation2 + $0xb8] sm:$0xf]
      %v787 = vld [vmem:[#allocation2 + $0x8] sm:$0x1]
      %v788 = vld [vmem:[#allocation2 + $0x14] sm:$0x1]
      %v789 = vld [vmem:[#allocation2 + $0x20] sm:$0x1]
      %v790 = vld [vmem:[#allocation2 + $0x2c] sm:$0x1]
      %v791 = vld [vmem:[#allocation2 + $0x38] sm:$0x1]
      %v792 = vld [vmem:[#allocation2 + $0x44] sm:$0x1]
      %v793 = vld [vmem:[#allocation2 + $0x50] sm:$0x1]
      %v794 = vld [vmem:[#allocation2 + $0x5c] sm:$0x1]
      %v795 = vld [vmem:[#allocation2 + $0x68] sm:$0x1]
      %v796 = vld [vmem:[#allocation2 + $0x74] sm:$0x1]
      %v797 = vld [vmem:[#allocation2 + $0x80] sm:$0x1]
      %v798 = vld [vmem:[#allocation2 + $0x8c] sm:$0x1]
      %v799 = vld [vmem:[#allocation2 + $0x98] sm:$0x1]
      %v800 = vld [vmem:[#allocation2 + $0xa4] sm:$0x1]
      %v801 = vld [vmem:[#allocation2 + $0xb0] sm:$0x1]
      %v802 = vld [vmem:[#allocation2 + $0xbc] sm:$0x1]
      %v803 = vld [vmem:[#allocation2] sm:$0xe]
      %v804 = vld [vmem:[#allocation2 + $0xc] sm:$0xe]
      %v805 = vld [vmem:[#allocation2 + $0x18] sm:$0xe]
      %v806 = vld [vmem:[#allocation2 + $0x24] sm:$0xe]
      %v807 = vld [vmem:[#allocation2 + $0x30] sm:$0xe]
      %v808 = vld [vmem:[#allocation2 + $0x3c] sm:$0xe]
      %v809 = vld [vmem:[#allocation2 + $0x48] sm:$0xe]
      %v810 = vld [vmem:[#allocation2 + $0x54] sm:$0xe]
      %v811 = vld [vmem:[#allocation2 + $0x60] sm:$0xe]
      %v812 = vld [vmem:[#allocation2 + $0x6c] sm:$0xe]
      %v813 = vld [vmem:[#allocation2 + $0x78] sm:$0xe]
      %v814 = vld [vmem:[#allocation2 + $0x84] sm:$0xe]
      %v815 = vld [vmem:[#allocation2 + $0x90] sm:$0xe]
      %v816 = vld [vmem:[#allocation2 + $0x9c] sm:$0xe]
      %v817 = vld [vmem:[#allocation2 + $0xa8] sm:$0xe]
      %v818 = vld [vmem:[#allocation2 + $0xb4] sm:$0xe]
      %v819 = vld [vmem:[%s637] sm:$0xf]
      %v820 = vld [vmem:[%s637 + $0x4] sm:$0xf]
      %v821 = vld [vmem:[%s637 + $0xc] sm:$0xf]
      %v822 = vld [vmem:[%s637 + $0x10] sm:$0xf]
      %v823 = vld [vmem:[%s637 + $0x18] sm:$0xf]
      %v824 = vld [vmem:[%s637 + $0x1c] sm:$0xf]
      %v825 = vld [vmem:[%s637 + $0x24] sm:$0xf]
      %v826 = vld [vmem:[%s637 + $0x28] sm:$0xf]
      %v827 = vld [vmem:[%s637 + $0x30] sm:$0xf]
      %v828 = vld [vmem:[%s637 + $0x34] sm:$0xf]
      %v829 = vld [vmem:[%s637 + $0x3c] sm:$0xf]
      %v830 = vld [vmem:[%s637 + $0x40] sm:$0xf]
      %v831 = vld [vmem:[%s637 + $0x48] sm:$0xf]
      %v832 = vld [vmem:[%s637 + $0x4c] sm:$0xf]
      %v833 = vld [vmem:[%s637 + $0x54] sm:$0xf]
      %v834 = vld [vmem:[%s637 + $0x58] sm:$0xf]
      %v835 = vld [vmem:[%s637 + $0x60] sm:$0xf]
      %v836 = vld [vmem:[%s637 + $0x64] sm:$0xf]
      %v837 = vld [vmem:[%s637 + $0x6c] sm:$0xf]
      %v838 = vld [vmem:[%s637 + $0x70] sm:$0xf]
      %v839 = vld [vmem:[%s637 + $0x78] sm:$0xf]
      %v840 = vld [vmem:[%s637 + $0x7c] sm:$0xf]
      %v841 = vld [vmem:[%s637 + $0x84] sm:$0xf]
      %v842 = vld [vmem:[%s637 + $0x88] sm:$0xf]
      %v843 = vld [vmem:[%s637 + $0x90] sm:$0xf]
      %v844 = vld [vmem:[%s637 + $0x94] sm:$0xf]
      %v845 = vld [vmem:[%s637 + $0x9c] sm:$0xf]
      %v846 = vld [vmem:[%s637 + $0xa0] sm:$0xf]
      %v847 = vld [vmem:[%s637 + $0xa8] sm:$0xf]
      %v848 = vld [vmem:[%s637 + $0xac] sm:$0xf]
      %v849 = vld [vmem:[%s637 + $0xb4] sm:$0xf]
      %v850 = vld [vmem:[%s637 + $0xb8] sm:$0xf]
      %v851 = vld [vmem:[%s637 + $0x8] sm:$0x1]
      %v852 = vld [vmem:[%s637 + $0x14] sm:$0x1]
      %v853 = vld [vmem:[%s637 + $0x20] sm:$0x1]
      %v854 = vld [vmem:[%s637 + $0x2c] sm:$0x1]
      %v855 = vld [vmem:[%s637 + $0x38] sm:$0x1]
      %v856 = vld [vmem:[%s637 + $0x44] sm:$0x1]
      %v857 = vld [vmem:[%s637 + $0x50] sm:$0x1]
      %v858 = vld [vmem:[%s637 + $0x5c] sm:$0x1]
      %v859 = vld [vmem:[%s637 + $0x68] sm:$0x1]
      %v860 = vld [vmem:[%s637 + $0x74] sm:$0x1]
      %v861 = vld [vmem:[%s637 + $0x80] sm:$0x1]
      %v862 = vld [vmem:[%s637 + $0x8c] sm:$0x1]
      %v863 = vld [vmem:[%s637 + $0x98] sm:$0x1]
      %v864 = vld [vmem:[%s637 + $0xa4] sm:$0x1]
      %v865 = vld [vmem:[%s637 + $0xb0] sm:$0x1]
      %v866 = vld [vmem:[%s637 + $0xbc] sm:$0x1]
      %v867 = vld [vmem:[%s637] sm:$0xe]
      %v868 = vld [vmem:[%s637 + $0xc] sm:$0xe]
      %v869 = vld [vmem:[%s637 + $0x18] sm:$0xe]
      %v870 = vld [vmem:[%s637 + $0x24] sm:$0xe]
      %v871 = vld [vmem:[%s637 + $0x30] sm:$0xe]
      %v872 = vld [vmem:[%s637 + $0x3c] sm:$0xe]
      %v873 = vld [vmem:[%s637 + $0x48] sm:$0xe]
      %v874 = vld [vmem:[%s637 + $0x54] sm:$0xe]
      %v875 = vld [vmem:[%s637 + $0x60] sm:$0xe]
      %v876 = vld [vmem:[%s637 + $0x6c] sm:$0xe]
      %v877 = vld [vmem:[%s637 + $0x78] sm:$0xe]
      %v878 = vld [vmem:[%s637 + $0x84] sm:$0xe]
      %v879 = vld [vmem:[%s637 + $0x90] sm:$0xe]
      %v880 = vld [vmem:[%s637 + $0x9c] sm:$0xe]
      %v881 = vld [vmem:[%s637 + $0xa8] sm:$0xe]
      %v882 = vld [vmem:[%s637 + $0xb4] sm:$0xe]
      %s883 = scalar_lea.vmem [#allocation2], 24
      %v884 = vld [vmem:[%s883] sm:$0xf]
      %v885 = vld [vmem:[%s883 + $0x4] sm:$0xf]
      %v886 = vld [vmem:[%s883 + $0xc] sm:$0xf]
      %v887 = vld [vmem:[%s883 + $0x10] sm:$0xf]
      %v888 = vld [vmem:[%s883 + $0x18] sm:$0xf]
      %v889 = vld [vmem:[%s883 + $0x1c] sm:$0xf]
      %v890 = vld [vmem:[%s883 + $0x24] sm:$0xf]
      %v891 = vld [vmem:[%s883 + $0x28] sm:$0xf]
      %v892 = vld [vmem:[%s883 + $0x30] sm:$0xf]
      %v893 = vld [vmem:[%s883 + $0x34] sm:$0xf]
      %v894 = vld [vmem:[%s883 + $0x3c] sm:$0xf]
      %v895 = vld [vmem:[%s883 + $0x40] sm:$0xf]
      %v896 = vld [vmem:[%s883 + $0x48] sm:$0xf]
      %v897 = vld [vmem:[%s883 + $0x4c] sm:$0xf]
      %v898 = vld [vmem:[%s883 + $0x54] sm:$0xf]
      %v899 = vld [vmem:[%s883 + $0x58] sm:$0xf]
      %v900 = vld [vmem:[%s883 + $0x60] sm:$0xf]
      %v901 = vld [vmem:[%s883 + $0x64] sm:$0xf]
      %v902 = vld [vmem:[%s883 + $0x6c] sm:$0xf]
      %v903 = vld [vmem:[%s883 + $0x70] sm:$0xf]
      %v904 = vld [vmem:[%s883 + $0x78] sm:$0xf]
      %v905 = vld [vmem:[%s883 + $0x7c] sm:$0xf]
      %v906 = vld [vmem:[%s883 + $0x84] sm:$0xf]
      %v907 = vld [vmem:[%s883 + $0x88] sm:$0xf]
      %v908 = vld [vmem:[%s883 + $0x90] sm:$0xf]
      %v909 = vld [vmem:[%s883 + $0x94] sm:$0xf]
      %v910 = vld [vmem:[%s883 + $0x9c] sm:$0xf]
      %v911 = vld [vmem:[%s883 + $0xa0] sm:$0xf]
      %v912 = vld [vmem:[%s883 + $0xa8] sm:$0xf]
      %v913 = vld [vmem:[%s883 + $0xac] sm:$0xf]
      %v914 = vld [vmem:[%s883 + $0xb4] sm:$0xf]
      %v915 = vld [vmem:[%s883 + $0xb8] sm:$0xf]
      %v916 = vld [vmem:[%s883 + $0x8] sm:$0x1]
      %v917 = vld [vmem:[%s883 + $0x14] sm:$0x1]
      %v918 = vld [vmem:[%s883 + $0x20] sm:$0x1]
      %v919 = vld [vmem:[%s883 + $0x2c] sm:$0x1]
      %v920 = vld [vmem:[%s883 + $0x38] sm:$0x1]
      %v921 = vld [vmem:[%s883 + $0x44] sm:$0x1]
      %v922 = vld [vmem:[%s883 + $0x50] sm:$0x1]
      %v923 = vld [vmem:[%s883 + $0x5c] sm:$0x1]
      %v924 = vld [vmem:[%s883 + $0x68] sm:$0x1]
      %v925 = vld [vmem:[%s883 + $0x74] sm:$0x1]
      %v926 = vld [vmem:[%s883 + $0x80] sm:$0x1]
      %v927 = vld [vmem:[%s883 + $0x8c] sm:$0x1]
      %v928 = vld [vmem:[%s883 + $0x98] sm:$0x1]
      %v929 = vld [vmem:[%s883 + $0xa4] sm:$0x1]
      %v930 = vld [vmem:[%s883 + $0xb0] sm:$0x1]
      %v931 = vld [vmem:[%s883 + $0xbc] sm:$0x1]
      %v932 = vld [vmem:[%s883] sm:$0xe]
      %v933 = vld [vmem:[%s883 + $0xc] sm:$0xe]
      %v934 = vld [vmem:[%s883 + $0x18] sm:$0xe]
      %v935 = vld [vmem:[%s883 + $0x24] sm:$0xe]
      %v936 = vld [vmem:[%s883 + $0x30] sm:$0xe]
      %v937 = vld [vmem:[%s883 + $0x3c] sm:$0xe]
      %v938 = vld [vmem:[%s883 + $0x48] sm:$0xe]
      %v939 = vld [vmem:[%s883 + $0x54] sm:$0xe]
      %v940 = vld [vmem:[%s883 + $0x60] sm:$0xe]
      %v941 = vld [vmem:[%s883 + $0x6c] sm:$0xe]
      %v942 = vld [vmem:[%s883 + $0x78] sm:$0xe]
      %v943 = vld [vmem:[%s883 + $0x84] sm:$0xe]
      %v944 = vld [vmem:[%s883 + $0x90] sm:$0xe]
      %v945 = vld [vmem:[%s883 + $0x9c] sm:$0xe]
      %v946 = vld [vmem:[%s883 + $0xa8] sm:$0xe]
      %v947 = vld [vmem:[%s883 + $0xb4] sm:$0xe]
      %v980 = vunpack.c.l.b16 %v755
      %v981 = vunpack.c.l.b16 %v756
      %v982 = vunpack.c.l.b16 %v757
      %v983 = vunpack.c.l.b16 %v758
      %v984 = vunpack.c.l.b16 %v759
      %v985 = vunpack.c.l.b16 %v760
      %v986 = vunpack.c.l.b16 %v761
      %v987 = vunpack.c.l.b16 %v762
      %v988 = vunpack.c.l.b16 %v763
      %v989 = vunpack.c.l.b16 %v764
      %v990 = vunpack.c.l.b16 %v765
      %v991 = vunpack.c.l.b16 %v766
      %v992 = vunpack.c.l.b16 %v767
      %v993 = vunpack.c.l.b16 %v768
      %v994 = vunpack.c.l.b16 %v769
      %v995 = vunpack.c.l.b16 %v770
      %v996 = vunpack.c.l.b16 %v771
      %v997 = vunpack.c.l.b16 %v772
      %v998 = vunpack.c.l.b16 %v773
      %v999 = vunpack.c.l.b16 %v774
      %v1000 = vunpack.c.l.b16 %v775
      %v1001 = vunpack.c.l.b16 %v776
      %v1002 = vunpack.c.l.b16 %v777
      %v1003 = vunpack.c.l.b16 %v778
      %v1004 = vunpack.c.l.b16 %v779
      %v1005 = vunpack.c.l.b16 %v780
      %v1006 = vunpack.c.l.b16 %v781
      %v1007 = vunpack.c.l.b16 %v782
      %v1008 = vunpack.c.l.b16 %v783
      %v1009 = vunpack.c.l.b16 %v784
      %v1010 = vunpack.c.l.b16 %v785
      %v1011 = vunpack.c.l.b16 %v786
      %v1012 = vpack.c.b16 %v981, %v980
      %v1013 = vpack.c.b16 %v983, %v982
      %v1014 = vpack.c.b16 %v985, %v984
      %v1015 = vpack.c.b16 %v987, %v986
      %v1016 = vpack.c.b16 %v989, %v988
      %v1017 = vpack.c.b16 %v991, %v990
      %v1018 = vpack.c.b16 %v993, %v992
      %v1019 = vpack.c.b16 %v995, %v994
      %v1020 = vpack.c.b16 %v997, %v996
      %v1021 = vpack.c.b16 %v999, %v998
      %v1022 = vpack.c.b16 %v1001, %v1000
      %v1023 = vpack.c.b16 %v1003, %v1002
      %v1024 = vpack.c.b16 %v1005, %v1004
      %v1025 = vpack.c.b16 %v1007, %v1006
      %v1026 = vpack.c.b16 %v1009, %v1008
      %v1027 = vpack.c.b16 %v1011, %v1010
      %v1044 = vunpack.c.l.b16 %v787
      %v1045 = vunpack.c.l.b16 %v788
      %v1046 = vunpack.c.l.b16 %v789
      %v1047 = vunpack.c.l.b16 %v790
      %v1048 = vunpack.c.l.b16 %v791
      %v1049 = vunpack.c.l.b16 %v792
      %v1050 = vunpack.c.l.b16 %v793
      %v1051 = vunpack.c.l.b16 %v794
      %v1052 = vunpack.c.l.b16 %v795
      %v1053 = vunpack.c.l.b16 %v796
      %v1054 = vunpack.c.l.b16 %v797
      %v1055 = vunpack.c.l.b16 %v798
      %v1056 = vunpack.c.l.b16 %v799
      %v1057 = vunpack.c.l.b16 %v800
      %v1058 = vunpack.c.l.b16 %v801
      %v1059 = vunpack.c.l.b16 %v802
      %v1060 = vpack.c.b16 %v1044, %v1044
      %v1061 = vpack.c.b16 %v1045, %v1045
      %v1062 = vpack.c.b16 %v1046, %v1046
      %v1063 = vpack.c.b16 %v1047, %v1047
      %v1064 = vpack.c.b16 %v1048, %v1048
      %v1065 = vpack.c.b16 %v1049, %v1049
      %v1066 = vpack.c.b16 %v1050, %v1050
      %v1067 = vpack.c.b16 %v1051, %v1051
      %v1068 = vpack.c.b16 %v1052, %v1052
      %v1069 = vpack.c.b16 %v1053, %v1053
      %v1070 = vpack.c.b16 %v1054, %v1054
      %v1071 = vpack.c.b16 %v1055, %v1055
      %v1072 = vpack.c.b16 %v1056, %v1056
      %v1073 = vpack.c.b16 %v1057, %v1057
      %v1074 = vpack.c.b16 %v1058, %v1058
      %v1075 = vpack.c.b16 %v1059, %v1059
      %vm1076 = vsmask.f32 7424
      %v1078 = vshrl.u32 %v1012, 16
      %v1080 = vshll.u32 %v1012, 16
      %v1082 = vrot.slane %v1080, 1
      %v1083 = vor.u32 %v1078, %v1082
      %v1085 = vshll.u32 %v1060, 16
      %v1087 = vrot.slane %v1085, 1
      %v1088 = vsel %vm1076, %v1083, %v1087
      %v1090 = vshrl.u32 %v1013, 16
      %v1092 = vshll.u32 %v1013, 16
      %v1094 = vrot.slane %v1092, 1
      %v1095 = vor.u32 %v1090, %v1094
      %v1097 = vshll.u32 %v1061, 16
      %v1099 = vrot.slane %v1097, 1
      %v1100 = vsel %vm1076, %v1095, %v1099
      %v1102 = vshrl.u32 %v1014, 16
      %v1104 = vshll.u32 %v1014, 16
      %v1106 = vrot.slane %v1104, 1
      %v1107 = vor.u32 %v1102, %v1106
      %v1109 = vshll.u32 %v1062, 16
      %v1111 = vrot.slane %v1109, 1
      %v1112 = vsel %vm1076, %v1107, %v1111
      %v1114 = vshrl.u32 %v1015, 16
      %v1116 = vshll.u32 %v1015, 16
      %v1118 = vrot.slane %v1116, 1
      %v1119 = vor.u32 %v1114, %v1118
      %v1121 = vshll.u32 %v1063, 16
      %v1123 = vrot.slane %v1121, 1
      %v1124 = vsel %vm1076, %v1119, %v1123
      %v1126 = vshrl.u32 %v1016, 16
      %v1128 = vshll.u32 %v1016, 16
      %v1130 = vrot.slane %v1128, 1
      %v1131 = vor.u32 %v1126, %v1130
      %v1133 = vshll.u32 %v1064, 16
      %v1135 = vrot.slane %v1133, 1
      %v1136 = vsel %vm1076, %v1131, %v1135
      %v1138 = vshrl.u32 %v1017, 16
      %v1140 = vshll.u32 %v1017, 16
      %v1142 = vrot.slane %v1140, 1
      %v1143 = vor.u32 %v1138, %v1142
      %v1145 = vshll.u32 %v1065, 16
      %v1147 = vrot.slane %v1145, 1
      %v1148 = vsel %vm1076, %v1143, %v1147
      %v1150 = vshrl.u32 %v1018, 16
      %v1152 = vshll.u32 %v1018, 16
      %v1154 = vrot.slane %v1152, 1
      %v1155 = vor.u32 %v1150, %v1154
      %v1157 = vshll.u32 %v1066, 16
      %v1159 = vrot.slane %v1157, 1
      %v1160 = vsel %vm1076, %v1155, %v1159
      %v1162 = vshrl.u32 %v1019, 16
      %v1164 = vshll.u32 %v1019, 16
      %v1166 = vrot.slane %v1164, 1
      %v1167 = vor.u32 %v1162, %v1166
      %v1169 = vshll.u32 %v1067, 16
      %v1171 = vrot.slane %v1169, 1
      %v1172 = vsel %vm1076, %v1167, %v1171
      %v1174 = vshrl.u32 %v1020, 16
      %v1176 = vshll.u32 %v1020, 16
      %v1178 = vrot.slane %v1176, 1
      %v1179 = vor.u32 %v1174, %v1178
      %v1181 = vshll.u32 %v1068, 16
      %v1183 = vrot.slane %v1181, 1
      %v1184 = vsel %vm1076, %v1179, %v1183
      %v1186 = vshrl.u32 %v1021, 16
      %v1188 = vshll.u32 %v1021, 16
      %v1190 = vrot.slane %v1188, 1
      %v1191 = vor.u32 %v1186, %v1190
      %v1193 = vshll.u32 %v1069, 16
      %v1195 = vrot.slane %v1193, 1
      %v1196 = vsel %vm1076, %v1191, %v1195
      %v1198 = vshrl.u32 %v1022, 16
      %v1200 = vshll.u32 %v1022, 16
      %v1202 = vrot.slane %v1200, 1
      %v1203 = vor.u32 %v1198, %v1202
      %v1205 = vshll.u32 %v1070, 16
      %v1207 = vrot.slane %v1205, 1
      %v1208 = vsel %vm1076, %v1203, %v1207
      %v1210 = vshrl.u32 %v1023, 16
      %v1212 = vshll.u32 %v1023, 16
      %v1214 = vrot.slane %v1212, 1
      %v1215 = vor.u32 %v1210, %v1214
      %v1217 = vshll.u32 %v1071, 16
      %v1219 = vrot.slane %v1217, 1
      %v1220 = vsel %vm1076, %v1215, %v1219
      %v1222 = vshrl.u32 %v1024, 16
      %v1224 = vshll.u32 %v1024, 16
      %v1226 = vrot.slane %v1224, 1
      %v1227 = vor.u32 %v1222, %v1226
      %v1229 = vshll.u32 %v1072, 16
      %v1231 = vrot.slane %v1229, 1
      %v1232 = vsel %vm1076, %v1227, %v1231
      %v1234 = vshrl.u32 %v1025, 16
      %v1236 = vshll.u32 %v1025, 16
      %v1238 = vrot.slane %v1236, 1
      %v1239 = vor.u32 %v1234, %v1238
      %v1241 = vshll.u32 %v1073, 16
      %v1243 = vrot.slane %v1241, 1
      %v1244 = vsel %vm1076, %v1239, %v1243
      %v1246 = vshrl.u32 %v1026, 16
      %v1248 = vshll.u32 %v1026, 16
      %v1250 = vrot.slane %v1248, 1
      %v1251 = vor.u32 %v1246, %v1250
      %v1253 = vshll.u32 %v1074, 16
      %v1255 = vrot.slane %v1253, 1
      %v1256 = vsel %vm1076, %v1251, %v1255
      %v1258 = vshrl.u32 %v1027, 16
      %v1260 = vshll.u32 %v1027, 16
      %v1262 = vrot.slane %v1260, 1
      %v1263 = vor.u32 %v1258, %v1262
      %v1265 = vshll.u32 %v1075, 16
      %v1267 = vrot.slane %v1265, 1
      %v1268 = vsel %vm1076, %v1263, %v1267
      %1269 = vrot.lane.b32.xlu0 %v1088, 4
      %v1270 = vpop.permute.xlu0 %1269
      %1271 = vrot.lane.b32.xlu0 %v1100, 4
      %v1272 = vpop.permute.xlu0 %1271
      %1273 = vrot.lane.b32.xlu0 %v1112, 4
      %v1274 = vpop.permute.xlu0 %1273
      %1275 = vrot.lane.b32.xlu0 %v1124, 4
      %v1276 = vpop.permute.xlu0 %1275
      %1277 = vrot.lane.b32.xlu0 %v1136, 4
      %v1278 = vpop.permute.xlu0 %1277
      %1279 = vrot.lane.b32.xlu0 %v1148, 4
      %v1280 = vpop.permute.xlu0 %1279
      %1281 = vrot.lane.b32.xlu0 %v1160, 4
      %v1282 = vpop.permute.xlu0 %1281
      %1283 = vrot.lane.b32.xlu0 %v1172, 4
      %v1284 = vpop.permute.xlu0 %1283
      %1285 = vrot.lane.b32.xlu0 %v1184, 4
      %v1286 = vpop.permute.xlu0 %1285
      %1287 = vrot.lane.b32.xlu0 %v1196, 4
      %v1288 = vpop.permute.xlu0 %1287
      %1289 = vrot.lane.b32.xlu0 %v1208, 4
      %v1290 = vpop.permute.xlu0 %1289
      %1291 = vrot.lane.b32.xlu0 %v1220, 4
      %v1292 = vpop.permute.xlu0 %1291
      %1293 = vrot.lane.b32.xlu0 %v1232, 4
      %v1294 = vpop.permute.xlu0 %1293
      %1295 = vrot.lane.b32.xlu0 %v1244, 4
      %v1296 = vpop.permute.xlu0 %1295
      %1297 = vrot.lane.b32.xlu0 %v1256, 4
      %v1298 = vpop.permute.xlu0 %1297
      %1299 = vrot.lane.b32.xlu0 %v1268, 4
      %v1300 = vpop.permute.xlu0 %1299
      %v1317 = vunpack.c.l.b16 %v803
      %v1318 = vunpack.c.l.b16 %v804
      %v1319 = vunpack.c.l.b16 %v805
      %v1320 = vunpack.c.l.b16 %v806
      %v1321 = vunpack.c.l.b16 %v807
      %v1322 = vunpack.c.l.b16 %v808
      %v1323 = vunpack.c.l.b16 %v809
      %v1324 = vunpack.c.l.b16 %v810
      %v1325 = vunpack.c.l.b16 %v811
      %v1326 = vunpack.c.l.b16 %v812
      %v1327 = vunpack.c.l.b16 %v813
      %v1328 = vunpack.c.l.b16 %v814
      %v1329 = vunpack.c.l.b16 %v815
      %v1330 = vunpack.c.l.b16 %v816
      %v1331 = vunpack.c.l.b16 %v817
      %v1332 = vunpack.c.l.b16 %v818
      %v1333 = vpack.c.b16 %v981, %v1317
      %v1334 = vpack.c.b16 %v983, %v1318
      %v1335 = vpack.c.b16 %v985, %v1319
      %v1336 = vpack.c.b16 %v987, %v1320
      %v1337 = vpack.c.b16 %v989, %v1321
      %v1338 = vpack.c.b16 %v991, %v1322
      %v1339 = vpack.c.b16 %v993, %v1323
      %v1340 = vpack.c.b16 %v995, %v1324
      %v1341 = vpack.c.b16 %v997, %v1325
      %v1342 = vpack.c.b16 %v999, %v1326
      %v1343 = vpack.c.b16 %v1001, %v1327
      %v1344 = vpack.c.b16 %v1003, %v1328
      %v1345 = vpack.c.b16 %v1005, %v1329
      %v1346 = vpack.c.b16 %v1007, %v1330
      %v1347 = vpack.c.b16 %v1009, %v1331
      %v1348 = vpack.c.b16 %v1011, %v1332
      %vm1349 = vcmask 1046528
      %v1350 = vrot.slane %v1333, 1
      %v1351 = vrot.slane %v1060, 1
      %v1352 = vsel %vm1349, %v1350, %v1351
      %v1353 = vrot.slane %v1334, 1
      %v1354 = vrot.slane %v1061, 1
      %v1355 = vsel %vm1349, %v1353, %v1354
      %v1356 = vrot.slane %v1335, 1
      %v1357 = vrot.slane %v1062, 1
      %v1358 = vsel %vm1349, %v1356, %v1357
      %v1359 = vrot.slane %v1336, 1
      %v1360 = vrot.slane %v1063, 1
      %v1361 = vsel %vm1349, %v1359, %v1360
      %v1362 = vrot.slane %v1337, 1
      %v1363 = vrot.slane %v1064, 1
      %v1364 = vsel %vm1349, %v1362, %v1363
      %v1365 = vrot.slane %v1338, 1
      %v1366 = vrot.slane %v1065, 1
      %v1367 = vsel %vm1349, %v1365, %v1366
      %v1368 = vrot.slane %v1339, 1
      %v1369 = vrot.slane %v1066, 1
      %v1370 = vsel %vm1349, %v1368, %v1369
      %v1371 = vrot.slane %v1340, 1
      %v1372 = vrot.slane %v1067, 1
      %v1373 = vsel %vm1349, %v1371, %v1372
      %v1374 = vrot.slane %v1341, 1
      %v1375 = vrot.slane %v1068, 1
      %v1376 = vsel %vm1349, %v1374, %v1375
      %v1377 = vrot.slane %v1342, 1
      %v1378 = vrot.slane %v1069, 1
      %v1379 = vsel %vm1349, %v1377, %v1378
      %v1380 = vrot.slane %v1343, 1
      %v1381 = vrot.slane %v1070, 1
      %v1382 = vsel %vm1349, %v1380, %v1381
      %v1383 = vrot.slane %v1344, 1
      %v1384 = vrot.slane %v1071, 1
      %v1385 = vsel %vm1349, %v1383, %v1384
      %v1386 = vrot.slane %v1345, 1
      %v1387 = vrot.slane %v1072, 1
      %v1388 = vsel %vm1349, %v1386, %v1387
      %v1389 = vrot.slane %v1346, 1
      %v1390 = vrot.slane %v1073, 1
      %v1391 = vsel %vm1349, %v1389, %v1390
      %v1392 = vrot.slane %v1347, 1
      %v1393 = vrot.slane %v1074, 1
      %v1394 = vsel %vm1349, %v1392, %v1393
      %v1395 = vrot.slane %v1348, 1
      %v1396 = vrot.slane %v1075, 1
      %v1397 = vsel %vm1349, %v1395, %v1396
      %1398 = vrot.lane.b32.xlu0 %v1352, 8
      %v1399 = vpop.permute.xlu0 %1398
      %1400 = vrot.lane.b32.xlu0 %v1355, 8
      %v1401 = vpop.permute.xlu0 %1400
      %1402 = vrot.lane.b32.xlu0 %v1358, 8
      %v1403 = vpop.permute.xlu0 %1402
      %1404 = vrot.lane.b32.xlu0 %v1361, 8
      %v1405 = vpop.permute.xlu0 %1404
      %1406 = vrot.lane.b32.xlu0 %v1364, 8
      %v1407 = vpop.permute.xlu0 %1406
      %1408 = vrot.lane.b32.xlu0 %v1367, 8
      %v1409 = vpop.permute.xlu0 %1408
      %1410 = vrot.lane.b32.xlu0 %v1370, 8
      %v1411 = vpop.permute.xlu0 %1410
      %1412 = vrot.lane.b32.xlu0 %v1373, 8
      %v1413 = vpop.permute.xlu0 %1412
      %1414 = vrot.lane.b32.xlu0 %v1376, 8
      %v1415 = vpop.permute.xlu0 %1414
      %1416 = vrot.lane.b32.xlu0 %v1379, 8
      %v1417 = vpop.permute.xlu0 %1416
      %1418 = vrot.lane.b32.xlu0 %v1382, 8
      %v1419 = vpop.permute.xlu0 %1418
      %1420 = vrot.lane.b32.xlu0 %v1385, 8
      %v1421 = vpop.permute.xlu0 %1420
      %1422 = vrot.lane.b32.xlu0 %v1388, 8
      %v1423 = vpop.permute.xlu0 %1422
      %1424 = vrot.lane.b32.xlu0 %v1391, 8
      %v1425 = vpop.permute.xlu0 %1424
      %1426 = vrot.lane.b32.xlu0 %v1394, 8
      %v1427 = vpop.permute.xlu0 %1426
      %1428 = vrot.lane.b32.xlu0 %v1397, 8
      %v1429 = vpop.permute.xlu0 %1428
      %v1462 = vunpack.c.l.b16 %v819
      %v1463 = vunpack.c.l.b16 %v820
      %v1464 = vunpack.c.l.b16 %v821
      %v1465 = vunpack.c.l.b16 %v822
      %v1466 = vunpack.c.l.b16 %v823
      %v1467 = vunpack.c.l.b16 %v824
      %v1468 = vunpack.c.l.b16 %v825
      %v1469 = vunpack.c.l.b16 %v826
      %v1470 = vunpack.c.l.b16 %v827
      %v1471 = vunpack.c.l.b16 %v828
      %v1472 = vunpack.c.l.b16 %v829
      %v1473 = vunpack.c.l.b16 %v830
      %v1474 = vunpack.c.l.b16 %v831
      %v1475 = vunpack.c.l.b16 %v832
      %v1476 = vunpack.c.l.b16 %v833
      %v1477 = vunpack.c.l.b16 %v834
      %v1478 = vunpack.c.l.b16 %v835
      %v1479 = vunpack.c.l.b16 %v836
      %v1480 = vunpack.c.l.b16 %v837
      %v1481 = vunpack.c.l.b16 %v838
      %v1482 = vunpack.c.l.b16 %v839
      %v1483 = vunpack.c.l.b16 %v840
      %v1484 = vunpack.c.l.b16 %v841
      %v1485 = vunpack.c.l.b16 %v842
      %v1486 = vunpack.c.l.b16 %v843
      %v1487 = vunpack.c.l.b16 %v844
      %v1488 = vunpack.c.l.b16 %v845
      %v1489 = vunpack.c.l.b16 %v846
      %v1490 = vunpack.c.l.b16 %v847
      %v1491 = vunpack.c.l.b16 %v848
      %v1492 = vunpack.c.l.b16 %v849
      %v1493 = vunpack.c.l.b16 %v850
      %v1494 = vpack.c.b16 %v1463, %v1462
      %v1495 = vpack.c.b16 %v1465, %v1464
      %v1496 = vpack.c.b16 %v1467, %v1466
      %v1497 = vpack.c.b16 %v1469, %v1468
      %v1498 = vpack.c.b16 %v1471, %v1470
      %v1499 = vpack.c.b16 %v1473, %v1472
      %v1500 = vpack.c.b16 %v1475, %v1474
      %v1501 = vpack.c.b16 %v1477, %v1476
      %v1502 = vpack.c.b16 %v1479, %v1478
      %v1503 = vpack.c.b16 %v1481, %v1480
      %v1504 = vpack.c.b16 %v1483, %v1482
      %v1505 = vpack.c.b16 %v1485, %v1484
      %v1506 = vpack.c.b16 %v1487, %v1486
      %v1507 = vpack.c.b16 %v1489, %v1488
      %v1508 = vpack.c.b16 %v1491, %v1490
      %v1509 = vpack.c.b16 %v1493, %v1492
      %1510 = vrot.lane.b32.xlu0 %v1494, 12
      %v1511 = vpop.permute.xlu0 %1510
      %1512 = vrot.lane.b32.xlu0 %v1495, 12
      %v1513 = vpop.permute.xlu0 %1512
      %1514 = vrot.lane.b32.xlu0 %v1496, 12
      %v1515 = vpop.permute.xlu0 %1514
      %1516 = vrot.lane.b32.xlu0 %v1497, 12
      %v1517 = vpop.permute.xlu0 %1516
      %1518 = vrot.lane.b32.xlu0 %v1498, 12
      %v1519 = vpop.permute.xlu0 %1518
      %1520 = vrot.lane.b32.xlu0 %v1499, 12
      %v1521 = vpop.permute.xlu0 %1520
      %1522 = vrot.lane.b32.xlu0 %v1500, 12
      %v1523 = vpop.permute.xlu0 %1522
      %1524 = vrot.lane.b32.xlu0 %v1501, 12
      %v1525 = vpop.permute.xlu0 %1524
      %1526 = vrot.lane.b32.xlu0 %v1502, 12
      %v1527 = vpop.permute.xlu0 %1526
      %1528 = vrot.lane.b32.xlu0 %v1503, 12
      %v1529 = vpop.permute.xlu0 %1528
      %1530 = vrot.lane.b32.xlu0 %v1504, 12
      %v1531 = vpop.permute.xlu0 %1530
      %1532 = vrot.lane.b32.xlu0 %v1505, 12
      %v1533 = vpop.permute.xlu0 %1532
      %1534 = vrot.lane.b32.xlu0 %v1506, 12
      %v1535 = vpop.permute.xlu0 %1534
      %1536 = vrot.lane.b32.xlu0 %v1507, 12
      %v1537 = vpop.permute.xlu0 %1536
      %1538 = vrot.lane.b32.xlu0 %v1508, 12
      %v1539 = vpop.permute.xlu0 %1538
      %1540 = vrot.lane.b32.xlu0 %v1509, 12
      %v1541 = vpop.permute.xlu0 %1540
      %v1558 = vunpack.c.l.b16 %v851
      %v1559 = vunpack.c.l.b16 %v852
      %v1560 = vunpack.c.l.b16 %v853
      %v1561 = vunpack.c.l.b16 %v854
      %v1562 = vunpack.c.l.b16 %v855
      %v1563 = vunpack.c.l.b16 %v856
      %v1564 = vunpack.c.l.b16 %v857
      %v1565 = vunpack.c.l.b16 %v858
      %v1566 = vunpack.c.l.b16 %v859
      %v1567 = vunpack.c.l.b16 %v860
      %v1568 = vunpack.c.l.b16 %v861
      %v1569 = vunpack.c.l.b16 %v862
      %v1570 = vunpack.c.l.b16 %v863
      %v1571 = vunpack.c.l.b16 %v864
      %v1572 = vunpack.c.l.b16 %v865
      %v1573 = vunpack.c.l.b16 %v866
      %v1574 = vpack.c.b16 %v1558, %v1558
      %v1575 = vpack.c.b16 %v1559, %v1559
      %v1576 = vpack.c.b16 %v1560, %v1560
      %v1577 = vpack.c.b16 %v1561, %v1561
      %v1578 = vpack.c.b16 %v1562, %v1562
      %v1579 = vpack.c.b16 %v1563, %v1563
      %v1580 = vpack.c.b16 %v1564, %v1564
      %v1581 = vpack.c.b16 %v1565, %v1565
      %v1582 = vpack.c.b16 %v1566, %v1566
      %v1583 = vpack.c.b16 %v1567, %v1567
      %v1584 = vpack.c.b16 %v1568, %v1568
      %v1585 = vpack.c.b16 %v1569, %v1569
      %v1586 = vpack.c.b16 %v1570, %v1570
      %v1587 = vpack.c.b16 %v1571, %v1571
      %v1588 = vpack.c.b16 %v1572, %v1572
      %v1589 = vpack.c.b16 %v1573, %v1573
      %v1591 = vshrl.u32 %v1494, 16
      %v1593 = vshll.u32 %v1494, 16
      %v1595 = vrot.slane %v1593, 1
      %v1596 = vor.u32 %v1591, %v1595
      %v1598 = vshll.u32 %v1574, 16
      %v1600 = vrot.slane %v1598, 1
      %v1601 = vsel %vm1076, %v1596, %v1600
      %v1603 = vshrl.u32 %v1495, 16
      %v1605 = vshll.u32 %v1495, 16
      %v1607 = vrot.slane %v1605, 1
      %v1608 = vor.u32 %v1603, %v1607
      %v1610 = vshll.u32 %v1575, 16
      %v1612 = vrot.slane %v1610, 1
      %v1613 = vsel %vm1076, %v1608, %v1612
      %v1615 = vshrl.u32 %v1496, 16
      %v1617 = vshll.u32 %v1496, 16
      %v1619 = vrot.slane %v1617, 1
      %v1620 = vor.u32 %v1615, %v1619
      %v1622 = vshll.u32 %v1576, 16
      %v1624 = vrot.slane %v1622, 1
      %v1625 = vsel %vm1076, %v1620, %v1624
      %v1627 = vshrl.u32 %v1497, 16
      %v1629 = vshll.u32 %v1497, 16
      %v1631 = vrot.slane %v1629, 1
      %v1632 = vor.u32 %v1627, %v1631
      %v1634 = vshll.u32 %v1577, 16
      %v1636 = vrot.slane %v1634, 1
      %v1637 = vsel %vm1076, %v1632, %v1636
      %v1639 = vshrl.u32 %v1498, 16
      %v1641 = vshll.u32 %v1498, 16
      %v1643 = vrot.slane %v1641, 1
      %v1644 = vor.u32 %v1639, %v1643
      %v1646 = vshll.u32 %v1578, 16
      %v1648 = vrot.slane %v1646, 1
      %v1649 = vsel %vm1076, %v1644, %v1648
      %v1651 = vshrl.u32 %v1499, 16
      %v1653 = vshll.u32 %v1499, 16
      %v1655 = vrot.slane %v1653, 1
      %v1656 = vor.u32 %v1651, %v1655
      %v1658 = vshll.u32 %v1579, 16
      %v1660 = vrot.slane %v1658, 1
      %v1661 = vsel %vm1076, %v1656, %v1660
      %v1663 = vshrl.u32 %v1500, 16
      %v1665 = vshll.u32 %v1500, 16
      %v1667 = vrot.slane %v1665, 1
      %v1668 = vor.u32 %v1663, %v1667
      %v1670 = vshll.u32 %v1580, 16
      %v1672 = vrot.slane %v1670, 1
      %v1673 = vsel %vm1076, %v1668, %v1672
      %v1675 = vshrl.u32 %v1501, 16
      %v1677 = vshll.u32 %v1501, 16
      %v1679 = vrot.slane %v1677, 1
      %v1680 = vor.u32 %v1675, %v1679
      %v1682 = vshll.u32 %v1581, 16
      %v1684 = vrot.slane %v1682, 1
      %v1685 = vsel %vm1076, %v1680, %v1684
      %v1687 = vshrl.u32 %v1502, 16
      %v1689 = vshll.u32 %v1502, 16
      %v1691 = vrot.slane %v1689, 1
      %v1692 = vor.u32 %v1687, %v1691
      %v1694 = vshll.u32 %v1582, 16
      %v1696 = vrot.slane %v1694, 1
      %v1697 = vsel %vm1076, %v1692, %v1696
      %v1699 = vshrl.u32 %v1503, 16
      %v1701 = vshll.u32 %v1503, 16
      %v1703 = vrot.slane %v1701, 1
      %v1704 = vor.u32 %v1699, %v1703
      %v1706 = vshll.u32 %v1583, 16
      %v1708 = vrot.slane %v1706, 1
      %v1709 = vsel %vm1076, %v1704, %v1708
      %v1711 = vshrl.u32 %v1504, 16
      %v1713 = vshll.u32 %v1504, 16
      %v1715 = vrot.slane %v1713, 1
      %v1716 = vor.u32 %v1711, %v1715
      %v1718 = vshll.u32 %v1584, 16
      %v1720 = vrot.slane %v1718, 1
      %v1721 = vsel %vm1076, %v1716, %v1720
      %v1723 = vshrl.u32 %v1505, 16
      %v1725 = vshll.u32 %v1505, 16
      %v1727 = vrot.slane %v1725, 1
      %v1728 = vor.u32 %v1723, %v1727
      %v1730 = vshll.u32 %v1585, 16
      %v1732 = vrot.slane %v1730, 1
      %v1733 = vsel %vm1076, %v1728, %v1732
      %v1735 = vshrl.u32 %v1506, 16
      %v1737 = vshll.u32 %v1506, 16
      %v1739 = vrot.slane %v1737, 1
      %v1740 = vor.u32 %v1735, %v1739
      %v1742 = vshll.u32 %v1586, 16
      %v1744 = vrot.slane %v1742, 1
      %v1745 = vsel %vm1076, %v1740, %v1744
      %v1747 = vshrl.u32 %v1507, 16
      %v1749 = vshll.u32 %v1507, 16
      %v1751 = vrot.slane %v1749, 1
      %v1752 = vor.u32 %v1747, %v1751
      %v1754 = vshll.u32 %v1587, 16
      %v1756 = vrot.slane %v1754, 1
      %v1757 = vsel %vm1076, %v1752, %v1756
      %v1759 = vshrl.u32 %v1508, 16
      %v1761 = vshll.u32 %v1508, 16
      %v1763 = vrot.slane %v1761, 1
      %v1764 = vor.u32 %v1759, %v1763
      %v1766 = vshll.u32 %v1588, 16
      %v1768 = vrot.slane %v1766, 1
      %v1769 = vsel %vm1076, %v1764, %v1768
      %v1771 = vshrl.u32 %v1509, 16
      %v1773 = vshll.u32 %v1509, 16
      %v1775 = vrot.slane %v1773, 1
      %v1776 = vor.u32 %v1771, %v1775
      %v1778 = vshll.u32 %v1589, 16
      %v1780 = vrot.slane %v1778, 1
      %v1781 = vsel %vm1076, %v1776, %v1780
      %1782 = vrot.lane.b32.xlu0 %v1601, 16
      %v1783 = vpop.permute.xlu0 %1782
      %1784 = vrot.lane.b32.xlu0 %v1613, 16
      %v1785 = vpop.permute.xlu0 %1784
      %1786 = vrot.lane.b32.xlu0 %v1625, 16
      %v1787 = vpop.permute.xlu0 %1786
      %1788 = vrot.lane.b32.xlu0 %v1637, 16
      %v1789 = vpop.permute.xlu0 %1788
      %1790 = vrot.lane.b32.xlu0 %v1649, 16
      %v1791 = vpop.permute.xlu0 %1790
      %1792 = vrot.lane.b32.xlu0 %v1661, 16
      %v1793 = vpop.permute.xlu0 %1792
      %1794 = vrot.lane.b32.xlu0 %v1673, 16
      %v1795 = vpop.permute.xlu0 %1794
      %1796 = vrot.lane.b32.xlu0 %v1685, 16
      %v1797 = vpop.permute.xlu0 %1796
      %1798 = vrot.lane.b32.xlu0 %v1697, 16
      %v1799 = vpop.permute.xlu0 %1798
      %1800 = vrot.lane.b32.xlu0 %v1709, 16
      %v1801 = vpop.permute.xlu0 %1800
      %1802 = vrot.lane.b32.xlu0 %v1721, 16
      %v1803 = vpop.permute.xlu0 %1802
      %1804 = vrot.lane.b32.xlu0 %v1733, 16
      %v1805 = vpop.permute.xlu0 %1804
      %1806 = vrot.lane.b32.xlu0 %v1745, 16
      %v1807 = vpop.permute.xlu0 %1806
      %1808 = vrot.lane.b32.xlu0 %v1757, 16
      %v1809 = vpop.permute.xlu0 %1808
      %1810 = vrot.lane.b32.xlu0 %v1769, 16
      %v1811 = vpop.permute.xlu0 %1810
      %1812 = vrot.lane.b32.xlu0 %v1781, 16
      %v1813 = vpop.permute.xlu0 %1812
      %v1830 = vunpack.c.l.b16 %v867
      %v1831 = vunpack.c.l.b16 %v868
      %v1832 = vunpack.c.l.b16 %v869
      %v1833 = vunpack.c.l.b16 %v870
      %v1834 = vunpack.c.l.b16 %v871
      %v1835 = vunpack.c.l.b16 %v872
      %v1836 = vunpack.c.l.b16 %v873
      %v1837 = vunpack.c.l.b16 %v874
      %v1838 = vunpack.c.l.b16 %v875
      %v1839 = vunpack.c.l.b16 %v876
      %v1840 = vunpack.c.l.b16 %v877
      %v1841 = vunpack.c.l.b16 %v878
      %v1842 = vunpack.c.l.b16 %v879
      %v1843 = vunpack.c.l.b16 %v880
      %v1844 = vunpack.c.l.b16 %v881
      %v1845 = vunpack.c.l.b16 %v882
      %v1846 = vpack.c.b16 %v1463, %v1830
      %v1847 = vpack.c.b16 %v1465, %v1831
      %v1848 = vpack.c.b16 %v1467, %v1832
      %v1849 = vpack.c.b16 %v1469, %v1833
      %v1850 = vpack.c.b16 %v1471, %v1834
      %v1851 = vpack.c.b16 %v1473, %v1835
      %v1852 = vpack.c.b16 %v1475, %v1836
      %v1853 = vpack.c.b16 %v1477, %v1837
      %v1854 = vpack.c.b16 %v1479, %v1838
      %v1855 = vpack.c.b16 %v1481, %v1839
      %v1856 = vpack.c.b16 %v1483, %v1840
      %v1857 = vpack.c.b16 %v1485, %v1841
      %v1858 = vpack.c.b16 %v1487, %v1842
      %v1859 = vpack.c.b16 %v1489, %v1843
      %v1860 = vpack.c.b16 %v1491, %v1844
      %v1861 = vpack.c.b16 %v1493, %v1845
      %v1862 = vrot.slane %v1846, 1
      %v1863 = vrot.slane %v1574, 1
      %v1864 = vsel %vm1349, %v1862, %v1863
      %v1865 = vrot.slane %v1847, 1
      %v1866 = vrot.slane %v1575, 1
      %v1867 = vsel %vm1349, %v1865, %v1866
      %v1868 = vrot.slane %v1848, 1
      %v1869 = vrot.slane %v1576, 1
      %v1870 = vsel %vm1349, %v1868, %v1869
      %v1871 = vrot.slane %v1849, 1
      %v1872 = vrot.slane %v1577, 1
      %v1873 = vsel %vm1349, %v1871, %v1872
      %v1874 = vrot.slane %v1850, 1
      %v1875 = vrot.slane %v1578, 1
      %v1876 = vsel %vm1349, %v1874, %v1875
      %v1877 = vrot.slane %v1851, 1
      %v1878 = vrot.slane %v1579, 1
      %v1879 = vsel %vm1349, %v1877, %v1878
      %v1880 = vrot.slane %v1852, 1
      %v1881 = vrot.slane %v1580, 1
      %v1882 = vsel %vm1349, %v1880, %v1881
      %v1883 = vrot.slane %v1853, 1
      %v1884 = vrot.slane %v1581, 1
      %v1885 = vsel %vm1349, %v1883, %v1884
      %v1886 = vrot.slane %v1854, 1
      %v1887 = vrot.slane %v1582, 1
      %v1888 = vsel %vm1349, %v1886, %v1887
      %v1889 = vrot.slane %v1855, 1
      %v1890 = vrot.slane %v1583, 1
      %v1891 = vsel %vm1349, %v1889, %v1890
      %v1892 = vrot.slane %v1856, 1
      %v1893 = vrot.slane %v1584, 1
      %v1894 = vsel %vm1349, %v1892, %v1893
      %v1895 = vrot.slane %v1857, 1
      %v1896 = vrot.slane %v1585, 1
      %v1897 = vsel %vm1349, %v1895, %v1896
      %v1898 = vrot.slane %v1858, 1
      %v1899 = vrot.slane %v1586, 1
      %v1900 = vsel %vm1349, %v1898, %v1899
      %v1901 = vrot.slane %v1859, 1
      %v1902 = vrot.slane %v1587, 1
      %v1903 = vsel %vm1349, %v1901, %v1902
      %v1904 = vrot.slane %v1860, 1
      %v1905 = vrot.slane %v1588, 1
      %v1906 = vsel %vm1349, %v1904, %v1905
      %v1907 = vrot.slane %v1861, 1
      %v1908 = vrot.slane %v1589, 1
      %v1909 = vsel %vm1349, %v1907, %v1908
      %1910 = vrot.lane.b32.xlu0 %v1864, 20
      %v1911 = vpop.permute.xlu0 %1910
      %1912 = vrot.lane.b32.xlu0 %v1867, 20
      %v1913 = vpop.permute.xlu0 %1912
      %1914 = vrot.lane.b32.xlu0 %v1870, 20
      %v1915 = vpop.permute.xlu0 %1914
      %1916 = vrot.lane.b32.xlu0 %v1873, 20
      %v1917 = vpop.permute.xlu0 %1916
      %1918 = vrot.lane.b32.xlu0 %v1876, 20
      %v1919 = vpop.permute.xlu0 %1918
      %1920 = vrot.lane.b32.xlu0 %v1879, 20
      %v1921 = vpop.permute.xlu0 %1920
      %1922 = vrot.lane.b32.xlu0 %v1882, 20
      %v1923 = vpop.permute.xlu0 %1922
      %1924 = vrot.lane.b32.xlu0 %v1885, 20
      %v1925 = vpop.permute.xlu0 %1924
      %1926 = vrot.lane.b32.xlu0 %v1888, 20
      %v1927 = vpop.permute.xlu0 %1926
      %1928 = vrot.lane.b32.xlu0 %v1891, 20
      %v1929 = vpop.permute.xlu0 %1928
      %1930 = vrot.lane.b32.xlu0 %v1894, 20
      %v1931 = vpop.permute.xlu0 %1930
      %1932 = vrot.lane.b32.xlu0 %v1897, 20
      %v1933 = vpop.permute.xlu0 %1932
      %1934 = vrot.lane.b32.xlu0 %v1900, 20
      %v1935 = vpop.permute.xlu0 %1934
      %1936 = vrot.lane.b32.xlu0 %v1903, 20
      %v1937 = vpop.permute.xlu0 %1936
      %1938 = vrot.lane.b32.xlu0 %v1906, 20
      %v1939 = vpop.permute.xlu0 %1938
      %1940 = vrot.lane.b32.xlu0 %v1909, 20
      %v1941 = vpop.permute.xlu0 %1940
      %v1974 = vunpack.c.l.b16 %v884
      %v1975 = vunpack.c.l.b16 %v885
      %v1976 = vunpack.c.l.b16 %v886
      %v1977 = vunpack.c.l.b16 %v887
      %v1978 = vunpack.c.l.b16 %v888
      %v1979 = vunpack.c.l.b16 %v889
      %v1980 = vunpack.c.l.b16 %v890
      %v1981 = vunpack.c.l.b16 %v891
      %v1982 = vunpack.c.l.b16 %v892
      %v1983 = vunpack.c.l.b16 %v893
      %v1984 = vunpack.c.l.b16 %v894
      %v1985 = vunpack.c.l.b16 %v895
      %v1986 = vunpack.c.l.b16 %v896
      %v1987 = vunpack.c.l.b16 %v897
      %v1988 = vunpack.c.l.b16 %v898
      %v1989 = vunpack.c.l.b16 %v899
      %v1990 = vunpack.c.l.b16 %v900
      %v1991 = vunpack.c.l.b16 %v901
      %v1992 = vunpack.c.l.b16 %v902
      %v1993 = vunpack.c.l.b16 %v903
      %v1994 = vunpack.c.l.b16 %v904
      %v1995 = vunpack.c.l.b16 %v905
      %v1996 = vunpack.c.l.b16 %v906
      %v1997 = vunpack.c.l.b16 %v907
      %v1998 = vunpack.c.l.b16 %v908
      %v1999 = vunpack.c.l.b16 %v909
      %v2000 = vunpack.c.l.b16 %v910
      %v2001 = vunpack.c.l.b16 %v911
      %v2002 = vunpack.c.l.b16 %v912
      %v2003 = vunpack.c.l.b16 %v913
      %v2004 = vunpack.c.l.b16 %v914
      %v2005 = vunpack.c.l.b16 %v915
      %v2006 = vpack.c.b16 %v1975, %v1974
      %v2007 = vpack.c.b16 %v1977, %v1976
      %v2008 = vpack.c.b16 %v1979, %v1978
      %v2009 = vpack.c.b16 %v1981, %v1980
      %v2010 = vpack.c.b16 %v1983, %v1982
      %v2011 = vpack.c.b16 %v1985, %v1984
      %v2012 = vpack.c.b16 %v1987, %v1986
      %v2013 = vpack.c.b16 %v1989, %v1988
      %v2014 = vpack.c.b16 %v1991, %v1990
      %v2015 = vpack.c.b16 %v1993, %v1992
      %v2016 = vpack.c.b16 %v1995, %v1994
      %v2017 = vpack.c.b16 %v1997, %v1996
      %v2018 = vpack.c.b16 %v1999, %v1998
      %v2019 = vpack.c.b16 %v2001, %v2000
      %v2020 = vpack.c.b16 %v2003, %v2002
      %v2021 = vpack.c.b16 %v2005, %v2004
      %2022 = vrot.lane.b32.xlu0 %v2006, 24
      %v2023 = vpop.permute.xlu0 %2022
      %2024 = vrot.lane.b32.xlu0 %v2007, 24
      %v2025 = vpop.permute.xlu0 %2024
      %2026 = vrot.lane.b32.xlu0 %v2008, 24
      %v2027 = vpop.permute.xlu0 %2026
      %2028 = vrot.lane.b32.xlu0 %v2009, 24
      %v2029 = vpop.permute.xlu0 %2028
      %2030 = vrot.lane.b32.xlu0 %v2010, 24
      %v2031 = vpop.permute.xlu0 %2030
      %2032 = vrot.lane.b32.xlu0 %v2011, 24
      %v2033 = vpop.permute.xlu0 %2032
      %2034 = vrot.lane.b32.xlu0 %v2012, 24
      %v2035 = vpop.permute.xlu0 %2034
      %2036 = vrot.lane.b32.xlu0 %v2013, 24
      %v2037 = vpop.permute.xlu0 %2036
      %2038 = vrot.lane.b32.xlu0 %v2014, 24
      %v2039 = vpop.permute.xlu0 %2038
      %2040 = vrot.lane.b32.xlu0 %v2015, 24
      %v2041 = vpop.permute.xlu0 %2040
      %2042 = vrot.lane.b32.xlu0 %v2016, 24
      %v2043 = vpop.permute.xlu0 %2042
      %2044 = vrot.lane.b32.xlu0 %v2017, 24
      %v2045 = vpop.permute.xlu0 %2044
      %2046 = vrot.lane.b32.xlu0 %v2018, 24
      %v2047 = vpop.permute.xlu0 %2046
      %2048 = vrot.lane.b32.xlu0 %v2019, 24
      %v2049 = vpop.permute.xlu0 %2048
      %2050 = vrot.lane.b32.xlu0 %v2020, 24
      %v2051 = vpop.permute.xlu0 %2050
      %2052 = vrot.lane.b32.xlu0 %v2021, 24
      %v2053 = vpop.permute.xlu0 %2052
      %v2070 = vunpack.c.l.b16 %v916
      %v2071 = vunpack.c.l.b16 %v917
      %v2072 = vunpack.c.l.b16 %v918
      %v2073 = vunpack.c.l.b16 %v919
      %v2074 = vunpack.c.l.b16 %v920
      %v2075 = vunpack.c.l.b16 %v921
      %v2076 = vunpack.c.l.b16 %v922
      %v2077 = vunpack.c.l.b16 %v923
      %v2078 = vunpack.c.l.b16 %v924
      %v2079 = vunpack.c.l.b16 %v925
      %v2080 = vunpack.c.l.b16 %v926
      %v2081 = vunpack.c.l.b16 %v927
      %v2082 = vunpack.c.l.b16 %v928
      %v2083 = vunpack.c.l.b16 %v929
      %v2084 = vunpack.c.l.b16 %v930
      %v2085 = vunpack.c.l.b16 %v931
      %v2086 = vpack.c.b16 %v2070, %v2070
      %v2087 = vpack.c.b16 %v2071, %v2071
      %v2088 = vpack.c.b16 %v2072, %v2072
      %v2089 = vpack.c.b16 %v2073, %v2073
      %v2090 = vpack.c.b16 %v2074, %v2074
      %v2091 = vpack.c.b16 %v2075, %v2075
      %v2092 = vpack.c.b16 %v2076, %v2076
      %v2093 = vpack.c.b16 %v2077, %v2077
      %v2094 = vpack.c.b16 %v2078, %v2078
      %v2095 = vpack.c.b16 %v2079, %v2079
      %v2096 = vpack.c.b16 %v2080, %v2080
      %v2097 = vpack.c.b16 %v2081, %v2081
      %v2098 = vpack.c.b16 %v2082, %v2082
      %v2099 = vpack.c.b16 %v2083, %v2083
      %v2100 = vpack.c.b16 %v2084, %v2084
      %v2101 = vpack.c.b16 %v2085, %v2085
      %v2103 = vshrl.u32 %v2006, 16
      %v2105 = vshll.u32 %v2006, 16
      %v2107 = vrot.slane %v2105, 1
      %v2108 = vor.u32 %v2103, %v2107
      %v2110 = vshll.u32 %v2086, 16
      %v2112 = vrot.slane %v2110, 1
      %v2113 = vsel %vm1076, %v2108, %v2112
      %v2115 = vshrl.u32 %v2007, 16
      %v2117 = vshll.u32 %v2007, 16
      %v2119 = vrot.slane %v2117, 1
      %v2120 = vor.u32 %v2115, %v2119
      %v2122 = vshll.u32 %v2087, 16
      %v2124 = vrot.slane %v2122, 1
      %v2125 = vsel %vm1076, %v2120, %v2124
      %v2127 = vshrl.u32 %v2008, 16
      %v2129 = vshll.u32 %v2008, 16
      %v2131 = vrot.slane %v2129, 1
      %v2132 = vor.u32 %v2127, %v2131
      %v2134 = vshll.u32 %v2088, 16
      %v2136 = vrot.slane %v2134, 1
      %v2137 = vsel %vm1076, %v2132, %v2136
      %v2139 = vshrl.u32 %v2009, 16
      %v2141 = vshll.u32 %v2009, 16
      %v2143 = vrot.slane %v2141, 1
      %v2144 = vor.u32 %v2139, %v2143
      %v2146 = vshll.u32 %v2089, 16
      %v2148 = vrot.slane %v2146, 1
      %v2149 = vsel %vm1076, %v2144, %v2148
      %v2151 = vshrl.u32 %v2010, 16
      %v2153 = vshll.u32 %v2010, 16
      %v2155 = vrot.slane %v2153, 1
      %v2156 = vor.u32 %v2151, %v2155
      %v2158 = vshll.u32 %v2090, 16
      %v2160 = vrot.slane %v2158, 1
      %v2161 = vsel %vm1076, %v2156, %v2160
      %v2163 = vshrl.u32 %v2011, 16
      %v2165 = vshll.u32 %v2011, 16
      %v2167 = vrot.slane %v2165, 1
      %v2168 = vor.u32 %v2163, %v2167
      %v2170 = vshll.u32 %v2091, 16
      %v2172 = vrot.slane %v2170, 1
      %v2173 = vsel %vm1076, %v2168, %v2172
      %v2175 = vshrl.u32 %v2012, 16
      %v2177 = vshll.u32 %v2012, 16
      %v2179 = vrot.slane %v2177, 1
      %v2180 = vor.u32 %v2175, %v2179
      %v2182 = vshll.u32 %v2092, 16
      %v2184 = vrot.slane %v2182, 1
      %v2185 = vsel %vm1076, %v2180, %v2184
      %v2187 = vshrl.u32 %v2013, 16
      %v2189 = vshll.u32 %v2013, 16
      %v2191 = vrot.slane %v2189, 1
      %v2192 = vor.u32 %v2187, %v2191
      %v2194 = vshll.u32 %v2093, 16
      %v2196 = vrot.slane %v2194, 1
      %v2197 = vsel %vm1076, %v2192, %v2196
      %v2199 = vshrl.u32 %v2014, 16
      %v2201 = vshll.u32 %v2014, 16
      %v2203 = vrot.slane %v2201, 1
      %v2204 = vor.u32 %v2199, %v2203
      %v2206 = vshll.u32 %v2094, 16
      %v2208 = vrot.slane %v2206, 1
      %v2209 = vsel %vm1076, %v2204, %v2208
      %v2211 = vshrl.u32 %v2015, 16
      %v2213 = vshll.u32 %v2015, 16
      %v2215 = vrot.slane %v2213, 1
      %v2216 = vor.u32 %v2211, %v2215
      %v2218 = vshll.u32 %v2095, 16
      %v2220 = vrot.slane %v2218, 1
      %v2221 = vsel %vm1076, %v2216, %v2220
      %v2223 = vshrl.u32 %v2016, 16
      %v2225 = vshll.u32 %v2016, 16
      %v2227 = vrot.slane %v2225, 1
      %v2228 = vor.u32 %v2223, %v2227
      %v2230 = vshll.u32 %v2096, 16
      %v2232 = vrot.slane %v2230, 1
      %v2233 = vsel %vm1076, %v2228, %v2232
      %v2235 = vshrl.u32 %v2017, 16
      %v2237 = vshll.u32 %v2017, 16
      %v2239 = vrot.slane %v2237, 1
      %v2240 = vor.u32 %v2235, %v2239
      %v2242 = vshll.u32 %v2097, 16
      %v2244 = vrot.slane %v2242, 1
      %v2245 = vsel %vm1076, %v2240, %v2244
      %v2247 = vshrl.u32 %v2018, 16
      %v2249 = vshll.u32 %v2018, 16
      %v2251 = vrot.slane %v2249, 1
      %v2252 = vor.u32 %v2247, %v2251
      %v2254 = vshll.u32 %v2098, 16
      %v2256 = vrot.slane %v2254, 1
      %v2257 = vsel %vm1076, %v2252, %v2256
      %v2259 = vshrl.u32 %v2019, 16
      %v2261 = vshll.u32 %v2019, 16
      %v2263 = vrot.slane %v2261, 1
      %v2264 = vor.u32 %v2259, %v2263
      %v2266 = vshll.u32 %v2099, 16
      %v2268 = vrot.slane %v2266, 1
      %v2269 = vsel %vm1076, %v2264, %v2268
      %v2271 = vshrl.u32 %v2020, 16
      %v2273 = vshll.u32 %v2020, 16
      %v2275 = vrot.slane %v2273, 1
      %v2276 = vor.u32 %v2271, %v2275
      %v2278 = vshll.u32 %v2100, 16
      %v2280 = vrot.slane %v2278, 1
      %v2281 = vsel %vm1076, %v2276, %v2280
      %v2283 = vshrl.u32 %v2021, 16
      %v2285 = vshll.u32 %v2021, 16
      %v2287 = vrot.slane %v2285, 1
      %v2288 = vor.u32 %v2283, %v2287
      %v2290 = vshll.u32 %v2101, 16
      %v2292 = vrot.slane %v2290, 1
      %v2293 = vsel %vm1076, %v2288, %v2292
      %2294 = vrot.lane.b32.xlu0 %v2113, 28
      %v2295 = vpop.permute.xlu0 %2294
      %2296 = vrot.lane.b32.xlu0 %v2125, 28
      %v2297 = vpop.permute.xlu0 %2296
      %2298 = vrot.lane.b32.xlu0 %v2137, 28
      %v2299 = vpop.permute.xlu0 %2298
      %2300 = vrot.lane.b32.xlu0 %v2149, 28
      %v2301 = vpop.permute.xlu0 %2300
      %2302 = vrot.lane.b32.xlu0 %v2161, 28
      %v2303 = vpop.permute.xlu0 %2302
      %2304 = vrot.lane.b32.xlu0 %v2173, 28
      %v2305 = vpop.permute.xlu0 %2304
      %2306 = vrot.lane.b32.xlu0 %v2185, 28
      %v2307 = vpop.permute.xlu0 %2306
      %2308 = vrot.lane.b32.xlu0 %v2197, 28
      %v2309 = vpop.permute.xlu0 %2308
      %2310 = vrot.lane.b32.xlu0 %v2209, 28
      %v2311 = vpop.permute.xlu0 %2310
      %2312 = vrot.lane.b32.xlu0 %v2221, 28
      %v2313 = vpop.permute.xlu0 %2312
      %2314 = vrot.lane.b32.xlu0 %v2233, 28
      %v2315 = vpop.permute.xlu0 %2314
      %2316 = vrot.lane.b32.xlu0 %v2245, 28
      %v2317 = vpop.permute.xlu0 %2316
      %2318 = vrot.lane.b32.xlu0 %v2257, 28
      %v2319 = vpop.permute.xlu0 %2318
      %2320 = vrot.lane.b32.xlu0 %v2269, 28
      %v2321 = vpop.permute.xlu0 %2320
      %2322 = vrot.lane.b32.xlu0 %v2281, 28
      %v2323 = vpop.permute.xlu0 %2322
      %2324 = vrot.lane.b32.xlu0 %v2293, 28
      %v2325 = vpop.permute.xlu0 %2324
      %v2342 = vunpack.c.l.b16 %v932
      %v2343 = vunpack.c.l.b16 %v933
      %v2344 = vunpack.c.l.b16 %v934
      %v2345 = vunpack.c.l.b16 %v935
      %v2346 = vunpack.c.l.b16 %v936
      %v2347 = vunpack.c.l.b16 %v937
      %v2348 = vunpack.c.l.b16 %v938
      %v2349 = vunpack.c.l.b16 %v939
      %v2350 = vunpack.c.l.b16 %v940
      %v2351 = vunpack.c.l.b16 %v941
      %v2352 = vunpack.c.l.b16 %v942
      %v2353 = vunpack.c.l.b16 %v943
      %v2354 = vunpack.c.l.b16 %v944
      %v2355 = vunpack.c.l.b16 %v945
      %v2356 = vunpack.c.l.b16 %v946
      %v2357 = vunpack.c.l.b16 %v947
      %v2358 = vpack.c.b16 %v1975, %v2342
      %v2359 = vpack.c.b16 %v1977, %v2343
      %v2360 = vpack.c.b16 %v1979, %v2344
      %v2361 = vpack.c.b16 %v1981, %v2345
      %v2362 = vpack.c.b16 %v1983, %v2346
      %v2363 = vpack.c.b16 %v1985, %v2347
      %v2364 = vpack.c.b16 %v1987, %v2348
      %v2365 = vpack.c.b16 %v1989, %v2349
      %v2366 = vpack.c.b16 %v1991, %v2350
      %v2367 = vpack.c.b16 %v1993, %v2351
      %v2368 = vpack.c.b16 %v1995, %v2352
      %v2369 = vpack.c.b16 %v1997, %v2353
      %v2370 = vpack.c.b16 %v1999, %v2354
      %v2371 = vpack.c.b16 %v2001, %v2355
      %v2372 = vpack.c.b16 %v2003, %v2356
      %v2373 = vpack.c.b16 %v2005, %v2357
      %v2374 = vrot.slane %v2358, 1
      %v2375 = vrot.slane %v2086, 1
      %v2376 = vsel %vm1349, %v2374, %v2375
      %v2377 = vrot.slane %v2359, 1
      %v2378 = vrot.slane %v2087, 1
      %v2379 = vsel %vm1349, %v2377, %v2378
      %v2380 = vrot.slane %v2360, 1
      %v2381 = vrot.slane %v2088, 1
      %v2382 = vsel %vm1349, %v2380, %v2381
      %v2383 = vrot.slane %v2361, 1
      %v2384 = vrot.slane %v2089, 1
      %v2385 = vsel %vm1349, %v2383, %v2384
      %v2386 = vrot.slane %v2362, 1
      %v2387 = vrot.slane %v2090, 1
      %v2388 = vsel %vm1349, %v2386, %v2387
      %v2389 = vrot.slane %v2363, 1
      %v2390 = vrot.slane %v2091, 1
      %v2391 = vsel %vm1349, %v2389, %v2390
      %v2392 = vrot.slane %v2364, 1
      %v2393 = vrot.slane %v2092, 1
      %v2394 = vsel %vm1349, %v2392, %v2393
      %v2395 = vrot.slane %v2365, 1
      %v2396 = vrot.slane %v2093, 1
      %v2397 = vsel %vm1349, %v2395, %v2396
      %v2398 = vrot.slane %v2366, 1
      %v2399 = vrot.slane %v2094, 1
      %v2400 = vsel %vm1349, %v2398, %v2399
      %v2401 = vrot.slane %v2367, 1
      %v2402 = vrot.slane %v2095, 1
      %v2403 = vsel %vm1349, %v2401, %v2402
      %v2404 = vrot.slane %v2368, 1
      %v2405 = vrot.slane %v2096, 1
      %v2406 = vsel %vm1349, %v2404, %v2405
      %v2407 = vrot.slane %v2369, 1
      %v2408 = vrot.slane %v2097, 1
      %v2409 = vsel %vm1349, %v2407, %v2408
      %v2410 = vrot.slane %v2370, 1
      %v2411 = vrot.slane %v2098, 1
      %v2412 = vsel %vm1349, %v2410, %v2411
      %v2413 = vrot.slane %v2371, 1
      %v2414 = vrot.slane %v2099, 1
      %v2415 = vsel %vm1349, %v2413, %v2414
      %v2416 = vrot.slane %v2372, 1
      %v2417 = vrot.slane %v2100, 1
      %v2418 = vsel %vm1349, %v2416, %v2417
      %v2419 = vrot.slane %v2373, 1
      %v2420 = vrot.slane %v2101, 1
      %v2421 = vsel %vm1349, %v2419, %v2420
      %2422 = vrot.lane.b32.xlu0 %v2376, 32
      %v2423 = vpop.permute.xlu0 %2422
      %2424 = vrot.lane.b32.xlu0 %v2379, 32
      %v2425 = vpop.permute.xlu0 %2424
      %2426 = vrot.lane.b32.xlu0 %v2382, 32
      %v2427 = vpop.permute.xlu0 %2426
      %2428 = vrot.lane.b32.xlu0 %v2385, 32
      %v2429 = vpop.permute.xlu0 %2428
      %2430 = vrot.lane.b32.xlu0 %v2388, 32
      %v2431 = vpop.permute.xlu0 %2430
      %2432 = vrot.lane.b32.xlu0 %v2391, 32
      %v2433 = vpop.permute.xlu0 %2432
      %2434 = vrot.lane.b32.xlu0 %v2394, 32
      %v2435 = vpop.permute.xlu0 %2434
      %2436 = vrot.lane.b32.xlu0 %v2397, 32
      %v2437 = vpop.permute.xlu0 %2436
      %2438 = vrot.lane.b32.xlu0 %v2400, 32
      %v2439 = vpop.permute.xlu0 %2438
      %2440 = vrot.lane.b32.xlu0 %v2403, 32
      %v2441 = vpop.permute.xlu0 %2440
      %2442 = vrot.lane.b32.xlu0 %v2406, 32
      %v2443 = vpop.permute.xlu0 %2442
      %2444 = vrot.lane.b32.xlu0 %v2409, 32
      %v2445 = vpop.permute.xlu0 %2444
      %2446 = vrot.lane.b32.xlu0 %v2412, 32
      %v2447 = vpop.permute.xlu0 %2446
      %2448 = vrot.lane.b32.xlu0 %v2415, 32
      %v2449 = vpop.permute.xlu0 %2448
      %2450 = vrot.lane.b32.xlu0 %v2418, 32
      %v2451 = vpop.permute.xlu0 %2450
      %2452 = vrot.lane.b32.xlu0 %v2421, 32
      %v2453 = vpop.permute.xlu0 %2452
      %vm2454 = vcmask 31744
      %v2456 = vsel %vm2454, %v1012, %v1270
      %v2458 = vsel %vm2454, %v1013, %v1272
      %v2460 = vsel %vm2454, %v1014, %v1274
      %v2462 = vsel %vm2454, %v1015, %v1276
      %v2464 = vsel %vm2454, %v1016, %v1278
      %v2466 = vsel %vm2454, %v1017, %v1280
      %v2468 = vsel %vm2454, %v1018, %v1282
      %v2470 = vsel %vm2454, %v1019, %v1284
      %v2472 = vsel %vm2454, %v1020, %v1286
      %v2474 = vsel %vm2454, %v1021, %v1288
      %v2476 = vsel %vm2454, %v1022, %v1290
      %v2478 = vsel %vm2454, %v1023, %v1292
      %v2480 = vsel %vm2454, %v1024, %v1294
      %v2482 = vsel %vm2454, %v1025, %v1296
      %v2484 = vsel %vm2454, %v1026, %v1298
      %v2486 = vsel %vm2454, %v1027, %v1300
      %vm2487 = vcmask 64512
      %v2489 = vsel %vm2487, %v2456, %v1399
      %v2491 = vsel %vm2487, %v2458, %v1401
      %v2493 = vsel %vm2487, %v2460, %v1403
      %v2495 = vsel %vm2487, %v2462, %v1405
      %v2497 = vsel %vm2487, %v2464, %v1407
      %v2499 = vsel %vm2487, %v2466, %v1409
      %v2501 = vsel %vm2487, %v2468, %v1411
      %v2503 = vsel %vm2487, %v2470, %v1413
      %v2505 = vsel %vm2487, %v2472, %v1415
      %v2507 = vsel %vm2487, %v2474, %v1417
      %v2509 = vsel %vm2487, %v2476, %v1419
      %v2511 = vsel %vm2487, %v2478, %v1421
      %v2513 = vsel %vm2487, %v2480, %v1423
      %v2515 = vsel %vm2487, %v2482, %v1425
      %v2517 = vsel %vm2487, %v2484, %v1427
      %v2519 = vsel %vm2487, %v2486, %v1429
      %vm2520 = vcmask 97280
      %v2522 = vsel %vm2520, %v2489, %v1511
      %v2524 = vsel %vm2520, %v2491, %v1513
      %v2526 = vsel %vm2520, %v2493, %v1515
      %v2528 = vsel %vm2520, %v2495, %v1517
      %v2530 = vsel %vm2520, %v2497, %v1519
      %v2532 = vsel %vm2520, %v2499, %v1521
      %v2534 = vsel %vm2520, %v2501, %v1523
      %v2536 = vsel %vm2520, %v2503, %v1525
      %v2538 = vsel %vm2520, %v2505, %v1527
      %v2540 = vsel %vm2520, %v2507, %v1529
      %v2542 = vsel %vm2520, %v2509, %v1531
      %v2544 = vsel %vm2520, %v2511, %v1533
      %v2546 = vsel %vm2520, %v2513, %v1535
      %v2548 = vsel %vm2520, %v2515, %v1537
      %v2550 = vsel %vm2520, %v2517, %v1539
      %v2552 = vsel %vm2520, %v2519, %v1541
      %vm2553 = vcmask 130048
      %v2555 = vsel %vm2553, %v2522, %v1783
      %v2557 = vsel %vm2553, %v2524, %v1785
      %v2559 = vsel %vm2553, %v2526, %v1787
      %v2561 = vsel %vm2553, %v2528, %v1789
      %v2563 = vsel %vm2553, %v2530, %v1791
      %v2565 = vsel %vm2553, %v2532, %v1793
      %v2567 = vsel %vm2553, %v2534, %v1795
      %v2569 = vsel %vm2553, %v2536, %v1797
      %v2571 = vsel %vm2553, %v2538, %v1799
      %v2573 = vsel %vm2553, %v2540, %v1801
      %v2575 = vsel %vm2553, %v2542, %v1803
      %v2577 = vsel %vm2553, %v2544, %v1805
      %v2579 = vsel %vm2553, %v2546, %v1807
      %v2581 = vsel %vm2553, %v2548, %v1809
      %v2583 = vsel %vm2553, %v2550, %v1811
      %v2585 = vsel %vm2553, %v2552, %v1813
      %vm2586 = vcmask 162816
      %v2588 = vsel %vm2586, %v2555, %v1911
      %v2590 = vsel %vm2586, %v2557, %v1913
      %v2592 = vsel %vm2586, %v2559, %v1915
      %v2594 = vsel %vm2586, %v2561, %v1917
      %v2596 = vsel %vm2586, %v2563, %v1919
      %v2598 = vsel %vm2586, %v2565, %v1921
      %v2600 = vsel %vm2586, %v2567, %v1923
      %v2602 = vsel %vm2586, %v2569, %v1925
      %v2604 = vsel %vm2586, %v2571, %v1927
      %v2606 = vsel %vm2586, %v2573, %v1929
      %v2608 = vsel %vm2586, %v2575, %v1931
      %v2610 = vsel %vm2586, %v2577, %v1933
      %v2612 = vsel %vm2586, %v2579, %v1935
      %v2614 = vsel %vm2586, %v2581, %v1937
      %v2616 = vsel %vm2586, %v2583, %v1939
      %v2618 = vsel %vm2586, %v2585, %v1941
      %vm2619 = vcmask 195584
      %v2621 = vsel %vm2619, %v2588, %v2023
      %v2623 = vsel %vm2619, %v2590, %v2025
      %v2625 = vsel %vm2619, %v2592, %v2027
      %v2627 = vsel %vm2619, %v2594, %v2029
      %v2629 = vsel %vm2619, %v2596, %v2031
      %v2631 = vsel %vm2619, %v2598, %v2033
      %v2633 = vsel %vm2619, %v2600, %v2035
      %v2635 = vsel %vm2619, %v2602, %v2037
      %v2637 = vsel %vm2619, %v2604, %v2039
      %v2639 = vsel %vm2619, %v2606, %v2041
      %v2641 = vsel %vm2619, %v2608, %v2043
      %v2643 = vsel %vm2619, %v2610, %v2045
      %v2645 = vsel %vm2619, %v2612, %v2047
      %v2647 = vsel %vm2619, %v2614, %v2049
      %v2649 = vsel %vm2619, %v2616, %v2051
      %v2651 = vsel %vm2619, %v2618, %v2053
      %vm2652 = vcmask 228352
      %v2654 = vsel %vm2652, %v2621, %v2295
      %v2656 = vsel %vm2652, %v2623, %v2297
      %v2658 = vsel %vm2652, %v2625, %v2299
      %v2660 = vsel %vm2652, %v2627, %v2301
      %v2662 = vsel %vm2652, %v2629, %v2303
      %v2664 = vsel %vm2652, %v2631, %v2305
      %v2666 = vsel %vm2652, %v2633, %v2307
      %v2668 = vsel %vm2652, %v2635, %v2309
      %v2670 = vsel %vm2652, %v2637, %v2311
      %v2672 = vsel %vm2652, %v2639, %v2313
      %v2674 = vsel %vm2652, %v2641, %v2315
      %v2676 = vsel %vm2652, %v2643, %v2317
      %v2678 = vsel %vm2652, %v2645, %v2319
      %v2680 = vsel %vm2652, %v2647, %v2321
      %v2682 = vsel %vm2652, %v2649, %v2323
      %v2684 = vsel %vm2652, %v2651, %v2325
      %vm2685 = vcmask 261120
      %v2687 = vsel %vm2685, %v2654, %v2423
      %v2689 = vsel %vm2685, %v2656, %v2425
      %v2691 = vsel %vm2685, %v2658, %v2427
      %v2693 = vsel %vm2685, %v2660, %v2429
      %v2695 = vsel %vm2685, %v2662, %v2431
      %v2697 = vsel %vm2685, %v2664, %v2433
      %v2699 = vsel %vm2685, %v2666, %v2435
      %v2701 = vsel %vm2685, %v2668, %v2437
      %v2703 = vsel %vm2685, %v2670, %v2439
      %v2705 = vsel %vm2685, %v2672, %v2441
      %v2707 = vsel %vm2685, %v2674, %v2443
      %v2709 = vsel %vm2685, %v2676, %v2445
      %v2711 = vsel %vm2685, %v2678, %v2447
      %v2713 = vsel %vm2685, %v2680, %v2449
      %v2715 = vsel %vm2685, %v2682, %v2451
      %v2717 = vsel %vm2685, %v2684, %v2453
      %v2718 = vld [vmem:[%s1] sm:$0xf]
      %v2719 = vld [vmem:[%s1 + $0x4] sm:$0xf]
      %v2720 = vld [vmem:[%s1 + $0x8] sm:$0xf]
      %v2721 = vld [vmem:[%s1 + $0xc] sm:$0xf]
      %v2722 = vld [vmem:[%s1 + $0x10] sm:$0x3]
      %v2723 = vld [vmem:[%s2] sm:$0x1]
      %v2724 = vlaneseq
      %v2725 = vshrl.u32 %v2724, 7
      %v2726 = vsub.s32 0, %v2725
      %v2727 = vrot.slane %v2723, %v2726
      %v2733 = vunpack.c.l.b16 %v2718
      %v2734 = vunpack.c.l.b16 %v2719
      %v2735 = vunpack.c.l.b16 %v2720
      %v2736 = vunpack.c.l.b16 %v2721
      %v2737 = vunpack.c.l.b16 %v2722
      %v2738 = vpack.c.b16 %v2734, %v2733
      %v2739 = vpack.c.b16 %v2736, %v2735
      %v2740 = vpack.c.b16 %v2737, %v2737
      %vm2743 = vcmask 293888
      %v2744 = vsel %vm2743, %v2687, 0
      %v2746 = vsel %vm2743, %v2689, 0
      %v2748 = vsel %vm2743, %v2691, 0
      %v2750 = vsel %vm2743, %v2693, 0
      %v2752 = vsel %vm2743, %v2695, 0
      %v2754 = vsel %vm2743, %v2697, 0
      %v2756 = vsel %vm2743, %v2699, 0
      %v2758 = vsel %vm2743, %v2701, 0
      %v2760 = vsel %vm2743, %v2703, 0
      %v2762 = vsel %vm2743, %v2705, 0
      %v2764 = vsel %vm2743, %v2707, 0
      %v2766 = vsel %vm2743, %v2709, 0
      %v2768 = vsel %vm2743, %v2711, 0
      %v2770 = vsel %vm2743, %v2713, 0
      %v2772 = vsel %vm2743, %v2715, 0
      %v2774 = vsel %vm2743, %v2717, 0
      %vm2776 = vcmask 1041408
      %v2778 = vsel %vm2776, %v2740, 0
      %2780 = vmatprep.subr.bf16.mxu0 0
      %2781 = vmatpush1.bf16.msra.mxu0 %v2738
      %2782 = vmatprep.subr.bf16.mxu0 0
      %2783 = vmatpush1.bf16.msra.mxu0 %v2739
      %2784 = vmatprep.subr.bf16.mxu0 0
      %2785 = vmatpush1.bf16.msra.mxu0 %v2778
      %2786 = vmatprep.subr.bf16.mxu0 0
      %2787 = vmatpush1.bf16.msra.mxu0 0
      %2788 = vmatprep.subr.bf16.mxu0 0
      %2789 = vmatpush1.bf16.msra.mxu0 0
      %2790 = vmatprep.subr.bf16.mxu0 0
      %2791 = vmatpush1.bf16.msra.mxu0 0
      %2792 = vmatprep.subr.bf16.mxu0 0
      %2793 = vmatpush1.bf16.msra.mxu0 0
      %2794 = vmatprep.subr.bf16.mxu0 0
      %2795 = vmatpush1.bf16.msra.mxu0 0
      %2796 = vmatprep.subr.bf16.mxu0 0
      %2797 = vmatpush1.bf16.msra.mxu0 0
      %2798 = vmatprep.subr.bf16.mxu0 0
      %2799 = vmatpush1.bf16.msra.mxu0 0
      %2800 = vmatprep.subr.bf16.mxu0 0
      %2801 = vmatpush1.bf16.msra.mxu0 0
      %2802 = vmatprep.subr.bf16.mxu0 0
      %2803 = vmatpush1.bf16.msra.mxu0 0
      %2804 = vmatprep.subr.bf16.mxu0 0
      %2805 = vmatpush1.bf16.msra.mxu0 0
      %2806 = vmatprep.subr.bf16.mxu0 0
      %2807 = vmatpush1.bf16.msra.mxu0 0
      %2808 = vmatprep.subr.bf16.mxu0 0
      %2809 = vmatpush1.bf16.msra.mxu0 0
      %2810 = vmatprep.subr.bf16.mxu0 0
      %2811 = vmatpush1.bf16.msra.mxu0 0
      %2812 = vmatprep.mubr.bf16.mxu0 0
      %2813 = vmatmul.mubr.bf16.gmra.mrb[0].mxu0 %v2744
      %v2814 = vpop.f32.mrb[0].mxu0
      %v2815 = vadd.f32 %v2727, %v2814
      %v2816 = vpop.f32.mrb[0].mxu0
      %v2817 = vpop.f32.mrb[0].mxu0
      %v2818 = vadd.f32 %v2727, %v2817
      %v2819 = vpop.f32.mrb[0].mxu0
      %2820 = vmatprep.mubr.bf16.mxu0 0
      %2821 = vmatmul.mubr.bf16.gmra.mrb[0].mxu0 %v2746
      %v2822 = vpop.f32.mrb[0].mxu0
      %v2823 = vadd.f32 %v2727, %v2822
      %v2824 = vpop.f32.mrb[0].mxu0
      %v2825 = vpop.f32.mrb[0].mxu0
      %v2826 = vadd.f32 %v2727, %v2825
      %v2827 = vpop.f32.mrb[0].mxu0
      %2828 = vmatprep.mubr.bf16.mxu0 0
      %2829 = vmatmul.mubr.bf16.gmra.mrb[0].mxu0 %v2748
      %v2830 = vpop.f32.mrb[0].mxu0
      %v2831 = vadd.f32 %v2727, %v2830
      %v2832 = vpop.f32.mrb[0].mxu0
      %v2833 = vpop.f32.mrb[0].mxu0
      %v2834 = vadd.f32 %v2727, %v2833
      %v2835 = vpop.f32.mrb[0].mxu0
      %2836 = vmatprep.mubr.bf16.mxu0 0
      %2837 = vmatmul.mubr.bf16.gmra.mrb[0].mxu0 %v2750
      %v2838 = vpop.f32.mrb[0].mxu0
      %v2839 = vadd.f32 %v2727, %v2838
      %v2840 = vpop.f32.mrb[0].mxu0
      %v2841 = vpop.f32.mrb[0].mxu0
      %v2842 = vadd.f32 %v2727, %v2841
      %v2843 = vpop.f32.mrb[0].mxu0
      %2844 = vmatprep.mubr.bf16.mxu0 0
      %2845 = vmatmul.mubr.bf16.gmra.mrb[0].mxu0 %v2752
      %v2846 = vpop.f32.mrb[0].mxu0
      %v2847 = vadd.f32 %v2727, %v2846
      %v2848 = vpop.f32.mrb[0].mxu0
      %v2849 = vpop.f32.mrb[0].mxu0
      %v2850 = vadd.f32 %v2727, %v2849
      %v2851 = vpop.f32.mrb[0].mxu0
      %2852 = vmatprep.mubr.bf16.mxu0 0
      %2853 = vmatmul.mubr.bf16.gmra.mrb[0].mxu0 %v2754
      %v2854 = vpop.f32.mrb[0].mxu0
      %v2855 = vadd.f32 %v2727, %v2854
      %v2856 = vpop.f32.mrb[0].mxu0
      %v2857 = vpop.f32.mrb[0].mxu0
      %v2858 = vadd.f32 %v2727, %v2857
      %v2859 = vpop.f32.mrb[0].mxu0
      %2860 = vmatprep.mubr.bf16.mxu0 0
      %2861 = vmatmul.mubr.bf16.gmra.mrb[0].mxu0 %v2756
      %v2862 = vpop.f32.mrb[0].mxu0
      %v2863 = vadd.f32 %v2727, %v2862
      %v2864 = vpop.f32.mrb[0].mxu0
      %v2865 = vpop.f32.mrb[0].mxu0
      %v2866 = vadd.f32 %v2727, %v2865
      %v2867 = vpop.f32.mrb[0].mxu0
      %2868 = vmatprep.mubr.bf16.mxu0 0
      %2869 = vmatmul.mubr.bf16.gmra.mrb[0].mxu0 %v2758
      %v2870 = vpop.f32.mrb[0].mxu0
      %v2871 = vadd.f32 %v2727, %v2870
      %v2872 = vpop.f32.mrb[0].mxu0
      %v2873 = vpop.f32.mrb[0].mxu0
      %v2874 = vadd.f32 %v2727, %v2873
      %v2875 = vpop.f32.mrb[0].mxu0
      %2876 = vmatprep.mubr.bf16.mxu0 0
      %2877 = vmatmul.mubr.bf16.gmra.mrb[0].mxu0 %v2760
      %v2878 = vpop.f32.mrb[0].mxu0
      %v2879 = vadd.f32 %v2727, %v2878
      %v2880 = vpop.f32.mrb[0].mxu0
      %v2881 = vpop.f32.mrb[0].mxu0
      %v2882 = vadd.f32 %v2727, %v2881
      %v2883 = vpop.f32.mrb[0].mxu0
      %2884 = vmatprep.mubr.bf16.mxu0 0
      %2885 = vmatmul.mubr.bf16.gmra.mrb[0].mxu0 %v2762
      %v2886 = vpop.f32.mrb[0].mxu0
      %v2887 = vadd.f32 %v2727, %v2886
      %v2888 = vpop.f32.mrb[0].mxu0
      %v2889 = vpop.f32.mrb[0].mxu0
      %v2890 = vadd.f32 %v2727, %v2889
      %v2891 = vpop.f32.mrb[0].mxu0
      %2892 = vmatprep.mubr.bf16.mxu0 0
      %2893 = vmatmul.mubr.bf16.gmra.mrb[0].mxu0 %v2764
      %v2894 = vpop.f32.mrb[0].mxu0
      %v2895 = vadd.f32 %v2727, %v2894
      %v2896 = vpop.f32.mrb[0].mxu0
      %v2897 = vpop.f32.mrb[0].mxu0
      %v2898 = vadd.f32 %v2727, %v2897
      %v2899 = vpop.f32.mrb[0].mxu0
      %2900 = vmatprep.mubr.bf16.mxu0 0
      %2901 = vmatmul.mubr.bf16.gmra.mrb[0].mxu0 %v2766
      %v2902 = vpop.f32.mrb[0].mxu0
      %v2903 = vadd.f32 %v2727, %v2902
      %v2904 = vpop.f32.mrb[0].mxu0
      %v2905 = vpop.f32.mrb[0].mxu0
      %v2906 = vadd.f32 %v2727, %v2905
      %v2907 = vpop.f32.mrb[0].mxu0
      %2908 = vmatprep.mubr.bf16.mxu0 0
      %2909 = vmatmul.mubr.bf16.gmra.mrb[0].mxu0 %v2768
      %v2910 = vpop.f32.mrb[0].mxu0
      %v2911 = vadd.f32 %v2727, %v2910
      %v2912 = vpop.f32.mrb[0].mxu0
      %v2913 = vpop.f32.mrb[0].mxu0
      %v2914 = vadd.f32 %v2727, %v2913
      %v2915 = vpop.f32.mrb[0].mxu0
      %2916 = vmatprep.mubr.bf16.mxu0 0
      %2917 = vmatmul.mubr.bf16.gmra.mrb[0].mxu0 %v2770
      %v2918 = vpop.f32.mrb[0].mxu0
      %v2919 = vadd.f32 %v2727, %v2918
      %v2920 = vpop.f32.mrb[0].mxu0
      %v2921 = vpop.f32.mrb[0].mxu0
      %v2922 = vadd.f32 %v2727, %v2921
      %v2923 = vpop.f32.mrb[0].mxu0
      %2924 = vmatprep.mubr.bf16.mxu0 0
      %2925 = vmatmul.mubr.bf16.gmra.mrb[0].mxu0 %v2772
      %v2926 = vpop.f32.mrb[0].mxu0
      %v2927 = vadd.f32 %v2727, %v2926
      %v2928 = vpop.f32.mrb[0].mxu0
      %v2929 = vpop.f32.mrb[0].mxu0
      %v2930 = vadd.f32 %v2727, %v2929
      %v2931 = vpop.f32.mrb[0].mxu0
      %2932 = vmatprep.mubr.bf16.mxu0 0
      %2933 = vmatmul.mubr.bf16.gmra.mrb[0].mxu0 %v2774
      %v2934 = vpop.f32.mrb[0].mxu0
      %v2935 = vadd.f32 %v2727, %v2934
      %v2936 = vpop.f32.mrb[0].mxu0
      %v2937 = vpop.f32.mrb[0].mxu0
      %v2938 = vadd.f32 %v2727, %v2937
      %v2939 = vpop.f32.mrb[0].mxu0
      %2940 = vdwg.mxu0
      %v2941 = vmax.f32 %v2815, 0.0
      %v2942 = vmax.f32 %v2818, 0.0
      %v2943 = vmax.f32 %v2823, 0.0
      %v2944 = vmax.f32 %v2826, 0.0
      %v2945 = vmax.f32 %v2831, 0.0
      %v2946 = vmax.f32 %v2834, 0.0
      %v2947 = vmax.f32 %v2839, 0.0
      %v2948 = vmax.f32 %v2842, 0.0
      %v2949 = vmax.f32 %v2847, 0.0
      %v2950 = vmax.f32 %v2850, 0.0
      %v2951 = vmax.f32 %v2855, 0.0
      %v2952 = vmax.f32 %v2858, 0.0
      %v2953 = vmax.f32 %v2863, 0.0
      %v2954 = vmax.f32 %v2866, 0.0
      %v2955 = vmax.f32 %v2871, 0.0
      %v2956 = vmax.f32 %v2874, 0.0
      %v2957 = vmax.f32 %v2879, 0.0
      %v2958 = vmax.f32 %v2882, 0.0
      %v2959 = vmax.f32 %v2887, 0.0
      %v2960 = vmax.f32 %v2890, 0.0
      %v2961 = vmax.f32 %v2895, 0.0
      %v2962 = vmax.f32 %v2898, 0.0
      %v2963 = vmax.f32 %v2903, 0.0
      %v2964 = vmax.f32 %v2906, 0.0
      %v2965 = vmax.f32 %v2911, 0.0
      %v2966 = vmax.f32 %v2914, 0.0
      %v2967 = vmax.f32 %v2919, 0.0
      %v2968 = vmax.f32 %v2922, 0.0
      %v2969 = vmax.f32 %v2927, 0.0
      %v2970 = vmax.f32 %v2930, 0.0
      %v2971 = vmax.f32 %v2935, 0.0
      %v2972 = vmax.f32 %v2938, 0.0
      %v2973 = vld [vmem:[%s2 + $0x1] sm:$0x1]
      %v2974 = vlaneseq
      %v2975 = vshrl.u32 %v2974, 7
      %v2976 = vsub.s32 0, %v2975
      %v2977 = vrot.slane %v2973, %v2976
      %v2978 = vmul.f32 %v2941, %v2977
      %v2979 = vmul.f32 %v2942, %v2977
      %v2980 = vmul.f32 %v2943, %v2977
      %v2981 = vmul.f32 %v2944, %v2977
      %v2982 = vmul.f32 %v2945, %v2977
      %v2983 = vmul.f32 %v2946, %v2977
      %v2984 = vmul.f32 %v2947, %v2977
      %v2985 = vmul.f32 %v2948, %v2977
      %v2986 = vmul.f32 %v2949, %v2977
      %v2987 = vmul.f32 %v2950, %v2977
      %v2988 = vmul.f32 %v2951, %v2977
      %v2989 = vmul.f32 %v2952, %v2977
      %v2990 = vmul.f32 %v2953, %v2977
      %v2991 = vmul.f32 %v2954, %v2977
      %v2992 = vmul.f32 %v2955, %v2977
      %v2993 = vmul.f32 %v2956, %v2977
      %v2994 = vmul.f32 %v2957, %v2977
      %v2995 = vmul.f32 %v2958, %v2977
      %v2996 = vmul.f32 %v2959, %v2977
      %v2997 = vmul.f32 %v2960, %v2977
      %v2998 = vmul.f32 %v2961, %v2977
      %v2999 = vmul.f32 %v2962, %v2977
      %v3000 = vmul.f32 %v2963, %v2977
      %v3001 = vmul.f32 %v2964, %v2977
      %v3002 = vmul.f32 %v2965, %v2977
      %v3003 = vmul.f32 %v2966, %v2977
      %v3004 = vmul.f32 %v2967, %v2977
      %v3005 = vmul.f32 %v2968, %v2977
      %v3006 = vmul.f32 %v2969, %v2977
      %v3007 = vmul.f32 %v2970, %v2977
      %v3008 = vmul.f32 %v2971, %v2977
      %v3009 = vmul.f32 %v2972, %v2977
      %v3010 = vld [vmem:[%s2 + $0x2] sm:$0x1]
      %v3011 = vlaneseq
      %v3012 = vshrl.u32 %v3011, 7
      %v3013 = vsub.s32 0, %v3012
      %v3014 = vrot.slane %v3010, %v3013
      %v3015 = vadd.f32 %v2978, %v3014
      %v3016 = vadd.f32 %v2979, %v3014
      %v3017 = vadd.f32 %v2980, %v3014
      %v3018 = vadd.f32 %v2981, %v3014
      %v3019 = vadd.f32 %v2982, %v3014
      %v3020 = vadd.f32 %v2983, %v3014
      %v3021 = vadd.f32 %v2984, %v3014
      %v3022 = vadd.f32 %v2985, %v3014
      %v3023 = vadd.f32 %v2986, %v3014
      %v3024 = vadd.f32 %v2987, %v3014
      %v3025 = vadd.f32 %v2988, %v3014
      %v3026 = vadd.f32 %v2989, %v3014
      %v3027 = vadd.f32 %v2990, %v3014
      %v3028 = vadd.f32 %v2991, %v3014
      %v3029 = vadd.f32 %v2992, %v3014
      %v3030 = vadd.f32 %v2993, %v3014
      %v3031 = vadd.f32 %v2994, %v3014
      %v3032 = vadd.f32 %v2995, %v3014
      %v3033 = vadd.f32 %v2996, %v3014
      %v3034 = vadd.f32 %v2997, %v3014
      %v3035 = vadd.f32 %v2998, %v3014
      %v3036 = vadd.f32 %v2999, %v3014
      %v3037 = vadd.f32 %v3000, %v3014
      %v3038 = vadd.f32 %v3001, %v3014
      %v3039 = vadd.f32 %v3002, %v3014
      %v3040 = vadd.f32 %v3003, %v3014
      %v3041 = vadd.f32 %v3004, %v3014
      %v3042 = vadd.f32 %v3005, %v3014
      %v3043 = vadd.f32 %v3006, %v3014
      %v3044 = vadd.f32 %v3007, %v3014
      %v3045 = vadd.f32 %v3008, %v3014
      %v3046 = vadd.f32 %v3009, %v3014
      %vm3047 = vcmask 60416
      %3048 = vst.msk [vmem:[#allocation3] sm:$0xf] %vm3047, 0
      %3049 = vst.msk [vmem:[#allocation3 + $0x4] sm:$0xf] %vm3047, 0
      %vm3050 = vcmask 57344
      %vm3051 = vmand %vm3050, %vm314
      %v3052 = vld [vmem:[#allocation3 + $0x8] sm:$0x1]
      %v3053 = vsel %vm3051, 0, %v3052
      %3054 = vst [vmem:[#allocation3 + $0x8] sm:$0x1] %v3053
      %3055 = vst.msk [vmem:[#allocation3 + $0xc] sm:$0xf] %vm3047, 0
      %3056 = vst.msk [vmem:[#allocation3 + $0x10] sm:$0xf] %vm3047, 0
      %v3057 = vld [vmem:[#allocation3 + $0x14] sm:$0x1]
      %v3058 = vsel %vm3051, 0, %v3057
      %3059 = vst [vmem:[#allocation3 + $0x14] sm:$0x1] %v3058
      %3060 = vst.msk [vmem:[#allocation3 + $0x18] sm:$0xf] %vm3047, 0
      %3061 = vst.msk [vmem:[#allocation3 + $0x1c] sm:$0xf] %vm3047, 0
      %v3062 = vld [vmem:[#allocation3 + $0x20] sm:$0x1]
      %v3063 = vsel %vm3051, 0, %v3062
      %3064 = vst [vmem:[#allocation3 + $0x20] sm:$0x1] %v3063
      %3065 = vst.msk [vmem:[#allocation3 + $0x24] sm:$0xf] %vm3047, 0
      %3066 = vst.msk [vmem:[#allocation3 + $0x28] sm:$0xf] %vm3047, 0
      %v3067 = vld [vmem:[#allocation3 + $0x2c] sm:$0x1]
      %v3068 = vsel %vm3051, 0, %v3067
      %3069 = vst [vmem:[#allocation3 + $0x2c] sm:$0x1] %v3068
      %3070 = vst.msk [vmem:[#allocation3 + $0x30] sm:$0xf] %vm3047, 0
      %3071 = vst.msk [vmem:[#allocation3 + $0x34] sm:$0xf] %vm3047, 0
      %v3072 = vld [vmem:[#allocation3 + $0x38] sm:$0x1]
      %v3073 = vsel %vm3051, 0, %v3072
      %3074 = vst [vmem:[#allocation3 + $0x38] sm:$0x1] %v3073
      %3075 = vst.msk [vmem:[#allocation3 + $0x3c] sm:$0xf] %vm3047, 0
      %3076 = vst.msk [vmem:[#allocation3 + $0x40] sm:$0xf] %vm3047, 0
      %v3077 = vld [vmem:[#allocation3 + $0x44] sm:$0x1]
      %v3078 = vsel %vm3051, 0, %v3077
      %3079 = vst [vmem:[#allocation3 + $0x44] sm:$0x1] %v3078
      %3080 = vst.msk [vmem:[#allocation3 + $0x48] sm:$0xf] %vm3047, 0
      %3081 = vst.msk [vmem:[#allocation3 + $0x4c] sm:$0xf] %vm3047, 0
      %v3082 = vld [vmem:[#allocation3 + $0x50] sm:$0x1]
      %v3083 = vsel %vm3051, 0, %v3082
      %3084 = vst [vmem:[#allocation3 + $0x50] sm:$0x1] %v3083
      %3085 = vst.msk [vmem:[#allocation3 + $0x54] sm:$0xf] %vm3047, 0
      %3086 = vst.msk [vmem:[#allocation3 + $0x58] sm:$0xf] %vm3047, 0
      %v3087 = vld [vmem:[#allocation3 + $0x5c] sm:$0x1]
      %v3088 = vsel %vm3051, 0, %v3087
      %3089 = vst [vmem:[#allocation3 + $0x5c] sm:$0x1] %v3088
      %3090 = vst.msk [vmem:[#allocation3 + $0x60] sm:$0xf] %vm3047, 0
      %3091 = vst.msk [vmem:[#allocation3 + $0x64] sm:$0xf] %vm3047, 0
      %v3092 = vld [vmem:[#allocation3 + $0x68] sm:$0x1]
      %v3093 = vsel %vm3051, 0, %v3092
      %3094 = vst [vmem:[#allocation3 + $0x68] sm:$0x1] %v3093
      %3095 = vst.msk [vmem:[#allocation3 + $0x6c] sm:$0xf] %vm3047, 0
      %3096 = vst.msk [vmem:[#allocation3 + $0x70] sm:$0xf] %vm3047, 0
      %v3097 = vld [vmem:[#allocation3 + $0x74] sm:$0x1]
      %v3098 = vsel %vm3051, 0, %v3097
      %3099 = vst [vmem:[#allocation3 + $0x74] sm:$0x1] %v3098
      %3100 = vst.msk [vmem:[#allocation3 + $0x78] sm:$0xf] %vm3047, 0
      %3101 = vst.msk [vmem:[#allocation3 + $0x7c] sm:$0xf] %vm3047, 0
      %v3102 = vld [vmem:[#allocation3 + $0x80] sm:$0x1]
      %v3103 = vsel %vm3051, 0, %v3102
      %3104 = vst [vmem:[#allocation3 + $0x80] sm:$0x1] %v3103
      %3105 = vst.msk [vmem:[#allocation3 + $0x84] sm:$0xf] %vm3047, 0
      %3106 = vst.msk [vmem:[#allocation3 + $0x88] sm:$0xf] %vm3047, 0
      %v3107 = vld [vmem:[#allocation3 + $0x8c] sm:$0x1]
      %v3108 = vsel %vm3051, 0, %v3107
      %3109 = vst [vmem:[#allocation3 + $0x8c] sm:$0x1] %v3108
      %3110 = vst.msk [vmem:[#allocation3 + $0x90] sm:$0xf] %vm3047, 0
      %3111 = vst.msk [vmem:[#allocation3 + $0x94] sm:$0xf] %vm3047, 0
      %v3112 = vld [vmem:[#allocation3 + $0x98] sm:$0x1]
      %v3113 = vsel %vm3051, 0, %v3112
      %3114 = vst [vmem:[#allocation3 + $0x98] sm:$0x1] %v3113
      %3115 = vst.msk [vmem:[#allocation3 + $0x9c] sm:$0xf] %vm3047, 0
      %3116 = vst.msk [vmem:[#allocation3 + $0xa0] sm:$0xf] %vm3047, 0
      %v3117 = vld [vmem:[#allocation3 + $0xa4] sm:$0x1]
      %v3118 = vsel %vm3051, 0, %v3117
      %3119 = vst [vmem:[#allocation3 + $0xa4] sm:$0x1] %v3118
      %3120 = vst.msk [vmem:[#allocation3 + $0xa8] sm:$0xf] %vm3047, 0
      %3121 = vst.msk [vmem:[#allocation3 + $0xac] sm:$0xf] %vm3047, 0
      %v3122 = vld [vmem:[#allocation3 + $0xb0] sm:$0x1]
      %v3123 = vsel %vm3051, 0, %v3122
      %3124 = vst [vmem:[#allocation3 + $0xb0] sm:$0x1] %v3123
      %3125 = vst.msk [vmem:[#allocation3 + $0xb4] sm:$0xf] %vm3047, 0
      %3126 = vst.msk [vmem:[#allocation3 + $0xb8] sm:$0xf] %vm3047, 0
      %v3127 = vld [vmem:[#allocation3 + $0xbc] sm:$0x1]
      %v3128 = vsel %vm3051, 0, %v3127
      %3129 = vst [vmem:[#allocation3 + $0xbc] sm:$0x1] %v3128
      %3130 = vst.msk [vmem:[#allocation3 + $0xc0] sm:$0xf] %vm3047, 0
      %3131 = vst.msk [vmem:[#allocation3 + $0xc4] sm:$0xf] %vm3047, 0
      %v3132 = vld [vmem:[#allocation3 + $0xc8] sm:$0x1]
      %v3133 = vsel %vm3051, 0, %v3132
      %3134 = vst [vmem:[#allocation3 + $0xc8] sm:$0x1] %v3133
      %v3135 = vpack.c.bf16 %v3016, %v3015
      %v3136 = vpack.c.bf16 %v3018, %v3017
      %v3137 = vpack.c.bf16 %v3020, %v3019
      %v3138 = vpack.c.bf16 %v3022, %v3021
      %v3139 = vpack.c.bf16 %v3024, %v3023
      %v3140 = vpack.c.bf16 %v3026, %v3025
      %v3141 = vpack.c.bf16 %v3028, %v3027
      %v3142 = vpack.c.bf16 %v3030, %v3029
      %v3143 = vpack.c.bf16 %v3032, %v3031
      %v3144 = vpack.c.bf16 %v3034, %v3033
      %v3145 = vpack.c.bf16 %v3036, %v3035
      %v3146 = vpack.c.bf16 %v3038, %v3037
      %v3147 = vpack.c.bf16 %v3040, %v3039
      %v3148 = vpack.c.bf16 %v3042, %v3041
      %v3149 = vpack.c.bf16 %v3044, %v3043
      %v3150 = vpack.c.bf16 %v3046, %v3045
      %v3167 = vunpack.c.l.b16 %v3135
      %v3168 = vunpack.c.h.b16 %v3135
      %v3169 = vunpack.c.l.b16 %v3136
      %v3170 = vunpack.c.h.b16 %v3136
      %v3171 = vunpack.c.l.b16 %v3137
      %v3172 = vunpack.c.h.b16 %v3137
      %v3173 = vunpack.c.l.b16 %v3138
      %v3174 = vunpack.c.h.b16 %v3138
      %v3175 = vunpack.c.l.b16 %v3139
      %v3176 = vunpack.c.h.b16 %v3139
      %v3177 = vunpack.c.l.b16 %v3140
      %v3178 = vunpack.c.h.b16 %v3140
      %v3179 = vunpack.c.l.b16 %v3141
      %v3180 = vunpack.c.h.b16 %v3141
      %v3181 = vunpack.c.l.b16 %v3142
      %v3182 = vunpack.c.h.b16 %v3142
      %v3183 = vunpack.c.l.b16 %v3143
      %v3184 = vunpack.c.h.b16 %v3143
      %v3185 = vunpack.c.l.b16 %v3144
      %v3186 = vunpack.c.h.b16 %v3144
      %v3187 = vunpack.c.l.b16 %v3145
      %v3188 = vunpack.c.h.b16 %v3145
      %v3189 = vunpack.c.l.b16 %v3146
      %v3190 = vunpack.c.h.b16 %v3146
      %v3191 = vunpack.c.l.b16 %v3147
      %v3192 = vunpack.c.h.b16 %v3147
      %v3193 = vunpack.c.l.b16 %v3148
      %v3194 = vunpack.c.h.b16 %v3148
      %v3195 = vunpack.c.l.b16 %v3149
      %v3196 = vunpack.c.h.b16 %v3149
      %v3197 = vunpack.c.l.b16 %v3150
      %v3198 = vunpack.c.h.b16 %v3150
      %v3199 = vpack.c.b16 %v3167, %v3167
      %v3200 = vpack.c.b16 %v3168, %v3168
      %v3201 = vpack.c.b16 %v3169, %v3169
      %v3202 = vpack.c.b16 %v3170, %v3170
      %v3203 = vpack.c.b16 %v3171, %v3171
      %v3204 = vpack.c.b16 %v3172, %v3172
      %v3205 = vpack.c.b16 %v3173, %v3173
      %v3206 = vpack.c.b16 %v3174, %v3174
      %v3207 = vpack.c.b16 %v3175, %v3175
      %v3208 = vpack.c.b16 %v3176, %v3176
      %v3209 = vpack.c.b16 %v3177, %v3177
      %v3210 = vpack.c.b16 %v3178, %v3178
      %v3211 = vpack.c.b16 %v3179, %v3179
      %v3212 = vpack.c.b16 %v3180, %v3180
      %v3213 = vpack.c.b16 %v3181, %v3181
      %v3214 = vpack.c.b16 %v3182, %v3182
      %v3215 = vpack.c.b16 %v3183, %v3183
      %v3216 = vpack.c.b16 %v3184, %v3184
      %v3217 = vpack.c.b16 %v3185, %v3185
      %v3218 = vpack.c.b16 %v3186, %v3186
      %v3219 = vpack.c.b16 %v3187, %v3187
      %v3220 = vpack.c.b16 %v3188, %v3188
      %v3221 = vpack.c.b16 %v3189, %v3189
      %v3222 = vpack.c.b16 %v3190, %v3190
      %v3223 = vpack.c.b16 %v3191, %v3191
      %v3224 = vpack.c.b16 %v3192, %v3192
      %v3225 = vpack.c.b16 %v3193, %v3193
      %v3226 = vpack.c.b16 %v3194, %v3194
      %v3227 = vpack.c.b16 %v3195, %v3195
      %v3228 = vpack.c.b16 %v3196, %v3196
      %v3229 = vpack.c.b16 %v3197, %v3197
      %v3230 = vpack.c.b16 %v3198, %v3198
      %3263 = vst.msk [vmem:[#allocation3] sm:$0xf] %vm3047, %v3199
      %3264 = vst.msk [vmem:[#allocation3 + $0x4] sm:$0xf] %vm3047, %v3200
      %3265 = vst.msk [vmem:[#allocation3 + $0xc] sm:$0xf] %vm3047, %v3201
      %3266 = vst.msk [vmem:[#allocation3 + $0x10] sm:$0xf] %vm3047, %v3202
      %3267 = vst.msk [vmem:[#allocation3 + $0x18] sm:$0xf] %vm3047, %v3203
      %3268 = vst.msk [vmem:[#allocation3 + $0x1c] sm:$0xf] %vm3047, %v3204
      %3269 = vst.msk [vmem:[#allocation3 + $0x24] sm:$0xf] %vm3047, %v3205
      %3270 = vst.msk [vmem:[#allocation3 + $0x28] sm:$0xf] %vm3047, %v3206
      %3271 = vst.msk [vmem:[#allocation3 + $0x30] sm:$0xf] %vm3047, %v3207
      %3272 = vst.msk [vmem:[#allocation3 + $0x34] sm:$0xf] %vm3047, %v3208
      %3273 = vst.msk [vmem:[#allocation3 + $0x3c] sm:$0xf] %vm3047, %v3209
      %3274 = vst.msk [vmem:[#allocation3 + $0x40] sm:$0xf] %vm3047, %v3210
      %3275 = vst.msk [vmem:[#allocation3 + $0x48] sm:$0xf] %vm3047, %v3211
      %3276 = vst.msk [vmem:[#allocation3 + $0x4c] sm:$0xf] %vm3047, %v3212
      %3277 = vst.msk [vmem:[#allocation3 + $0x54] sm:$0xf] %vm3047, %v3213
      %3278 = vst.msk [vmem:[#allocation3 + $0x58] sm:$0xf] %vm3047, %v3214
      %3279 = vst.msk [vmem:[#allocation3 + $0x60] sm:$0xf] %vm3047, %v3215
      %3280 = vst.msk [vmem:[#allocation3 + $0x64] sm:$0xf] %vm3047, %v3216
      %3281 = vst.msk [vmem:[#allocation3 + $0x6c] sm:$0xf] %vm3047, %v3217
      %3282 = vst.msk [vmem:[#allocation3 + $0x70] sm:$0xf] %vm3047, %v3218
      %3283 = vst.msk [vmem:[#allocation3 + $0x78] sm:$0xf] %vm3047, %v3219
      %3284 = vst.msk [vmem:[#allocation3 + $0x7c] sm:$0xf] %vm3047, %v3220
      %3285 = vst.msk [vmem:[#allocation3 + $0x84] sm:$0xf] %vm3047, %v3221
      %3286 = vst.msk [vmem:[#allocation3 + $0x88] sm:$0xf] %vm3047, %v3222
      %3287 = vst.msk [vmem:[#allocation3 + $0x90] sm:$0xf] %vm3047, %v3223
      %3288 = vst.msk [vmem:[#allocation3 + $0x94] sm:$0xf] %vm3047, %v3224
      %3289 = vst.msk [vmem:[#allocation3 + $0x9c] sm:$0xf] %vm3047, %v3225
      %3290 = vst.msk [vmem:[#allocation3 + $0xa0] sm:$0xf] %vm3047, %v3226
      %3291 = vst.msk [vmem:[#allocation3 + $0xa8] sm:$0xf] %vm3047, %v3227
      %3292 = vst.msk [vmem:[#allocation3 + $0xac] sm:$0xf] %vm3047, %v3228
      %3293 = vst.msk [vmem:[#allocation3 + $0xb4] sm:$0xf] %vm3047, %v3229
      %3294 = vst.msk [vmem:[#allocation3 + $0xb8] sm:$0xf] %vm3047, %v3230
      %v3295 = vld [vmem:[#allocation3] sm:$0xf]
      %v3296 = vld [vmem:[#allocation3 + $0x4] sm:$0xf]
      %v3297 = vld [vmem:[#allocation3 + $0xc] sm:$0xf]
      %v3298 = vld [vmem:[#allocation3 + $0x10] sm:$0xf]
      %v3299 = vld [vmem:[#allocation3 + $0x18] sm:$0xf]
      %v3300 = vld [vmem:[#allocation3 + $0x1c] sm:$0xf]
      %v3301 = vld [vmem:[#allocation3 + $0x24] sm:$0xf]
      %v3302 = vld [vmem:[#allocation3 + $0x28] sm:$0xf]
      %v3303 = vld [vmem:[#allocation3 + $0x30] sm:$0xf]
      %v3304 = vld [vmem:[#allocation3 + $0x34] sm:$0xf]
      %v3305 = vld [vmem:[#allocation3 + $0x3c] sm:$0xf]
      %v3306 = vld [vmem:[#allocation3 + $0x40] sm:$0xf]
      %v3307 = vld [vmem:[#allocation3 + $0x48] sm:$0xf]
      %v3308 = vld [vmem:[#allocation3 + $0x4c] sm:$0xf]
      %v3309 = vld [vmem:[#allocation3 + $0x54] sm:$0xf]
      %v3310 = vld [vmem:[#allocation3 + $0x58] sm:$0xf]
      %v3311 = vld [vmem:[#allocation3 + $0x60] sm:$0xf]
      %v3312 = vld [vmem:[#allocation3 + $0x64] sm:$0xf]
      %v3313 = vld [vmem:[#allocation3 + $0x6c] sm:$0xf]
      %v3314 = vld [vmem:[#allocation3 + $0x70] sm:$0xf]
      %v3315 = vld [vmem:[#allocation3 + $0x78] sm:$0xf]
      %v3316 = vld [vmem:[#allocation3 + $0x7c] sm:$0xf]
      %v3317 = vld [vmem:[#allocation3 + $0x84] sm:$0xf]
      %v3318 = vld [vmem:[#allocation3 + $0x88] sm:$0xf]
      %v3319 = vld [vmem:[#allocation3 + $0x90] sm:$0xf]
      %v3320 = vld [vmem:[#allocation3 + $0x94] sm:$0xf]
      %v3321 = vld [vmem:[#allocation3 + $0x9c] sm:$0xf]
      %v3322 = vld [vmem:[#allocation3 + $0xa0] sm:$0xf]
      %v3323 = vld [vmem:[#allocation3 + $0xa8] sm:$0xf]
      %v3324 = vld [vmem:[#allocation3 + $0xac] sm:$0xf]
      %v3325 = vld [vmem:[#allocation3 + $0xb4] sm:$0xf]
      %v3326 = vld [vmem:[#allocation3 + $0xb8] sm:$0xf]
      %v3327 = vld [vmem:[#allocation3 + $0x8] sm:$0x1]
      %v3328 = vld [vmem:[#allocation3 + $0x14] sm:$0x1]
      %v3329 = vld [vmem:[#allocation3 + $0x20] sm:$0x1]
      %v3330 = vld [vmem:[#allocation3 + $0x2c] sm:$0x1]
      %v3331 = vld [vmem:[#allocation3 + $0x38] sm:$0x1]
      %v3332 = vld [vmem:[#allocation3 + $0x44] sm:$0x1]
      %v3333 = vld [vmem:[#allocation3 + $0x50] sm:$0x1]
      %v3334 = vld [vmem:[#allocation3 + $0x5c] sm:$0x1]
      %v3335 = vld [vmem:[#allocation3 + $0x68] sm:$0x1]
      %v3336 = vld [vmem:[#allocation3 + $0x74] sm:$0x1]
      %v3337 = vld [vmem:[#allocation3 + $0x80] sm:$0x1]
      %v3338 = vld [vmem:[#allocation3 + $0x8c] sm:$0x1]
      %v3339 = vld [vmem:[#allocation3 + $0x98] sm:$0x1]
      %v3340 = vld [vmem:[#allocation3 + $0xa4] sm:$0x1]
      %v3341 = vld [vmem:[#allocation3 + $0xb0] sm:$0x1]
      %v3342 = vld [vmem:[#allocation3 + $0xbc] sm:$0x1]
      %s3343 = scalar_lea.vmem [#allocation3], 12
      %v3344 = vld [vmem:[%s3343] sm:$0xf]
      %v3345 = vld [vmem:[%s3343 + $0x4] sm:$0xf]
      %v3346 = vld [vmem:[%s3343 + $0xc] sm:$0xf]
      %v3347 = vld [vmem:[%s3343 + $0x10] sm:$0xf]
      %v3348 = vld [vmem:[%s3343 + $0x18] sm:$0xf]
      %v3349 = vld [vmem:[%s3343 + $0x1c] sm:$0xf]
      %v3350 = vld [vmem:[%s3343 + $0x24] sm:$0xf]
      %v3351 = vld [vmem:[%s3343 + $0x28] sm:$0xf]
      %v3352 = vld [vmem:[%s3343 + $0x30] sm:$0xf]
      %v3353 = vld [vmem:[%s3343 + $0x34] sm:$0xf]
      %v3354 = vld [vmem:[%s3343 + $0x3c] sm:$0xf]
      %v3355 = vld [vmem:[%s3343 + $0x40] sm:$0xf]
      %v3356 = vld [vmem:[%s3343 + $0x48] sm:$0xf]
      %v3357 = vld [vmem:[%s3343 + $0x4c] sm:$0xf]
      %v3358 = vld [vmem:[%s3343 + $0x54] sm:$0xf]
      %v3359 = vld [vmem:[%s3343 + $0x58] sm:$0xf]
      %v3360 = vld [vmem:[%s3343 + $0x60] sm:$0xf]
      %v3361 = vld [vmem:[%s3343 + $0x64] sm:$0xf]
      %v3362 = vld [vmem:[%s3343 + $0x6c] sm:$0xf]
      %v3363 = vld [vmem:[%s3343 + $0x70] sm:$0xf]
      %v3364 = vld [vmem:[%s3343 + $0x78] sm:$0xf]
      %v3365 = vld [vmem:[%s3343 + $0x7c] sm:$0xf]
      %v3366 = vld [vmem:[%s3343 + $0x84] sm:$0xf]
      %v3367 = vld [vmem:[%s3343 + $0x88] sm:$0xf]
      %v3368 = vld [vmem:[%s3343 + $0x90] sm:$0xf]
      %v3369 = vld [vmem:[%s3343 + $0x94] sm:$0xf]
      %v3370 = vld [vmem:[%s3343 + $0x9c] sm:$0xf]
      %v3371 = vld [vmem:[%s3343 + $0xa0] sm:$0xf]
      %v3372 = vld [vmem:[%s3343 + $0xa8] sm:$0xf]
      %v3373 = vld [vmem:[%s3343 + $0xac] sm:$0xf]
      %v3374 = vld [vmem:[%s3343 + $0xb4] sm:$0xf]
      %v3375 = vld [vmem:[%s3343 + $0xb8] sm:$0xf]
      %v3376 = vld [vmem:[%s3343 + $0x8] sm:$0x1]
      %v3377 = vld [vmem:[%s3343 + $0x14] sm:$0x1]
      %v3378 = vld [vmem:[%s3343 + $0x20] sm:$0x1]
      %v3379 = vld [vmem:[%s3343 + $0x2c] sm:$0x1]
      %v3380 = vld [vmem:[%s3343 + $0x38] sm:$0x1]
      %v3381 = vld [vmem:[%s3343 + $0x44] sm:$0x1]
      %v3382 = vld [vmem:[%s3343 + $0x50] sm:$0x1]
      %v3383 = vld [vmem:[%s3343 + $0x5c] sm:$0x1]
      %v3384 = vld [vmem:[%s3343 + $0x68] sm:$0x1]
      %v3385 = vld [vmem:[%s3343 + $0x74] sm:$0x1]
      %v3386 = vld [vmem:[%s3343 + $0x80] sm:$0x1]
      %v3387 = vld [vmem:[%s3343 + $0x8c] sm:$0x1]
      %v3388 = vld [vmem:[%s3343 + $0x98] sm:$0x1]
      %v3389 = vld [vmem:[%s3343 + $0xa4] sm:$0x1]
      %v3390 = vld [vmem:[%s3343 + $0xb0] sm:$0x1]
      %v3391 = vld [vmem:[%s3343 + $0xbc] sm:$0x1]
      %v3424 = vunpack.c.l.b16 %v3295
      %v3425 = vunpack.c.l.b16 %v3296
      %v3426 = vunpack.c.l.b16 %v3297
      %v3427 = vunpack.c.l.b16 %v3298
      %v3428 = vunpack.c.l.b16 %v3299
      %v3429 = vunpack.c.l.b16 %v3300
      %v3430 = vunpack.c.l.b16 %v3301
      %v3431 = vunpack.c.l.b16 %v3302
      %v3432 = vunpack.c.l.b16 %v3303
      %v3433 = vunpack.c.l.b16 %v3304
      %v3434 = vunpack.c.l.b16 %v3305
      %v3435 = vunpack.c.l.b16 %v3306
      %v3436 = vunpack.c.l.b16 %v3307
      %v3437 = vunpack.c.l.b16 %v3308
      %v3438 = vunpack.c.l.b16 %v3309
      %v3439 = vunpack.c.l.b16 %v3310
      %v3440 = vunpack.c.l.b16 %v3311
      %v3441 = vunpack.c.l.b16 %v3312
      %v3442 = vunpack.c.l.b16 %v3313
      %v3443 = vunpack.c.l.b16 %v3314
      %v3444 = vunpack.c.l.b16 %v3315
      %v3445 = vunpack.c.l.b16 %v3316
      %v3446 = vunpack.c.l.b16 %v3317
      %v3447 = vunpack.c.l.b16 %v3318
      %v3448 = vunpack.c.l.b16 %v3319
      %v3449 = vunpack.c.l.b16 %v3320
      %v3450 = vunpack.c.l.b16 %v3321
      %v3451 = vunpack.c.l.b16 %v3322
      %v3452 = vunpack.c.l.b16 %v3323
      %v3453 = vunpack.c.l.b16 %v3324
      %v3454 = vunpack.c.l.b16 %v3325
      %v3455 = vunpack.c.l.b16 %v3326
      %v3456 = vpack.c.b16 %v3425, %v3424
      %v3457 = vpack.c.b16 %v3427, %v3426
      %v3458 = vpack.c.b16 %v3429, %v3428
      %v3459 = vpack.c.b16 %v3431, %v3430
      %v3460 = vpack.c.b16 %v3433, %v3432
      %v3461 = vpack.c.b16 %v3435, %v3434
      %v3462 = vpack.c.b16 %v3437, %v3436
      %v3463 = vpack.c.b16 %v3439, %v3438
      %v3464 = vpack.c.b16 %v3441, %v3440
      %v3465 = vpack.c.b16 %v3443, %v3442
      %v3466 = vpack.c.b16 %v3445, %v3444
      %v3467 = vpack.c.b16 %v3447, %v3446
      %v3468 = vpack.c.b16 %v3449, %v3448
      %v3469 = vpack.c.b16 %v3451, %v3450
      %v3470 = vpack.c.b16 %v3453, %v3452
      %v3471 = vpack.c.b16 %v3455, %v3454
      %v3488 = vunpack.c.l.b16 %v3327
      %v3489 = vunpack.c.l.b16 %v3328
      %v3490 = vunpack.c.l.b16 %v3329
      %v3491 = vunpack.c.l.b16 %v3330
      %v3492 = vunpack.c.l.b16 %v3331
      %v3493 = vunpack.c.l.b16 %v3332
      %v3494 = vunpack.c.l.b16 %v3333
      %v3495 = vunpack.c.l.b16 %v3334
      %v3496 = vunpack.c.l.b16 %v3335
      %v3497 = vunpack.c.l.b16 %v3336
      %v3498 = vunpack.c.l.b16 %v3337
      %v3499 = vunpack.c.l.b16 %v3338
      %v3500 = vunpack.c.l.b16 %v3339
      %v3501 = vunpack.c.l.b16 %v3340
      %v3502 = vunpack.c.l.b16 %v3341
      %v3503 = vunpack.c.l.b16 %v3342
      %v3504 = vpack.c.b16 %v3488, %v3488
      %v3505 = vpack.c.b16 %v3489, %v3489
      %v3506 = vpack.c.b16 %v3490, %v3490
      %v3507 = vpack.c.b16 %v3491, %v3491
      %v3508 = vpack.c.b16 %v3492, %v3492
      %v3509 = vpack.c.b16 %v3493, %v3493
      %v3510 = vpack.c.b16 %v3494, %v3494
      %v3511 = vpack.c.b16 %v3495, %v3495
      %v3512 = vpack.c.b16 %v3496, %v3496
      %v3513 = vpack.c.b16 %v3497, %v3497
      %v3514 = vpack.c.b16 %v3498, %v3498
      %v3515 = vpack.c.b16 %v3499, %v3499
      %v3516 = vpack.c.b16 %v3500, %v3500
      %v3517 = vpack.c.b16 %v3501, %v3501
      %v3518 = vpack.c.b16 %v3502, %v3502
      %v3519 = vpack.c.b16 %v3503, %v3503
      %v3521 = vshrl.u32 %v3456, 16
      %v3523 = vshll.u32 %v3456, 16
      %v3525 = vrot.slane %v3523, 1
      %v3526 = vor.u32 %v3521, %v3525
      %v3528 = vshll.u32 %v3504, 16
      %v3530 = vrot.slane %v3528, 1
      %v3531 = vsel %vm1076, %v3526, %v3530
      %v3533 = vshrl.u32 %v3457, 16
      %v3535 = vshll.u32 %v3457, 16
      %v3537 = vrot.slane %v3535, 1
      %v3538 = vor.u32 %v3533, %v3537
      %v3540 = vshll.u32 %v3505, 16
      %v3542 = vrot.slane %v3540, 1
      %v3543 = vsel %vm1076, %v3538, %v3542
      %v3545 = vshrl.u32 %v3458, 16
      %v3547 = vshll.u32 %v3458, 16
      %v3549 = vrot.slane %v3547, 1
      %v3550 = vor.u32 %v3545, %v3549
      %v3552 = vshll.u32 %v3506, 16
      %v3554 = vrot.slane %v3552, 1
      %v3555 = vsel %vm1076, %v3550, %v3554
      %v3557 = vshrl.u32 %v3459, 16
      %v3559 = vshll.u32 %v3459, 16
      %v3561 = vrot.slane %v3559, 1
      %v3562 = vor.u32 %v3557, %v3561
      %v3564 = vshll.u32 %v3507, 16
      %v3566 = vrot.slane %v3564, 1
      %v3567 = vsel %vm1076, %v3562, %v3566
      %v3569 = vshrl.u32 %v3460, 16
      %v3571 = vshll.u32 %v3460, 16
      %v3573 = vrot.slane %v3571, 1
      %v3574 = vor.u32 %v3569, %v3573
      %v3576 = vshll.u32 %v3508, 16
      %v3578 = vrot.slane %v3576, 1
      %v3579 = vsel %vm1076, %v3574, %v3578
      %v3581 = vshrl.u32 %v3461, 16
      %v3583 = vshll.u32 %v3461, 16
      %v3585 = vrot.slane %v3583, 1
      %v3586 = vor.u32 %v3581, %v3585
      %v3588 = vshll.u32 %v3509, 16
      %v3590 = vrot.slane %v3588, 1
      %v3591 = vsel %vm1076, %v3586, %v3590
      %v3593 = vshrl.u32 %v3462, 16
      %v3595 = vshll.u32 %v3462, 16
      %v3597 = vrot.slane %v3595, 1
      %v3598 = vor.u32 %v3593, %v3597
      %v3600 = vshll.u32 %v3510, 16
      %v3602 = vrot.slane %v3600, 1
      %v3603 = vsel %vm1076, %v3598, %v3602
      %v3605 = vshrl.u32 %v3463, 16
      %v3607 = vshll.u32 %v3463, 16
      %v3609 = vrot.slane %v3607, 1
      %v3610 = vor.u32 %v3605, %v3609
      %v3612 = vshll.u32 %v3511, 16
      %v3614 = vrot.slane %v3612, 1
      %v3615 = vsel %vm1076, %v3610, %v3614
      %v3617 = vshrl.u32 %v3464, 16
      %v3619 = vshll.u32 %v3464, 16
      %v3621 = vrot.slane %v3619, 1
      %v3622 = vor.u32 %v3617, %v3621
      %v3624 = vshll.u32 %v3512, 16
      %v3626 = vrot.slane %v3624, 1
      %v3627 = vsel %vm1076, %v3622, %v3626
      %v3629 = vshrl.u32 %v3465, 16
      %v3631 = vshll.u32 %v3465, 16
      %v3633 = vrot.slane %v3631, 1
      %v3634 = vor.u32 %v3629, %v3633
      %v3636 = vshll.u32 %v3513, 16
      %v3638 = vrot.slane %v3636, 1
      %v3639 = vsel %vm1076, %v3634, %v3638
      %v3641 = vshrl.u32 %v3466, 16
      %v3643 = vshll.u32 %v3466, 16
      %v3645 = vrot.slane %v3643, 1
      %v3646 = vor.u32 %v3641, %v3645
      %v3648 = vshll.u32 %v3514, 16
      %v3650 = vrot.slane %v3648, 1
      %v3651 = vsel %vm1076, %v3646, %v3650
      %v3653 = vshrl.u32 %v3467, 16
      %v3655 = vshll.u32 %v3467, 16
      %v3657 = vrot.slane %v3655, 1
      %v3658 = vor.u32 %v3653, %v3657
      %v3660 = vshll.u32 %v3515, 16
      %v3662 = vrot.slane %v3660, 1
      %v3663 = vsel %vm1076, %v3658, %v3662
      %v3665 = vshrl.u32 %v3468, 16
      %v3667 = vshll.u32 %v3468, 16
      %v3669 = vrot.slane %v3667, 1
      %v3670 = vor.u32 %v3665, %v3669
      %v3672 = vshll.u32 %v3516, 16
      %v3674 = vrot.slane %v3672, 1
      %v3675 = vsel %vm1076, %v3670, %v3674
      %v3677 = vshrl.u32 %v3469, 16
      %v3679 = vshll.u32 %v3469, 16
      %v3681 = vrot.slane %v3679, 1
      %v3682 = vor.u32 %v3677, %v3681
      %v3684 = vshll.u32 %v3517, 16
      %v3686 = vrot.slane %v3684, 1
      %v3687 = vsel %vm1076, %v3682, %v3686
      %v3689 = vshrl.u32 %v3470, 16
      %v3691 = vshll.u32 %v3470, 16
      %v3693 = vrot.slane %v3691, 1
      %v3694 = vor.u32 %v3689, %v3693
      %v3696 = vshll.u32 %v3518, 16
      %v3698 = vrot.slane %v3696, 1
      %v3699 = vsel %vm1076, %v3694, %v3698
      %v3701 = vshrl.u32 %v3471, 16
      %v3703 = vshll.u32 %v3471, 16
      %v3705 = vrot.slane %v3703, 1
      %v3706 = vor.u32 %v3701, %v3705
      %v3708 = vshll.u32 %v3519, 16
      %v3710 = vrot.slane %v3708, 1
      %v3711 = vsel %vm1076, %v3706, %v3710
      %3712 = vrot.lane.b32.xlu0 %v3531, 8
      %v3713 = vpop.permute.xlu0 %3712
      %3714 = vrot.lane.b32.xlu0 %v3543, 8
      %v3715 = vpop.permute.xlu0 %3714
      %3716 = vrot.lane.b32.xlu0 %v3555, 8
      %v3717 = vpop.permute.xlu0 %3716
      %3718 = vrot.lane.b32.xlu0 %v3567, 8
      %v3719 = vpop.permute.xlu0 %3718
      %3720 = vrot.lane.b32.xlu0 %v3579, 8
      %v3721 = vpop.permute.xlu0 %3720
      %3722 = vrot.lane.b32.xlu0 %v3591, 8
      %v3723 = vpop.permute.xlu0 %3722
      %3724 = vrot.lane.b32.xlu0 %v3603, 8
      %v3725 = vpop.permute.xlu0 %3724
      %3726 = vrot.lane.b32.xlu0 %v3615, 8
      %v3727 = vpop.permute.xlu0 %3726
      %3728 = vrot.lane.b32.xlu0 %v3627, 8
      %v3729 = vpop.permute.xlu0 %3728
      %3730 = vrot.lane.b32.xlu0 %v3639, 8
      %v3731 = vpop.permute.xlu0 %3730
      %3732 = vrot.lane.b32.xlu0 %v3651, 8
      %v3733 = vpop.permute.xlu0 %3732
      %3734 = vrot.lane.b32.xlu0 %v3663, 8
      %v3735 = vpop.permute.xlu0 %3734
      %3736 = vrot.lane.b32.xlu0 %v3675, 8
      %v3737 = vpop.permute.xlu0 %3736
      %3738 = vrot.lane.b32.xlu0 %v3687, 8
      %v3739 = vpop.permute.xlu0 %3738
      %3740 = vrot.lane.b32.xlu0 %v3699, 8
      %v3741 = vpop.permute.xlu0 %3740
      %3742 = vrot.lane.b32.xlu0 %v3711, 8
      %v3743 = vpop.permute.xlu0 %3742
      %v3776 = vunpack.c.l.b16 %v3344
      %v3777 = vunpack.c.l.b16 %v3345
      %v3778 = vunpack.c.l.b16 %v3346
      %v3779 = vunpack.c.l.b16 %v3347
      %v3780 = vunpack.c.l.b16 %v3348
      %v3781 = vunpack.c.l.b16 %v3349
      %v3782 = vunpack.c.l.b16 %v3350
      %v3783 = vunpack.c.l.b16 %v3351
      %v3784 = vunpack.c.l.b16 %v3352
      %v3785 = vunpack.c.l.b16 %v3353
      %v3786 = vunpack.c.l.b16 %v3354
      %v3787 = vunpack.c.l.b16 %v3355
      %v3788 = vunpack.c.l.b16 %v3356
      %v3789 = vunpack.c.l.b16 %v3357
      %v3790 = vunpack.c.l.b16 %v3358
      %v3791 = vunpack.c.l.b16 %v3359
      %v3792 = vunpack.c.l.b16 %v3360
      %v3793 = vunpack.c.l.b16 %v3361
      %v3794 = vunpack.c.l.b16 %v3362
      %v3795 = vunpack.c.l.b16 %v3363
      %v3796 = vunpack.c.l.b16 %v3364
      %v3797 = vunpack.c.l.b16 %v3365
      %v3798 = vunpack.c.l.b16 %v3366
      %v3799 = vunpack.c.l.b16 %v3367
      %v3800 = vunpack.c.l.b16 %v3368
      %v3801 = vunpack.c.l.b16 %v3369
      %v3802 = vunpack.c.l.b16 %v3370
      %v3803 = vunpack.c.l.b16 %v3371
      %v3804 = vunpack.c.l.b16 %v3372
      %v3805 = vunpack.c.l.b16 %v3373
      %v3806 = vunpack.c.l.b16 %v3374
      %v3807 = vunpack.c.l.b16 %v3375
      %v3808 = vpack.c.b16 %v3777, %v3776
      %v3809 = vpack.c.b16 %v3779, %v3778
      %v3810 = vpack.c.b16 %v3781, %v3780
      %v3811 = vpack.c.b16 %v3783, %v3782
      %v3812 = vpack.c.b16 %v3785, %v3784
      %v3813 = vpack.c.b16 %v3787, %v3786
      %v3814 = vpack.c.b16 %v3789, %v3788
      %v3815 = vpack.c.b16 %v3791, %v3790
      %v3816 = vpack.c.b16 %v3793, %v3792
      %v3817 = vpack.c.b16 %v3795, %v3794
      %v3818 = vpack.c.b16 %v3797, %v3796
      %v3819 = vpack.c.b16 %v3799, %v3798
      %v3820 = vpack.c.b16 %v3801, %v3800
      %v3821 = vpack.c.b16 %v3803, %v3802
      %v3822 = vpack.c.b16 %v3805, %v3804
      %v3823 = vpack.c.b16 %v3807, %v3806
      %3824 = vrot.lane.b32.xlu0 %v3808, 16
      %v3825 = vpop.permute.xlu0 %3824
      %3826 = vrot.lane.b32.xlu0 %v3809, 16
      %v3827 = vpop.permute.xlu0 %3826
      %3828 = vrot.lane.b32.xlu0 %v3810, 16
      %v3829 = vpop.permute.xlu0 %3828
      %3830 = vrot.lane.b32.xlu0 %v3811, 16
      %v3831 = vpop.permute.xlu0 %3830
      %3832 = vrot.lane.b32.xlu0 %v3812, 16
      %v3833 = vpop.permute.xlu0 %3832
      %3834 = vrot.lane.b32.xlu0 %v3813, 16
      %v3835 = vpop.permute.xlu0 %3834
      %3836 = vrot.lane.b32.xlu0 %v3814, 16
      %v3837 = vpop.permute.xlu0 %3836
      %3838 = vrot.lane.b32.xlu0 %v3815, 16
      %v3839 = vpop.permute.xlu0 %3838
      %3840 = vrot.lane.b32.xlu0 %v3816, 16
      %v3841 = vpop.permute.xlu0 %3840
      %3842 = vrot.lane.b32.xlu0 %v3817, 16
      %v3843 = vpop.permute.xlu0 %3842
      %3844 = vrot.lane.b32.xlu0 %v3818, 16
      %v3845 = vpop.permute.xlu0 %3844
      %3846 = vrot.lane.b32.xlu0 %v3819, 16
      %v3847 = vpop.permute.xlu0 %3846
      %3848 = vrot.lane.b32.xlu0 %v3820, 16
      %v3849 = vpop.permute.xlu0 %3848
      %3850 = vrot.lane.b32.xlu0 %v3821, 16
      %v3851 = vpop.permute.xlu0 %3850
      %3852 = vrot.lane.b32.xlu0 %v3822, 16
      %v3853 = vpop.permute.xlu0 %3852
      %3854 = vrot.lane.b32.xlu0 %v3823, 16
      %v3855 = vpop.permute.xlu0 %3854
      %v3872 = vunpack.c.l.b16 %v3376
      %v3873 = vunpack.c.l.b16 %v3377
      %v3874 = vunpack.c.l.b16 %v3378
      %v3875 = vunpack.c.l.b16 %v3379
      %v3876 = vunpack.c.l.b16 %v3380
      %v3877 = vunpack.c.l.b16 %v3381
      %v3878 = vunpack.c.l.b16 %v3382
      %v3879 = vunpack.c.l.b16 %v3383
      %v3880 = vunpack.c.l.b16 %v3384
      %v3881 = vunpack.c.l.b16 %v3385
      %v3882 = vunpack.c.l.b16 %v3386
      %v3883 = vunpack.c.l.b16 %v3387
      %v3884 = vunpack.c.l.b16 %v3388
      %v3885 = vunpack.c.l.b16 %v3389
      %v3886 = vunpack.c.l.b16 %v3390
      %v3887 = vunpack.c.l.b16 %v3391
      %v3888 = vpack.c.b16 %v3872, %v3872
      %v3889 = vpack.c.b16 %v3873, %v3873
      %v3890 = vpack.c.b16 %v3874, %v3874
      %v3891 = vpack.c.b16 %v3875, %v3875
      %v3892 = vpack.c.b16 %v3876, %v3876
      %v3893 = vpack.c.b16 %v3877, %v3877
      %v3894 = vpack.c.b16 %v3878, %v3878
      %v3895 = vpack.c.b16 %v3879, %v3879
      %v3896 = vpack.c.b16 %v3880, %v3880
      %v3897 = vpack.c.b16 %v3881, %v3881
      %v3898 = vpack.c.b16 %v3882, %v3882
      %v3899 = vpack.c.b16 %v3883, %v3883
      %v3900 = vpack.c.b16 %v3884, %v3884
      %v3901 = vpack.c.b16 %v3885, %v3885
      %v3902 = vpack.c.b16 %v3886, %v3886
      %v3903 = vpack.c.b16 %v3887, %v3887
      %v3905 = vshrl.u32 %v3808, 16
      %v3907 = vshll.u32 %v3808, 16
      %v3909 = vrot.slane %v3907, 1
      %v3910 = vor.u32 %v3905, %v3909
      %v3912 = vshll.u32 %v3888, 16
      %v3914 = vrot.slane %v3912, 1
      %v3915 = vsel %vm1076, %v3910, %v3914
      %v3917 = vshrl.u32 %v3809, 16
      %v3919 = vshll.u32 %v3809, 16
      %v3921 = vrot.slane %v3919, 1
      %v3922 = vor.u32 %v3917, %v3921
      %v3924 = vshll.u32 %v3889, 16
      %v3926 = vrot.slane %v3924, 1
      %v3927 = vsel %vm1076, %v3922, %v3926
      %v3929 = vshrl.u32 %v3810, 16
      %v3931 = vshll.u32 %v3810, 16
      %v3933 = vrot.slane %v3931, 1
      %v3934 = vor.u32 %v3929, %v3933
      %v3936 = vshll.u32 %v3890, 16
      %v3938 = vrot.slane %v3936, 1
      %v3939 = vsel %vm1076, %v3934, %v3938
      %v3941 = vshrl.u32 %v3811, 16
      %v3943 = vshll.u32 %v3811, 16
      %v3945 = vrot.slane %v3943, 1
      %v3946 = vor.u32 %v3941, %v3945
      %v3948 = vshll.u32 %v3891, 16
      %v3950 = vrot.slane %v3948, 1
      %v3951 = vsel %vm1076, %v3946, %v3950
      %v3953 = vshrl.u32 %v3812, 16
      %v3955 = vshll.u32 %v3812, 16
      %v3957 = vrot.slane %v3955, 1
      %v3958 = vor.u32 %v3953, %v3957
      %v3960 = vshll.u32 %v3892, 16
      %v3962 = vrot.slane %v3960, 1
      %v3963 = vsel %vm1076, %v3958, %v3962
      %v3965 = vshrl.u32 %v3813, 16
      %v3967 = vshll.u32 %v3813, 16
      %v3969 = vrot.slane %v3967, 1
      %v3970 = vor.u32 %v3965, %v3969
      %v3972 = vshll.u32 %v3893, 16
      %v3974 = vrot.slane %v3972, 1
      %v3975 = vsel %vm1076, %v3970, %v3974
      %v3977 = vshrl.u32 %v3814, 16
      %v3979 = vshll.u32 %v3814, 16
      %v3981 = vrot.slane %v3979, 1
      %v3982 = vor.u32 %v3977, %v3981
      %v3984 = vshll.u32 %v3894, 16
      %v3986 = vrot.slane %v3984, 1
      %v3987 = vsel %vm1076, %v3982, %v3986
      %v3989 = vshrl.u32 %v3815, 16
      %v3991 = vshll.u32 %v3815, 16
      %v3993 = vrot.slane %v3991, 1
      %v3994 = vor.u32 %v3989, %v3993
      %v3996 = vshll.u32 %v3895, 16
      %v3998 = vrot.slane %v3996, 1
      %v3999 = vsel %vm1076, %v3994, %v3998
      %v4001 = vshrl.u32 %v3816, 16
      %v4003 = vshll.u32 %v3816, 16
      %v4005 = vrot.slane %v4003, 1
      %v4006 = vor.u32 %v4001, %v4005
      %v4008 = vshll.u32 %v3896, 16
      %v4010 = vrot.slane %v4008, 1
      %v4011 = vsel %vm1076, %v4006, %v4010
      %v4013 = vshrl.u32 %v3817, 16
      %v4015 = vshll.u32 %v3817, 16
      %v4017 = vrot.slane %v4015, 1
      %v4018 = vor.u32 %v4013, %v4017
      %v4020 = vshll.u32 %v3897, 16
      %v4022 = vrot.slane %v4020, 1
      %v4023 = vsel %vm1076, %v4018, %v4022
      %v4025 = vshrl.u32 %v3818, 16
      %v4027 = vshll.u32 %v3818, 16
      %v4029 = vrot.slane %v4027, 1
      %v4030 = vor.u32 %v4025, %v4029
      %v4032 = vshll.u32 %v3898, 16
      %v4034 = vrot.slane %v4032, 1
      %v4035 = vsel %vm1076, %v4030, %v4034
      %v4037 = vshrl.u32 %v3819, 16
      %v4039 = vshll.u32 %v3819, 16
      %v4041 = vrot.slane %v4039, 1
      %v4042 = vor.u32 %v4037, %v4041
      %v4044 = vshll.u32 %v3899, 16
      %v4046 = vrot.slane %v4044, 1
      %v4047 = vsel %vm1076, %v4042, %v4046
      %v4049 = vshrl.u32 %v3820, 16
      %v4051 = vshll.u32 %v3820, 16
      %v4053 = vrot.slane %v4051, 1
      %v4054 = vor.u32 %v4049, %v4053
      %v4056 = vshll.u32 %v3900, 16
      %v4058 = vrot.slane %v4056, 1
      %v4059 = vsel %vm1076, %v4054, %v4058
      %v4061 = vshrl.u32 %v3821, 16
      %v4063 = vshll.u32 %v3821, 16
      %v4065 = vrot.slane %v4063, 1
      %v4066 = vor.u32 %v4061, %v4065
      %v4068 = vshll.u32 %v3901, 16
      %v4070 = vrot.slane %v4068, 1
      %v4071 = vsel %vm1076, %v4066, %v4070
      %v4073 = vshrl.u32 %v3822, 16
      %v4075 = vshll.u32 %v3822, 16
      %v4077 = vrot.slane %v4075, 1
      %v4078 = vor.u32 %v4073, %v4077
      %v4080 = vshll.u32 %v3902, 16
      %v4082 = vrot.slane %v4080, 1
      %v4083 = vsel %vm1076, %v4078, %v4082
      %v4085 = vshrl.u32 %v3823, 16
      %v4087 = vshll.u32 %v3823, 16
      %v4089 = vrot.slane %v4087, 1
      %v4090 = vor.u32 %v4085, %v4089
      %v4092 = vshll.u32 %v3903, 16
      %v4094 = vrot.slane %v4092, 1
      %v4095 = vsel %vm1076, %v4090, %v4094
      %4096 = vrot.lane.b32.xlu0 %v3915, 24
      %v4097 = vpop.permute.xlu0 %4096
      %4098 = vrot.lane.b32.xlu0 %v3927, 24
      %v4099 = vpop.permute.xlu0 %4098
      %4100 = vrot.lane.b32.xlu0 %v3939, 24
      %v4101 = vpop.permute.xlu0 %4100
      %4102 = vrot.lane.b32.xlu0 %v3951, 24
      %v4103 = vpop.permute.xlu0 %4102
      %4104 = vrot.lane.b32.xlu0 %v3963, 24
      %v4105 = vpop.permute.xlu0 %4104
      %4106 = vrot.lane.b32.xlu0 %v3975, 24
      %v4107 = vpop.permute.xlu0 %4106
      %4108 = vrot.lane.b32.xlu0 %v3987, 24
      %v4109 = vpop.permute.xlu0 %4108
      %4110 = vrot.lane.b32.xlu0 %v3999, 24
      %v4111 = vpop.permute.xlu0 %4110
      %4112 = vrot.lane.b32.xlu0 %v4011, 24
      %v4113 = vpop.permute.xlu0 %4112
      %4114 = vrot.lane.b32.xlu0 %v4023, 24
      %v4115 = vpop.permute.xlu0 %4114
      %4116 = vrot.lane.b32.xlu0 %v4035, 24
      %v4117 = vpop.permute.xlu0 %4116
      %4118 = vrot.lane.b32.xlu0 %v4047, 24
      %v4119 = vpop.permute.xlu0 %4118
      %4120 = vrot.lane.b32.xlu0 %v4059, 24
      %v4121 = vpop.permute.xlu0 %4120
      %4122 = vrot.lane.b32.xlu0 %v4071, 24
      %v4123 = vpop.permute.xlu0 %4122
      %4124 = vrot.lane.b32.xlu0 %v4083, 24
      %v4125 = vpop.permute.xlu0 %4124
      %4126 = vrot.lane.b32.xlu0 %v4095, 24
      %v4127 = vpop.permute.xlu0 %4126
      %v4129 = vsel %vm2487, %v3456, %v3713
      %v4131 = vsel %vm2487, %v3457, %v3715
      %v4133 = vsel %vm2487, %v3458, %v3717
      %v4135 = vsel %vm2487, %v3459, %v3719
      %v4137 = vsel %vm2487, %v3460, %v3721
      %v4139 = vsel %vm2487, %v3461, %v3723
      %v4141 = vsel %vm2487, %v3462, %v3725
      %v4143 = vsel %vm2487, %v3463, %v3727
      %v4145 = vsel %vm2487, %v3464, %v3729
      %v4147 = vsel %vm2487, %v3465, %v3731
      %v4149 = vsel %vm2487, %v3466, %v3733
      %v4151 = vsel %vm2487, %v3467, %v3735
      %v4153 = vsel %vm2487, %v3468, %v3737
      %v4155 = vsel %vm2487, %v3469, %v3739
      %v4157 = vsel %vm2487, %v3470, %v3741
      %v4159 = vsel %vm2487, %v3471, %v3743
      %v4161 = vsel %vm2553, %v4129, %v3825
      %v4163 = vsel %vm2553, %v4131, %v3827
      %v4165 = vsel %vm2553, %v4133, %v3829
      %v4167 = vsel %vm2553, %v4135, %v3831
      %v4169 = vsel %vm2553, %v4137, %v3833
      %v4171 = vsel %vm2553, %v4139, %v3835
      %v4173 = vsel %vm2553, %v4141, %v3837
      %v4175 = vsel %vm2553, %v4143, %v3839
      %v4177 = vsel %vm2553, %v4145, %v3841
      %v4179 = vsel %vm2553, %v4147, %v3843
      %v4181 = vsel %vm2553, %v4149, %v3845
      %v4183 = vsel %vm2553, %v4151, %v3847
      %v4185 = vsel %vm2553, %v4153, %v3849
      %v4187 = vsel %vm2553, %v4155, %v3851
      %v4189 = vsel %vm2553, %v4157, %v3853
      %v4191 = vsel %vm2553, %v4159, %v3855
      %v4193 = vsel %vm2619, %v4161, %v4097
      %v4195 = vsel %vm2619, %v4163, %v4099
      %v4197 = vsel %vm2619, %v4165, %v4101
      %v4199 = vsel %vm2619, %v4167, %v4103
      %v4201 = vsel %vm2619, %v4169, %v4105
      %v4203 = vsel %vm2619, %v4171, %v4107
      %v4205 = vsel %vm2619, %v4173, %v4109
      %v4207 = vsel %vm2619, %v4175, %v4111
      %v4209 = vsel %vm2619, %v4177, %v4113
      %v4211 = vsel %vm2619, %v4179, %v4115
      %v4213 = vsel %vm2619, %v4181, %v4117
      %v4215 = vsel %vm2619, %v4183, %v4119
      %v4217 = vsel %vm2619, %v4185, %v4121
      %v4219 = vsel %vm2619, %v4187, %v4123
      %v4221 = vsel %vm2619, %v4189, %v4125
      %v4223 = vsel %vm2619, %v4191, %v4127
      %v4224 = vld [vmem:[%s3] sm:$0xf]
      %v4225 = vld [vmem:[%s3 + $0x4] sm:$0xf]
      %v4226 = vld [vmem:[%s3 + $0x8] sm:$0xf]
      %v4227 = vld [vmem:[%s3 + $0xc] sm:$0xf]
      %v4228 = vld [vmem:[%s4] sm:$0x1]
      %v4230 = vlaneseq
      %v4231 = vshrl.u32 %v4230, 7
      %v4232 = vsub.s32 0, %v4231
      %v4233 = vrot.slane %v4228, %v4232
      %v4239 = vunpack.c.l.b16 %v4224
      %v4240 = vunpack.c.l.b16 %v4225
      %v4241 = vunpack.c.l.b16 %v4226
      %v4242 = vunpack.c.l.b16 %v4227
      %v4243 = vpack.c.b16 %v4240, %v4239
      %v4244 = vpack.c.b16 %v4242, %v4241
      %v4247 = vsel %vm2685, %v4193, 0
      %v4249 = vsel %vm2685, %v4195, 0
      %v4251 = vsel %vm2685, %v4197, 0
      %v4253 = vsel %vm2685, %v4199, 0
      %v4255 = vsel %vm2685, %v4201, 0
      %v4257 = vsel %vm2685, %v4203, 0
      %v4259 = vsel %vm2685, %v4205, 0
      %v4261 = vsel %vm2685, %v4207, 0
      %v4263 = vsel %vm2685, %v4209, 0
      %v4265 = vsel %vm2685, %v4211, 0
      %v4267 = vsel %vm2685, %v4213, 0
      %v4269 = vsel %vm2685, %v4215, 0
      %v4271 = vsel %vm2685, %v4217, 0
      %v4273 = vsel %vm2685, %v4219, 0
      %v4275 = vsel %vm2685, %v4221, 0
      %v4277 = vsel %vm2685, %v4223, 0
      %4279 = vmatprep.subr.bf16.mxu0 0
      %4280 = vmatpush1.bf16.msra.mxu0 %v4243
      %4281 = vmatprep.subr.bf16.mxu0 0
      %4282 = vmatpush1.bf16.msra.mxu0 %v4244
      %4283 = vmatprep.subr.bf16.mxu0 0
      %4284 = vmatpush1.bf16.msra.mxu0 0
      %4285 = vmatprep.subr.bf16.mxu0 0
      %4286 = vmatpush1.bf16.msra.mxu0 0
      %4287 = vmatprep.subr.bf16.mxu0 0
      %4288 = vmatpush1.bf16.msra.mxu0 0
      %4289 = vmatprep.subr.bf16.mxu0 0
      %4290 = vmatpush1.bf16.msra.mxu0 0
      %4291 = vmatprep.subr.bf16.mxu0 0
      %4292 = vmatpush1.bf16.msra.mxu0 0
      %4293 = vmatprep.subr.bf16.mxu0 0
      %4294 = vmatpush1.bf16.msra.mxu0 0
      %4295 = vmatprep.subr.bf16.mxu0 0
      %4296 = vmatpush1.bf16.msra.mxu0 0
      %4297 = vmatprep.subr.bf16.mxu0 0
      %4298 = vmatpush1.bf16.msra.mxu0 0
      %4299 = vmatprep.subr.bf16.mxu0 0
      %4300 = vmatpush1.bf16.msra.mxu0 0
      %4301 = vmatprep.subr.bf16.mxu0 0
      %4302 = vmatpush1.bf16.msra.mxu0 0
      %4303 = vmatprep.subr.bf16.mxu0 0
      %4304 = vmatpush1.bf16.msra.mxu0 0
      %4305 = vmatprep.subr.bf16.mxu0 0
      %4306 = vmatpush1.bf16.msra.mxu0 0
      %4307 = vmatprep.subr.bf16.mxu0 0
      %4308 = vmatpush1.bf16.msra.mxu0 0
      %4309 = vmatprep.subr.bf16.mxu0 0
      %4310 = vmatpush1.bf16.msra.mxu0 0
      %4311 = vmatprep.mubr.bf16.mxu0 0
      %4312 = vmatmul.mubr.bf16.gmra.mrb[0].mxu0 %v4247
      %v4313 = vpop.f32.mrb[0].mxu0
      %v4314 = vadd.f32 %v4233, %v4313
      %v4315 = vpop.f32.mrb[0].mxu0
      %v4316 = vpop.f32.mrb[0].mxu0
      %v4317 = vadd.f32 %v4233, %v4316
      %v4318 = vpop.f32.mrb[0].mxu0
      %4319 = vmatprep.mubr.bf16.mxu0 0
      %4320 = vmatmul.mubr.bf16.gmra.mrb[0].mxu0 %v4249
      %v4321 = vpop.f32.mrb[0].mxu0
      %v4322 = vadd.f32 %v4233, %v4321
      %v4323 = vpop.f32.mrb[0].mxu0
      %v4324 = vpop.f32.mrb[0].mxu0
      %v4325 = vadd.f32 %v4233, %v4324
      %v4326 = vpop.f32.mrb[0].mxu0
      %4327 = vmatprep.mubr.bf16.mxu0 0
      %4328 = vmatmul.mubr.bf16.gmra.mrb[0].mxu0 %v4251
      %v4329 = vpop.f32.mrb[0].mxu0
      %v4330 = vadd.f32 %v4233, %v4329
      %v4331 = vpop.f32.mrb[0].mxu0
      %v4332 = vpop.f32.mrb[0].mxu0
      %v4333 = vadd.f32 %v4233, %v4332
      %v4334 = vpop.f32.mrb[0].mxu0
      %4335 = vmatprep.mubr.bf16.mxu0 0
      %4336 = vmatmul.mubr.bf16.gmra.mrb[0].mxu0 %v4253
      %v4337 = vpop.f32.mrb[0].mxu0
      %v4338 = vadd.f32 %v4233, %v4337
      %v4339 = vpop.f32.mrb[0].mxu0
      %v4340 = vpop.f32.mrb[0].mxu0
      %v4341 = vadd.f32 %v4233, %v4340
      %v4342 = vpop.f32.mrb[0].mxu0
      %4343 = vmatprep.mubr.bf16.mxu0 0
      %4344 = vmatmul.mubr.bf16.gmra.mrb[0].mxu0 %v4255
      %v4345 = vpop.f32.mrb[0].mxu0
      %v4346 = vadd.f32 %v4233, %v4345
      %v4347 = vpop.f32.mrb[0].mxu0
      %v4348 = vpop.f32.mrb[0].mxu0
      %v4349 = vadd.f32 %v4233, %v4348
      %v4350 = vpop.f32.mrb[0].mxu0
      %4351 = vmatprep.mubr.bf16.mxu0 0
      %4352 = vmatmul.mubr.bf16.gmra.mrb[0].mxu0 %v4257
      %v4353 = vpop.f32.mrb[0].mxu0
      %v4354 = vadd.f32 %v4233, %v4353
      %v4355 = vpop.f32.mrb[0].mxu0
      %v4356 = vpop.f32.mrb[0].mxu0
      %v4357 = vadd.f32 %v4233, %v4356
      %v4358 = vpop.f32.mrb[0].mxu0
      %4359 = vmatprep.mubr.bf16.mxu0 0
      %4360 = vmatmul.mubr.bf16.gmra.mrb[0].mxu0 %v4259
      %v4361 = vpop.f32.mrb[0].mxu0
      %v4362 = vadd.f32 %v4233, %v4361
      %v4363 = vpop.f32.mrb[0].mxu0
      %v4364 = vpop.f32.mrb[0].mxu0
      %v4365 = vadd.f32 %v4233, %v4364
      %v4366 = vpop.f32.mrb[0].mxu0
      %4367 = vmatprep.mubr.bf16.mxu0 0
      %4368 = vmatmul.mubr.bf16.gmra.mrb[0].mxu0 %v4261
      %v4369 = vpop.f32.mrb[0].mxu0
      %v4370 = vadd.f32 %v4233, %v4369
      %v4371 = vpop.f32.mrb[0].mxu0
      %v4372 = vpop.f32.mrb[0].mxu0
      %v4373 = vadd.f32 %v4233, %v4372
      %v4374 = vpop.f32.mrb[0].mxu0
      %4375 = vmatprep.mubr.bf16.mxu0 0
      %4376 = vmatmul.mubr.bf16.gmra.mrb[0].mxu0 %v4263
      %v4377 = vpop.f32.mrb[0].mxu0
      %v4378 = vadd.f32 %v4233, %v4377
      %v4379 = vpop.f32.mrb[0].mxu0
      %v4380 = vpop.f32.mrb[0].mxu0
      %v4381 = vadd.f32 %v4233, %v4380
      %v4382 = vpop.f32.mrb[0].mxu0
      %4383 = vmatprep.mubr.bf16.mxu0 0
      %4384 = vmatmul.mubr.bf16.gmra.mrb[0].mxu0 %v4265
      %v4385 = vpop.f32.mrb[0].mxu0
      %v4386 = vadd.f32 %v4233, %v4385
      %v4387 = vpop.f32.mrb[0].mxu0
      %v4388 = vpop.f32.mrb[0].mxu0
      %v4389 = vadd.f32 %v4233, %v4388
      %v4390 = vpop.f32.mrb[0].mxu0
      %4391 = vmatprep.mubr.bf16.mxu0 0
      %4392 = vmatmul.mubr.bf16.gmra.mrb[0].mxu0 %v4267
      %v4393 = vpop.f32.mrb[0].mxu0
      %v4394 = vadd.f32 %v4233, %v4393
      %v4395 = vpop.f32.mrb[0].mxu0
      %v4396 = vpop.f32.mrb[0].mxu0
      %v4397 = vadd.f32 %v4233, %v4396
      %v4398 = vpop.f32.mrb[0].mxu0
      %4399 = vmatprep.mubr.bf16.mxu0 0
      %4400 = vmatmul.mubr.bf16.gmra.mrb[0].mxu0 %v4269
      %v4401 = vpop.f32.mrb[0].mxu0
      %v4402 = vadd.f32 %v4233, %v4401
      %v4403 = vpop.f32.mrb[0].mxu0
      %v4404 = vpop.f32.mrb[0].mxu0
      %v4405 = vadd.f32 %v4233, %v4404
      %v4406 = vpop.f32.mrb[0].mxu0
      %4407 = vmatprep.mubr.bf16.mxu0 0
      %4408 = vmatmul.mubr.bf16.gmra.mrb[0].mxu0 %v4271
      %v4409 = vpop.f32.mrb[0].mxu0
      %v4410 = vadd.f32 %v4233, %v4409
      %v4411 = vpop.f32.mrb[0].mxu0
      %v4412 = vpop.f32.mrb[0].mxu0
      %v4413 = vadd.f32 %v4233, %v4412
      %v4414 = vpop.f32.mrb[0].mxu0
      %4415 = vmatprep.mubr.bf16.mxu0 0
      %4416 = vmatmul.mubr.bf16.gmra.mrb[0].mxu0 %v4273
      %v4417 = vpop.f32.mrb[0].mxu0
      %v4418 = vadd.f32 %v4233, %v4417
      %v4419 = vpop.f32.mrb[0].mxu0
      %v4420 = vpop.f32.mrb[0].mxu0
      %v4421 = vadd.f32 %v4233, %v4420
      %v4422 = vpop.f32.mrb[0].mxu0
      %4423 = vmatprep.mubr.bf16.mxu0 0
      %4424 = vmatmul.mubr.bf16.gmra.mrb[0].mxu0 %v4275
      %v4425 = vpop.f32.mrb[0].mxu0
      %v4426 = vadd.f32 %v4233, %v4425
      %v4427 = vpop.f32.mrb[0].mxu0
      %v4428 = vpop.f32.mrb[0].mxu0
      %v4429 = vadd.f32 %v4233, %v4428
      %v4430 = vpop.f32.mrb[0].mxu0
      %4431 = vmatprep.mubr.bf16.mxu0 0
      %4432 = vmatmul.mubr.bf16.gmra.mrb[0].mxu0 %v4277
      %v4433 = vpop.f32.mrb[0].mxu0
      %v4434 = vadd.f32 %v4233, %v4433
      %v4435 = vpop.f32.mrb[0].mxu0
      %v4436 = vpop.f32.mrb[0].mxu0
      %v4437 = vadd.f32 %v4233, %v4436
      %v4438 = vpop.f32.mrb[0].mxu0
      %4439 = vdwg.mxu0
      %v4440 = vmax.f32 %v4314, 0.0
      %v4441 = vmax.f32 %v4317, 0.0
      %v4442 = vmax.f32 %v4322, 0.0
      %v4443 = vmax.f32 %v4325, 0.0
      %v4444 = vmax.f32 %v4330, 0.0
      %v4445 = vmax.f32 %v4333, 0.0
      %v4446 = vmax.f32 %v4338, 0.0
      %v4447 = vmax.f32 %v4341, 0.0
      %v4448 = vmax.f32 %v4346, 0.0
      %v4449 = vmax.f32 %v4349, 0.0
      %v4450 = vmax.f32 %v4354, 0.0
      %v4451 = vmax.f32 %v4357, 0.0
      %v4452 = vmax.f32 %v4362, 0.0
      %v4453 = vmax.f32 %v4365, 0.0
      %v4454 = vmax.f32 %v4370, 0.0
      %v4455 = vmax.f32 %v4373, 0.0
      %v4456 = vmax.f32 %v4378, 0.0
      %v4457 = vmax.f32 %v4381, 0.0
      %v4458 = vmax.f32 %v4386, 0.0
      %v4459 = vmax.f32 %v4389, 0.0
      %v4460 = vmax.f32 %v4394, 0.0
      %v4461 = vmax.f32 %v4397, 0.0
      %v4462 = vmax.f32 %v4402, 0.0
      %v4463 = vmax.f32 %v4405, 0.0
      %v4464 = vmax.f32 %v4410, 0.0
      %v4465 = vmax.f32 %v4413, 0.0
      %v4466 = vmax.f32 %v4418, 0.0
      %v4467 = vmax.f32 %v4421, 0.0
      %v4468 = vmax.f32 %v4426, 0.0
      %v4469 = vmax.f32 %v4429, 0.0
      %v4470 = vmax.f32 %v4434, 0.0
      %v4471 = vmax.f32 %v4437, 0.0
      %4472 = vst.msk [vmem:[%s224] sm:$0xff] %vm2553, %v4440
      %4473 = vst.msk [vmem:[%s224 + $0x8] sm:$0xff] %vm2553, %v4441
      %4474 = vst.msk [vmem:[%s224 + $0x10] sm:$0xff] %vm2553, %v4442
      %4475 = vst.msk [vmem:[%s224 + $0x18] sm:$0xff] %vm2553, %v4443
      %4476 = vst.msk [vmem:[%s224 + $0x20] sm:$0xff] %vm2553, %v4444
      %4477 = vst.msk [vmem:[%s224 + $0x28] sm:$0xff] %vm2553, %v4445
      %4478 = vst.msk [vmem:[%s224 + $0x30] sm:$0xff] %vm2553, %v4446
      %4479 = vst.msk [vmem:[%s224 + $0x38] sm:$0xff] %vm2553, %v4447
      %4480 = vst.msk [vmem:[%s224 + $0x40] sm:$0xff] %vm2553, %v4448
      %4481 = vst.msk [vmem:[%s224 + $0x48] sm:$0xff] %vm2553, %v4449
      %4482 = vst.msk [vmem:[%s224 + $0x50] sm:$0xff] %vm2553, %v4450
      %4483 = vst.msk [vmem:[%s224 + $0x58] sm:$0xff] %vm2553, %v4451
      %4484 = vst.msk [vmem:[%s224 + $0x60] sm:$0xff] %vm2553, %v4452
      %4485 = vst.msk [vmem:[%s224 + $0x68] sm:$0xff] %vm2553, %v4453
      %4486 = vst.msk [vmem:[%s224 + $0x70] sm:$0xff] %vm2553, %v4454
      %4487 = vst.msk [vmem:[%s224 + $0x78] sm:$0xff] %vm2553, %v4455
      %4488 = vst.msk [vmem:[%s224 + $0x80] sm:$0xff] %vm2553, %v4456
      %4489 = vst.msk [vmem:[%s224 + $0x88] sm:$0xff] %vm2553, %v4457
      %4490 = vst.msk [vmem:[%s224 + $0x90] sm:$0xff] %vm2553, %v4458
      %4491 = vst.msk [vmem:[%s224 + $0x98] sm:$0xff] %vm2553, %v4459
      %4492 = vst.msk [vmem:[%s224 + $0xa0] sm:$0xff] %vm2553, %v4460
      %4493 = vst.msk [vmem:[%s224 + $0xa8] sm:$0xff] %vm2553, %v4461
      %4494 = vst.msk [vmem:[%s224 + $0xb0] sm:$0xff] %vm2553, %v4462
      %4495 = vst.msk [vmem:[%s224 + $0xb8] sm:$0xff] %vm2553, %v4463
      %4496 = vst.msk [vmem:[%s224 + $0xc0] sm:$0xff] %vm2553, %v4464
      %4497 = vst.msk [vmem:[%s224 + $0xc8] sm:$0xff] %vm2553, %v4465
      %4498 = vst.msk [vmem:[%s224 + $0xd0] sm:$0xff] %vm2553, %v4466
      %4499 = vst.msk [vmem:[%s224 + $0xd8] sm:$0xff] %vm2553, %v4467
      %4500 = vst.msk [vmem:[%s224 + $0xe0] sm:$0xff] %vm2553, %v4468
      %4501 = vst.msk [vmem:[%s224 + $0xe8] sm:$0xff] %vm2553, %v4469
      %4502 = vst.msk [vmem:[%s224 + $0xf0] sm:$0xff] %vm2553, %v4470
      %4503 = vst.msk [vmem:[%s224 + $0xf8] sm:$0xff] %vm2553, %v4471
      %p4504 = scmp.lt.s32.totalorder %s16, 1
      %s4505 = scalar_select %p4504, %s16, 1
      %s4506 = smul.addr %s4505, 32
      %s4507 = smul.addr %s4506, 8
      %s4508 = scalar_lea.vmem %s5, %s4507
      // Predicated region
      $region41: #{decoder_block_forward.1} parent=39 // pred_check
        %p4509 = pneg %p144
      $region42: #{decoder_block_forward.1} parent=39 // pred_check_branch
        %4511 = sbr.rel (%p4509) target = $region44
      $region43: #{decoder_block_forward.1} parent=39 // pred_region
        _
      $region44: #{decoder_block_forward.1} parent=39 // pred_fallthru
        _
    $region40: #{decoder_block_forward.1} parent=5 // pred_fallthru
      _
    %p4512 = scmp.le.s32.totalorder 2, %s11
    // Predicated region
    $region45: #{decoder_block_forward.1} parent=5 // pred_check
      %p4513 = pneg %p4512
    $region46: #{decoder_block_forward.1} parent=5 // pred_check_branch
      %4515 = sbr.rel (%p4513) target = $region48
    $region47: #{decoder_block_forward.1} parent=5 // pred_region
      %s4516 = ssub.s32 %s11, 2
      // Predicated region
      $region49: #{decoder_block_forward.1} parent=47 // pred_check
        %p4517 = pneg %p150
      $region50: #{decoder_block_forward.1} parent=47 // pred_check_branch
        %4519 = sbr.rel (%p4517) target = $region52
      $region51: #{decoder_block_forward.1} parent=47 // pred_region
        %p4520 = scmp.lt.s32.totalorder %s17, 1
        %s4521 = scalar_select %p4520, %s17, 1
        %s4522 = smul.addr %s4521, 32
        %s4523 = smul.addr %s4522, 8
        %s4524 = scalar_lea.vmem %s5, %s4523
      $region52: #{decoder_block_forward.1} parent=47 // pred_fallthru
        _
    $region48: #{decoder_block_forward.1} parent=5 // pred_fallthru
      _
  $region6: #{decoder_block_forward.1} parent=0 // loop_footer
    %s15 = sadd.s32 1, %s11
  $region7: #{decoder_block_forward.1} parent=0 // loop_footer_branch
    %10 = sbr.rel target = $region3
  $region8: #{decoder_block_forward.1} parent=0 // loop_exit
    _

</llo_original>
